<compile_context>
chip_gen: v5e
topology: v5e:2x2
jax: 0.10.0
libtpu: 0.0.40
codegen_flags: <defaults>
</compile_context>

<pallas_src>
import jax
import jax.numpy as jnp
from jax import lax
from jax.experimental import pallas as pl
from jax.experimental.pallas import tpu as pltpu

_LANE = 128
_HIGHEST = jax.lax.Precision.HIGHEST


def bahdanau_attention(query, keys, values, wq, wk, wv, wo, bo):
    """query: [B, Lq, Dq], keys: [B, Lk, Dk], values: [B, Lk, Dv].
    wq: [Dq, H], wk: [Dk, H], wv: [Dv, H], wo: [H, O], bo: [1, O]
    (weights stored as [in, out], i.e. transposed vs torch nn.Linear).
    Returns (context [B, Lq, O], weights [B, Lq, Lk])."""
    B, Lq, Dq = query.shape
    _, Lk, Dk = keys.shape
    _, _, Dv = values.shape
    H = wq.shape[1]
    O = wo.shape[1]
    f32 = jnp.float32

    Lkp = ((Lk + _LANE - 1) // _LANE) * _LANE     # keys axis padded to lane width
    Op = ((O + _LANE - 1) // _LANE) * _LANE       # output axis padded to lane width
    DKV = Dk + Dv

    # ---- wrapper-side layout plumbing (cheap XLA ops) ----
    q2d = query.reshape(B * Lq, Dq)                                   # (B*Lq, Dq)
    kv = jnp.concatenate([keys, values], axis=-1)                     # (B, Lk, Dk+Dv)
    kv = jnp.pad(kv, ((0, 0), (0, Lkp - Lk), (0, 0)))                 # zero-pad keys axis
    kv2d = kv.reshape(B * Lkp, DKV)                                   # (B*Lkp, Dk+Dv)

    # Block-diagonal fused K/V projection weight -> one matmul for both.
    wkv = jnp.zeros((DKV, 2 * H), f32)
    wkv = wkv.at[:Dk, :H].set(wk)
    wkv = wkv.at[Dk:, H:].set(wv)

    # Lane-dense output projection (padded columns are zero, sliced off below).
    wo_p = jnp.pad(wo, ((0, 0), (0, Op - O)))
    bo_p = jnp.pad(bo, ((0, 0), (0, Op - O)))

    def kernel(q_ref, kv_ref, wq_ref, wkv_ref, wo_ref, bo_ref, ctx_ref, w_ref):
        # Batch-folded projections: two matmuls total for Q and fused K/V.
        qp = jnp.dot(q_ref[...], wq_ref[...],
                     precision=_HIGHEST, preferred_element_type=f32)   # (B*Lq, H)
        kvp = jnp.dot(kv_ref[...], wkv_ref[...],
                      precision=_HIGHEST, preferred_element_type=f32)  # (B*Lkp, 2H)
        kp = kvp[:, :H]
        vp = kvp[:, H:]

        # Validity mask for the zero-padded key rows (hoisted out of the loop).
        key_valid = lax.broadcasted_iota(jnp.int32, (Lq, Lkp), 1) < Lk

        ctx_parts = []
        for b in range(B):   # B is small and static -> fully unrolled
            qb = qp[b * Lq:(b + 1) * Lq, :]          # (Lq, H)
            kb = kp[b * Lkp:(b + 1) * Lkp, :]        # (Lkp, H)
            vb = vp[b * Lkp:(b + 1) * Lkp, :]        # (Lkp, H), padded rows are zero

            # Contract on the last dim of both operands -> no transpose of kb.
            scores = lax.dot_general(
                qb, kb, dimension_numbers=(((1,), (1,)), ((), ())),
                precision=_HIGHEST, preferred_element_type=f32)        # (Lq, Lkp)
            scores = jnp.where(key_valid, scores, jnp.float32(-1e9))

            # Numerically-stable softmax along the (padded, lane-dense) keys axis.
            m = jnp.max(scores, axis=-1, keepdims=True)
            e = jnp.exp(scores - m)                  # padded lanes underflow to exact 0
            denom = jnp.sum(e, axis=-1, keepdims=True)
            w = e / denom                            # exact division (matches reference)

            w_ref[b] = w                              # lane-dense, unmasked store
            ctx_parts.append(jnp.dot(w, vb, precision=_HIGHEST,
                                     preferred_element_type=f32))      # (Lq, H)

        # Single output projection over all batches (one matmul).
        ctx_all = jnp.concatenate(ctx_parts, axis=0)                   # (B*Lq, H)
        out = jnp.dot(ctx_all, wo_ref[...], precision=_HIGHEST,
                      preferred_element_type=f32) + bo_ref[...]
        ctx_ref[...] = out.astype(ctx_ref.dtype)

    def full(shape):
        return pl.BlockSpec(shape, lambda i, _n=len(shape): (0,) * _n)

    ctx2d, w_pad = pl.pallas_call(
        kernel,
        out_shape=(
            jax.ShapeDtypeStruct((B * Lq, Op), f32),
            jax.ShapeDtypeStruct((B, Lq, Lkp), f32),
        ),
        grid_spec=pltpu.PrefetchScalarGridSpec(
            num_scalar_prefetch=0,
            grid=(1,),
            in_specs=[
                full((B * Lq, Dq)),
                full((B * Lkp, DKV)),
                full((Dq, H)),
                full((DKV, 2 * H)),
                full((H, Op)),
                full((1, Op)),
            ],
            out_specs=[
                full((B * Lq, Op)),
                full((B, Lq, Lkp)),
            ],
        ),
        compiler_params=pltpu.CompilerParams(
            dimension_semantics=("arbitrary",)),
    )(q2d, kv2d, wq, wkv, wo_p, bo_p)

    context = ctx2d[:, :O].reshape(B, Lq, O)
    weights = w_pad[:, :, :Lk]
    return context, weights


def _reference(query, keys, values, wq, wk, wv, wo, bo):
    qp = jnp.einsum("bqd,dh->bqh", query, wq, precision=_HIGHEST)
    kp = jnp.einsum("bkd,dh->bkh", keys, wk, precision=_HIGHEST)
    vp = jnp.einsum("bkd,dh->bkh", values, wv, precision=_HIGHEST)
    scores = jnp.einsum("bqh,bkh->bqk", qp, kp, precision=_HIGHEST)
    w = jax.nn.softmax(scores, axis=-1)
    ctx = jnp.einsum("bqk,bkh->bqh", w, vp, precision=_HIGHEST)
    out = jnp.einsum("bqh,ho->bqo", ctx, wo, precision=_HIGHEST) + bo[0]
    return out, w


if __name__ == "__main__":
    # Small, deterministic shapes consistent with the module's forward.
    B, Lq, Lk = 2, 8, 16
    Dq, Dk, Dv = 32, 48, 40        # query/keys/values hidden sizes
    H, O = 128, 64                 # inner hidden size, out hidden size

    key = jax.random.PRNGKey(0)
    ks = jax.random.split(key, 8)
    query = jax.random.normal(ks[0], (B, Lq, Dq), dtype=jnp.float32)
    keys_ = jax.random.normal(ks[1], (B, Lk, Dk), dtype=jnp.float32)
    values = jax.random.normal(ks[2], (B, Lk, Dv), dtype=jnp.float32)

    # Deterministic parameter init (synthetic, nn.Linear-compatible, stored [in, out]).
    wq = jax.random.normal(ks[3], (Dq, H), dtype=jnp.float32) * (1.0 / Dq ** 0.5)
    wk = jax.random.normal(ks[4], (Dk, H), dtype=jnp.float32) * (1.0 / Dk ** 0.5)
    wv = jax.random.normal(ks[5], (Dv, H), dtype=jnp.float32) * (1.0 / Dv ** 0.5)
    wo = jax.random.normal(ks[6], (H, O), dtype=jnp.float32) * (1.0 / H ** 0.5)
    bo = jax.random.normal(ks[7], (1, O), dtype=jnp.float32) * 0.01

    ctx, weights = bahdanau_attention(query, keys_, values, wq, wk, wv, wo, bo)
    jax.block_until_ready((ctx, weights))

    ctx_ref, w_ref = _reference(query, keys_, values, wq, wk, wv, wo, bo)
    assert jnp.allclose(ctx, ctx_ref, atol=1e-3, rtol=1e-3), "context mismatch"
    assert jnp.allclose(weights, w_ref, atol=1e-3, rtol=1e-3), "weights mismatch"

    print("KERNEL_OK")
</pallas_src>

<mosaic_0001>
module attributes {stable_mosaic.version = 11 : i64} {
  func.func @kernel(%arg0: i32, %arg1: memref<16x32xf32, #tpu.memory_space<vmem>>, %arg2: memref<256x88xf32, #tpu.memory_space<vmem>>, %arg3: memref<32x128xf32, #tpu.memory_space<vmem>>, %arg4: memref<88x256xf32, #tpu.memory_space<vmem>>, %arg5: memref<128x128xf32, #tpu.memory_space<vmem>>, %arg6: memref<1x128xf32, #tpu.memory_space<vmem>>, %arg7: memref<16x128xf32, #tpu.memory_space<vmem>>, %arg8: memref<2x8x128xf32, #tpu.memory_space<vmem>>) attributes {dimension_semantics = [#tpu.dimension_semantics<arbitrary>], iteration_bounds = array<i64: 1>, scalar_prefetch = 0 : i64, scratch_operands = 0 : i64, tpu.core_type = #tpu.core_type<tc>, window_params = [{pipeline_mode = #tpu.pipeline_mode<synchronous>, transform_indices = @transform_0, window_bounds = array<i64: 16, 32>}, {pipeline_mode = #tpu.pipeline_mode<synchronous>, transform_indices = @transform_1, window_bounds = array<i64: 256, 88>}, {pipeline_mode = #tpu.pipeline_mode<synchronous>, transform_indices = @transform_2, window_bounds = array<i64: 32, 128>}, {pipeline_mode = #tpu.pipeline_mode<synchronous>, transform_indices = @transform_3, window_bounds = array<i64: 88, 256>}, {pipeline_mode = #tpu.pipeline_mode<synchronous>, transform_indices = @transform_4, window_bounds = array<i64: 128, 128>}, {pipeline_mode = #tpu.pipeline_mode<synchronous>, transform_indices = @transform_5, window_bounds = array<i64: 1, 128>}, {pipeline_mode = #tpu.pipeline_mode<synchronous>, transform_indices = @transform_6, window_bounds = array<i64: 16, 128>}, {pipeline_mode = #tpu.pipeline_mode<synchronous>, transform_indices = @transform_7, window_bounds = array<i64: 2, 8, 128>}]} {
    %c0 = arith.constant 0 : index
    %c0_0 = arith.constant 0 : index
    %0 = vector.load %arg1[%c0, %c0_0] : memref<16x32xf32, #tpu.memory_space<vmem>>, vector<16x32xf32>
    %c0_1 = arith.constant 0 : index
    %c0_2 = arith.constant 0 : index
    %1 = vector.load %arg3[%c0_1, %c0_2] : memref<32x128xf32, #tpu.memory_space<vmem>>, vector<32x128xf32>
    %cst = arith.constant dense<0.000000e+00> : vector<16x128xf32>
    %2 = tpu.matmul %0, %1, %cst {dimension_numbers = #tpu.dot_dimension_numbers<[1], [0], [0], [1], [0, 0, 1, 1], [], []>, precision = #tpu.contract_precision<fp32>} : vector<16x32xf32>, vector<32x128xf32>, vector<16x128xf32> -> vector<16x128xf32>
    %c0_3 = arith.constant 0 : index
    %c0_4 = arith.constant 0 : index
    %3 = vector.load %arg2[%c0_3, %c0_4] : memref<256x88xf32, #tpu.memory_space<vmem>>, vector<256x88xf32>
    %c0_5 = arith.constant 0 : index
    %c0_6 = arith.constant 0 : index
    %4 = vector.load %arg4[%c0_5, %c0_6] : memref<88x256xf32, #tpu.memory_space<vmem>>, vector<88x256xf32>
    %cst_7 = arith.constant dense<0.000000e+00> : vector<256x256xf32>
    %5 = tpu.matmul %3, %4, %cst_7 {dimension_numbers = #tpu.dot_dimension_numbers<[1], [0], [0], [1], [0, 0, 1, 1], [], []>, precision = #tpu.contract_precision<fp32>} : vector<256x88xf32>, vector<88x256xf32>, vector<256x256xf32> -> vector<256x256xf32>
    %6 = vector.extract_strided_slice %5 {offsets = [0, 0], sizes = [256, 128], strides = [1, 1]} : vector<256x256xf32> to vector<256x128xf32>
    %7 = vector.extract_strided_slice %5 {offsets = [0, 128], sizes = [256, 128], strides = [1, 1]} : vector<256x256xf32> to vector<256x128xf32>
    %8 = tpu.iota {dimensions = array<i32: 1>} : vector<8x128xi32>
    %c16_i32 = arith.constant 16 : i32
    %9 = vector.broadcast %c16_i32 : i32 to vector<8x128xi32>
    %10 = arith.cmpi slt, %8, %9 : vector<8x128xi32>
    %11 = vector.extract_strided_slice %2 {offsets = [0, 0], sizes = [8, 128], strides = [1, 1]} : vector<16x128xf32> to vector<8x128xf32>
    %12 = vector.extract_strided_slice %6 {offsets = [0, 0], sizes = [128, 128], strides = [1, 1]} : vector<256x128xf32> to vector<128x128xf32>
    %13 = vector.extract_strided_slice %7 {offsets = [0, 0], sizes = [128, 128], strides = [1, 1]} : vector<256x128xf32> to vector<128x128xf32>
    %cst_8 = arith.constant dense<0.000000e+00> : vector<8x128xf32>
    %14 = tpu.matmul %11, %12, %cst_8 {dimension_numbers = #tpu.dot_dimension_numbers<[1], [1], [0], [0], [0, 0, 1, 0], [], []>, precision = #tpu.contract_precision<fp32>} : vector<8x128xf32>, vector<128x128xf32>, vector<8x128xf32> -> vector<8x128xf32>
    %cst_9 = arith.constant -1.000000e+09 : f32
    %15 = vector.broadcast %cst_9 : f32 to vector<8x128xf32>
    %16 = arith.select %10, %14, %15 : vector<8x128xi1>, vector<8x128xf32>
    %cst_10 = arith.constant dense<0xFF800000> : vector<8xf32>
    %17 = vector.multi_reduction <maximumf>, %16, %cst_10 [1] : vector<8x128xf32> to vector<8xf32>
    %18 = vector.shape_cast %17 : vector<8xf32> to vector<8x1xf32>
    %19 = vector.broadcast %18 : vector<8x1xf32> to vector<8x128xf32>
    %20 = arith.subf %16, %19 : vector<8x128xf32>
    %21 = math.exp %20 : vector<8x128xf32>
    %cst_11 = arith.constant dense<0.000000e+00> : vector<8xf32>
    %22 = vector.multi_reduction <add>, %21, %cst_11 [1] : vector<8x128xf32> to vector<8xf32>
    %23 = vector.shape_cast %22 : vector<8xf32> to vector<8x1xf32>
    %24 = vector.broadcast %23 : vector<8x1xf32> to vector<8x128xf32>
    %25 = arith.divf %21, %24 : vector<8x128xf32>
    %c0_12 = arith.constant 0 : index
    %c0_13 = arith.constant 0 : index
    %c0_14 = arith.constant 0 : index
    %26 = vector.load %arg8[%c0_12, %c0_13, %c0_14] : memref<2x8x128xf32, #tpu.memory_space<vmem>>, vector<1x8x128xf32>
    %27 = vector.shape_cast %26 : vector<1x8x128xf32> to vector<8x128xf32>
    %28 = vector.shape_cast %25 : vector<8x128xf32> to vector<1x8x128xf32>
    tpu.vector_store %arg8[%c0_12, %c0_13, %c0_14], %28 {strides = array<i32>} : memref<2x8x128xf32, #tpu.memory_space<vmem>>, vector<1x8x128xf32>,
    %cst_15 = arith.constant dense<0.000000e+00> : vector<8x128xf32>
    %29 = tpu.matmul %25, %13, %cst_15 {dimension_numbers = #tpu.dot_dimension_numbers<[1], [0], [0], [1], [0, 0, 1, 1], [], []>, precision = #tpu.contract_precision<fp32>} : vector<8x128xf32>, vector<128x128xf32>, vector<8x128xf32> -> vector<8x128xf32>
    %30 = vector.extract_strided_slice %2 {offsets = [8, 0], sizes = [8, 128], strides = [1, 1]} : vector<16x128xf32> to vector<8x128xf32>
    %31 = vector.extract_strided_slice %6 {offsets = [128, 0], sizes = [128, 128], strides = [1, 1]} : vector<256x128xf32> to vector<128x128xf32>
    %32 = vector.extract_strided_slice %7 {offsets = [128, 0], sizes = [128, 128], strides = [1, 1]} : vector<256x128xf32> to vector<128x128xf32>
    %cst_16 = arith.constant dense<0.000000e+00> : vector<8x128xf32>
    %33 = tpu.matmul %30, %31, %cst_16 {dimension_numbers = #tpu.dot_dimension_numbers<[1], [1], [0], [0], [0, 0, 1, 0], [], []>, precision = #tpu.contract_precision<fp32>} : vector<8x128xf32>, vector<128x128xf32>, vector<8x128xf32> -> vector<8x128xf32>
    %cst_17 = arith.constant -1.000000e+09 : f32
    %34 = vector.broadcast %cst_17 : f32 to vector<8x128xf32>
    %35 = arith.select %10, %33, %34 : vector<8x128xi1>, vector<8x128xf32>
    %cst_18 = arith.constant dense<0xFF800000> : vector<8xf32>
    %36 = vector.multi_reduction <maximumf>, %35, %cst_18 [1] : vector<8x128xf32> to vector<8xf32>
    %37 = vector.shape_cast %36 : vector<8xf32> to vector<8x1xf32>
    %38 = vector.broadcast %37 : vector<8x1xf32> to vector<8x128xf32>
    %39 = arith.subf %35, %38 : vector<8x128xf32>
    %40 = math.exp %39 : vector<8x128xf32>
    %cst_19 = arith.constant dense<0.000000e+00> : vector<8xf32>
    %41 = vector.multi_reduction <add>, %40, %cst_19 [1] : vector<8x128xf32> to vector<8xf32>
    %42 = vector.shape_cast %41 : vector<8xf32> to vector<8x1xf32>
    %43 = vector.broadcast %42 : vector<8x1xf32> to vector<8x128xf32>
    %44 = arith.divf %40, %43 : vector<8x128xf32>
    %c1 = arith.constant 1 : index
    %c0_20 = arith.constant 0 : index
    %c0_21 = arith.constant 0 : index
    %45 = vector.load %arg8[%c1, %c0_20, %c0_21] : memref<2x8x128xf32, #tpu.memory_space<vmem>>, vector<1x8x128xf32>
    %46 = vector.shape_cast %45 : vector<1x8x128xf32> to vector<8x128xf32>
    %47 = vector.shape_cast %44 : vector<8x128xf32> to vector<1x8x128xf32>
    tpu.vector_store %arg8[%c1, %c0_20, %c0_21], %47 {strides = array<i32>} : memref<2x8x128xf32, #tpu.memory_space<vmem>>, vector<1x8x128xf32>,
    %cst_22 = arith.constant dense<0.000000e+00> : vector<8x128xf32>
    %48 = tpu.matmul %44, %32, %cst_22 {dimension_numbers = #tpu.dot_dimension_numbers<[1], [0], [0], [1], [0, 0, 1, 1], [], []>, precision = #tpu.contract_precision<fp32>} : vector<8x128xf32>, vector<128x128xf32>, vector<8x128xf32> -> vector<8x128xf32>
    %49 = tpu.concatenate %29, %48 in 0 : vector<8x128xf32>, vector<8x128xf32> -> vector<16x128xf32>
    %c0_23 = arith.constant 0 : index
    %c0_24 = arith.constant 0 : index
    %50 = vector.load %arg5[%c0_23, %c0_24] : memref<128x128xf32, #tpu.memory_space<vmem>>, vector<128x128xf32>
    %cst_25 = arith.constant dense<0.000000e+00> : vector<16x128xf32>
    %51 = tpu.matmul %49, %50, %cst_25 {dimension_numbers = #tpu.dot_dimension_numbers<[1], [0], [0], [1], [0, 0, 1, 1], [], []>, precision = #tpu.contract_precision<fp32>} : vector<16x128xf32>, vector<128x128xf32>, vector<16x128xf32> -> vector<16x128xf32>
    %c0_26 = arith.constant 0 : index
    %c0_27 = arith.constant 0 : index
    %52 = vector.load %arg6[%c0_26, %c0_27] : memref<1x128xf32, #tpu.memory_space<vmem>>, vector<1x128xf32>
    %53 = vector.broadcast %52 : vector<1x128xf32> to vector<16x128xf32>
    %54 = arith.addf %51, %53 : vector<16x128xf32>
    %c0_28 = arith.constant 0 : index
    %c0_29 = arith.constant 0 : index
    %55 = vector.load %arg7[%c0_28, %c0_29] : memref<16x128xf32, #tpu.memory_space<vmem>>, vector<16x128xf32>
    tpu.vector_store %arg7[%c0_28, %c0_29], %54 {strides = array<i32>} : memref<16x128xf32, #tpu.memory_space<vmem>>, vector<16x128xf32>,
    return
  }
  func.func @transform_0(%arg0: i32) -> (i32, i32) {
    %c0_i32 = arith.constant 0 : i32
    %c0_i32_0 = arith.constant 0 : i32
    %c0_i32_1 = arith.constant 0 : i32
    return %c0_i32, %c0_i32_0 : i32, i32
  }
  func.func @transform_1(%arg0: i32) -> (i32, i32) {
    %c0_i32 = arith.constant 0 : i32
    %c0_i32_0 = arith.constant 0 : i32
    %c0_i32_1 = arith.constant 0 : i32
    return %c0_i32, %c0_i32_0 : i32, i32
  }
  func.func @transform_2(%arg0: i32) -> (i32, i32) {
    %c0_i32 = arith.constant 0 : i32
    %c0_i32_0 = arith.constant 0 : i32
    %c0_i32_1 = arith.constant 0 : i32
    return %c0_i32, %c0_i32_0 : i32, i32
  }
  func.func @transform_3(%arg0: i32) -> (i32, i32) {
    %c0_i32 = arith.constant 0 : i32
    %c0_i32_0 = arith.constant 0 : i32
    %c0_i32_1 = arith.constant 0 : i32
    return %c0_i32, %c0_i32_0 : i32, i32
  }
  func.func @transform_4(%arg0: i32) -> (i32, i32) {
    %c0_i32 = arith.constant 0 : i32
    %c0_i32_0 = arith.constant 0 : i32
    %c0_i32_1 = arith.constant 0 : i32
    return %c0_i32, %c0_i32_0 : i32, i32
  }
  func.func @transform_5(%arg0: i32) -> (i32, i32) {
    %c0_i32 = arith.constant 0 : i32
    %c0_i32_0 = arith.constant 0 : i32
    %c0_i32_1 = arith.constant 0 : i32
    return %c0_i32, %c0_i32_0 : i32, i32
  }
  func.func @transform_6(%arg0: i32) -> (i32, i32) {
    %c0_i32 = arith.constant 0 : i32
    %c0_i32_0 = arith.constant 0 : i32
    %c0_i32_1 = arith.constant 0 : i32
    return %c0_i32, %c0_i32_0 : i32, i32
  }
  func.func @transform_7(%arg0: i32) -> (i32, i32, i32) {
    %c0_i32 = arith.constant 0 : i32
    %c0_i32_0 = arith.constant 0 : i32
    %c0_i32_1 = arith.constant 0 : i32
    %c0_i32_2 = arith.constant 0 : i32
    return %c0_i32, %c0_i32_0, %c0_i32_1 : i32, i32, i32
  }
}

</mosaic_0001>

<llo_original>
// kernel: tpu_custom_call.1
$region0: #{tpu_custom_call.1}
  #allocation0 [shape = 'u32[]', space=smem, size = 0x4, offset = 0x4, fixed_abs, tag = 'smem constant byte address 0x4 - core index']
  #allocation1 [shape = 'u32[72,128]{1,0:T(1,128)}', space=vmem, size = 0x9000, scoped, tag = 'internal scratch']
  %s0 = inlined_call_operand.vmem [shape: f32[16,32], index: 0, kind: input, shape index: {}]
  %s1 = inlined_call_operand.vmem [shape: f32[256,88], index: 1, kind: input, shape index: {}]
  %s2 = inlined_call_operand.vmem [shape: f32[32,128], index: 2, kind: input, shape index: {}]
  %s3 = inlined_call_operand.vmem [shape: f32[88,256], index: 3, kind: input, shape index: {}]
  %s4 = inlined_call_operand.vmem [shape: f32[128,128], index: 4, kind: input, shape index: {}]
  %s5 = inlined_call_operand.vmem [shape: f32[1,128], index: 5, kind: input, shape index: {}]
  %s6 = inlined_call_operand.hbm [shape: f32[16,128], index: 6, kind: output, shape index: {0}]
  %s7 = inlined_call_operand.hbm [shape: f32[2,8,128], index: 7, kind: output, shape index: {1}]
  %8 = xla_tuple %s6, %s7
  %s9 = sld [smem:[#allocation0]]
  $region42: #{tpu_custom_call.1} parent=0
    _
  %s11 = ssub.s32 1, %s9
  %s12 = scalar_select 0, %s11, %s9
  $region1: #{tpu_custom_call.1} parent=0
    #allocation2 [shape = 'u8[8192]{0}', space=vmem, size = 0x2000, scoped, tag = 'output window, operand 0, single buffered']
    #allocation3 [shape = 's32[1]{0}', space=sflag, size = 0x4, scoped, tag = 'scoped memory for tpu_custom_call.1']
    #allocation4 [shape = 'u8[8192]{0}', space=vmem, size = 0x2000, scoped, tag = 'output window, operand 1, single buffered']
    #allocation5 [shape = 's32[1]{0}', space=sflag, size = 0x4, scoped, tag = 'scoped memory for tpu_custom_call.1']
    %13 = vsyncpa [#allocation3], 0
    %14 = vsyncpa [#allocation5], 0
    // Predicated region
    $region2: #{tpu_custom_call.1} parent=1 // pred_check
      _
    $region3: #{tpu_custom_call.1} parent=1 // pred_check_branch
      %16 = sbr.rel (0) target = $region5
    $region4: #{tpu_custom_call.1} parent=1 // pred_region
      _
    $region5: #{tpu_custom_call.1} parent=1 // pred_fallthru
      _
    // Predicated region
    $region6: #{tpu_custom_call.1} parent=1 // pred_check
      _
    $region7: #{tpu_custom_call.1} parent=1 // pred_check_branch
      %18 = sbr.rel (0) target = $region9
    $region8: #{tpu_custom_call.1} parent=1 // pred_region
      _
    $region9: #{tpu_custom_call.1} parent=1 // pred_fallthru
      _
    // Predicated region
    $region10: #{tpu_custom_call.1} parent=1 // pred_check
      _
    $region11: #{tpu_custom_call.1} parent=1 // pred_check_branch
      %20 = sbr.rel (0) target = $region13
    $region12: #{tpu_custom_call.1} parent=1 // pred_region
      _
    $region13: #{tpu_custom_call.1} parent=1 // pred_fallthru
      _
    // Predicated region
    $region14: #{tpu_custom_call.1} parent=1 // pred_check
      _
    $region15: #{tpu_custom_call.1} parent=1 // pred_check_branch
      %22 = sbr.rel (0) target = $region17
    $region16: #{tpu_custom_call.1} parent=1 // pred_region
      _
    $region17: #{tpu_custom_call.1} parent=1 // pred_fallthru
      _
    // Predicated region
    $region18: #{tpu_custom_call.1} parent=1 // pred_check
      _
    $region19: #{tpu_custom_call.1} parent=1 // pred_check_branch
      %24 = sbr.rel (0) target = $region21
    $region20: #{tpu_custom_call.1} parent=1 // pred_region
      _
    $region21: #{tpu_custom_call.1} parent=1 // pred_fallthru
      _
    // Predicated region
    $region22: #{tpu_custom_call.1} parent=1 // pred_check
      _
    $region23: #{tpu_custom_call.1} parent=1 // pred_check_branch
      %26 = sbr.rel (0) target = $region25
    $region24: #{tpu_custom_call.1} parent=1 // pred_region
      _
    $region25: #{tpu_custom_call.1} parent=1 // pred_fallthru
      _
    %v27 = vld [vmem:[%s0] sm:$0xff]
    %v28 = vld [vmem:[%s0 + $0x8] sm:$0xff]
    %v29 = vld [vmem:[%s2] sm:$0xff]
    %v30 = vld [vmem:[%s2 + $0x8] sm:$0xff]
    %v31 = vld [vmem:[%s2 + $0x10] sm:$0xff]
    %v32 = vld [vmem:[%s2 + $0x18] sm:$0xff]
    %vm33 = vcmask 261120
    %v35 = vsel %vm33, %v27, 0
    %v38 = vsel %vm33, %v28, 0
    %40 = vmatpush.msra.mxu0 0.0
    %41 = vmatpush.msra.mxu0 0.0
    %42 = vmatpush.msra.mxu0 0.0
    %43 = vmatpush.msra.mxu0 0.0
    %44 = vmatpush.msra.mxu0 0.0
    %45 = vmatpush.msra.mxu0 0.0
    %46 = vmatpush.msra.mxu0 0.0
    %47 = vmatpush.msra.mxu0 0.0
    %48 = vmatpush.msra.mxu0 0.0
    %49 = vmatpush.msra.mxu0 0.0
    %50 = vmatpush.msra.mxu0 0.0
    %51 = vmatpush.msra.mxu0 0.0
    %v52 = vand.u32 %v32, 4294901760
    %53 = vmatpush.msra.mxu0 %v52
    %v54 = vand.u32 %v31, 4294901760
    %55 = vmatpush.msra.mxu0 %v54
    %v56 = vand.u32 %v30, 4294901760
    %57 = vmatpush.msra.mxu0 %v56
    %v58 = vand.u32 %v29, 4294901760
    %59 = vmatpush.msra.mxu0 %v58
    %v60 = vand.u32 %v35, 4294901760
    %v61 = vsub.f32 %v35, %v60
    %v62 = vand.u32 %v61, 4294901760
    %v63 = vsub.f32 %v61, %v62
    %v64 = vand.u32 %v63, 4294901760
    %65 = vmatmul.f32.gmra.mxu0 %v64
    %v66 = vpop.f32.mrf.mxu0
    %v67 = vadd.f32 0.0, %v66
    %v68 = vand.u32 %v38, 4294901760
    %v69 = vsub.f32 %v38, %v68
    %v70 = vand.u32 %v69, 4294901760
    %v71 = vsub.f32 %v69, %v70
    %v72 = vand.u32 %v71, 4294901760
    %73 = vmatmul.f32.gmra.mxu0 %v72
    %v74 = vpop.f32.mrf.mxu0
    %v75 = vadd.f32 0.0, %v74
    %76 = vdwg.mxu0
    %77 = vmatpush.msra.mxu0 0.0
    %78 = vmatpush.msra.mxu0 0.0
    %79 = vmatpush.msra.mxu0 0.0
    %80 = vmatpush.msra.mxu0 0.0
    %81 = vmatpush.msra.mxu0 0.0
    %82 = vmatpush.msra.mxu0 0.0
    %83 = vmatpush.msra.mxu0 0.0
    %84 = vmatpush.msra.mxu0 0.0
    %85 = vmatpush.msra.mxu0 0.0
    %86 = vmatpush.msra.mxu0 0.0
    %87 = vmatpush.msra.mxu0 0.0
    %88 = vmatpush.msra.mxu0 0.0
    %v89 = vand.u32 %v32, 4294901760
    %v90 = vsub.f32 %v32, %v89
    %v91 = vand.u32 %v90, 4294901760
    %v92 = vsub.f32 %v90, %v91
    %v93 = vand.u32 %v92, 4294901760
    %94 = vmatpush.msra.mxu0 %v93
    %v95 = vand.u32 %v31, 4294901760
    %v96 = vsub.f32 %v31, %v95
    %v97 = vand.u32 %v96, 4294901760
    %v98 = vsub.f32 %v96, %v97
    %v99 = vand.u32 %v98, 4294901760
    %100 = vmatpush.msra.mxu0 %v99
    %v101 = vand.u32 %v30, 4294901760
    %v102 = vsub.f32 %v30, %v101
    %v103 = vand.u32 %v102, 4294901760
    %v104 = vsub.f32 %v102, %v103
    %v105 = vand.u32 %v104, 4294901760
    %106 = vmatpush.msra.mxu0 %v105
    %v107 = vand.u32 %v29, 4294901760
    %v108 = vsub.f32 %v29, %v107
    %v109 = vand.u32 %v108, 4294901760
    %v110 = vsub.f32 %v108, %v109
    %v111 = vand.u32 %v110, 4294901760
    %112 = vmatpush.msra.mxu0 %v111
    %v113 = vand.u32 %v35, 4294901760
    %114 = vmatmul.f32.gmra.mxu0 %v113
    %v115 = vpop.f32.mrf.mxu0
    %v116 = vadd.f32 %v67, %v115
    %v117 = vand.u32 %v38, 4294901760
    %118 = vmatmul.f32.gmra.mxu0 %v117
    %v119 = vpop.f32.mrf.mxu0
    %v120 = vadd.f32 %v75, %v119
    %121 = vdwg.mxu0
    %122 = vmatpush.msra.mxu0 0.0
    %123 = vmatpush.msra.mxu0 0.0
    %124 = vmatpush.msra.mxu0 0.0
    %125 = vmatpush.msra.mxu0 0.0
    %126 = vmatpush.msra.mxu0 0.0
    %127 = vmatpush.msra.mxu0 0.0
    %128 = vmatpush.msra.mxu0 0.0
    %129 = vmatpush.msra.mxu0 0.0
    %130 = vmatpush.msra.mxu0 0.0
    %131 = vmatpush.msra.mxu0 0.0
    %132 = vmatpush.msra.mxu0 0.0
    %133 = vmatpush.msra.mxu0 0.0
    %v134 = vand.u32 %v32, 4294901760
    %v135 = vsub.f32 %v32, %v134
    %136 = vmatpush.msra.mxu0 %v135
    %v137 = vand.u32 %v31, 4294901760
    %v138 = vsub.f32 %v31, %v137
    %139 = vmatpush.msra.mxu0 %v138
    %v140 = vand.u32 %v30, 4294901760
    %v141 = vsub.f32 %v30, %v140
    %142 = vmatpush.msra.mxu0 %v141
    %v143 = vand.u32 %v29, 4294901760
    %v144 = vsub.f32 %v29, %v143
    %145 = vmatpush.msra.mxu0 %v144
    %v146 = vand.u32 %v35, 4294901760
    %v147 = vsub.f32 %v35, %v146
    %148 = vmatmul.f32.gmra.mxu0 %v147
    %v149 = vpop.f32.mrf.mxu0
    %v150 = vadd.f32 %v116, %v149
    %v151 = vand.u32 %v38, 4294901760
    %v152 = vsub.f32 %v38, %v151
    %153 = vmatmul.f32.gmra.mxu0 %v152
    %v154 = vpop.f32.mrf.mxu0
    %v155 = vadd.f32 %v120, %v154
    %156 = vdwg.mxu0
    %157 = vmatpush.msra.mxu0 0.0
    %158 = vmatpush.msra.mxu0 0.0
    %159 = vmatpush.msra.mxu0 0.0
    %160 = vmatpush.msra.mxu0 0.0
    %161 = vmatpush.msra.mxu0 0.0
    %162 = vmatpush.msra.mxu0 0.0
    %163 = vmatpush.msra.mxu0 0.0
    %164 = vmatpush.msra.mxu0 0.0
    %165 = vmatpush.msra.mxu0 0.0
    %166 = vmatpush.msra.mxu0 0.0
    %167 = vmatpush.msra.mxu0 0.0
    %168 = vmatpush.msra.mxu0 0.0
    %v169 = vand.u32 %v32, 4294901760
    %170 = vmatpush.msra.mxu0 %v169
    %v171 = vand.u32 %v31, 4294901760
    %172 = vmatpush.msra.mxu0 %v171
    %v173 = vand.u32 %v30, 4294901760
    %174 = vmatpush.msra.mxu0 %v173
    %v175 = vand.u32 %v29, 4294901760
    %176 = vmatpush.msra.mxu0 %v175
    %v177 = vand.u32 %v35, 4294901760
    %v178 = vsub.f32 %v35, %v177
    %v179 = vand.u32 %v178, 4294901760
    %180 = vmatmul.f32.gmra.mxu0 %v179
    %v181 = vpop.f32.mrf.mxu0
    %v182 = vadd.f32 %v150, %v181
    %v183 = vand.u32 %v38, 4294901760
    %v184 = vsub.f32 %v38, %v183
    %v185 = vand.u32 %v184, 4294901760
    %186 = vmatmul.f32.gmra.mxu0 %v185
    %v187 = vpop.f32.mrf.mxu0
    %v188 = vadd.f32 %v155, %v187
    %189 = vdwg.mxu0
    %190 = vmatpush.msra.mxu0 0.0
    %191 = vmatpush.msra.mxu0 0.0
    %192 = vmatpush.msra.mxu0 0.0
    %193 = vmatpush.msra.mxu0 0.0
    %194 = vmatpush.msra.mxu0 0.0
    %195 = vmatpush.msra.mxu0 0.0
    %196 = vmatpush.msra.mxu0 0.0
    %197 = vmatpush.msra.mxu0 0.0
    %198 = vmatpush.msra.mxu0 0.0
    %199 = vmatpush.msra.mxu0 0.0
    %200 = vmatpush.msra.mxu0 0.0
    %201 = vmatpush.msra.mxu0 0.0
    %v202 = vand.u32 %v32, 4294901760
    %v203 = vsub.f32 %v32, %v202
    %v204 = vand.u32 %v203, 4294901760
    %205 = vmatpush.msra.mxu0 %v204
    %v206 = vand.u32 %v31, 4294901760
    %v207 = vsub.f32 %v31, %v206
    %v208 = vand.u32 %v207, 4294901760
    %209 = vmatpush.msra.mxu0 %v208
    %v210 = vand.u32 %v30, 4294901760
    %v211 = vsub.f32 %v30, %v210
    %v212 = vand.u32 %v211, 4294901760
    %213 = vmatpush.msra.mxu0 %v212
    %v214 = vand.u32 %v29, 4294901760
    %v215 = vsub.f32 %v29, %v214
    %v216 = vand.u32 %v215, 4294901760
    %217 = vmatpush.msra.mxu0 %v216
    %v218 = vand.u32 %v35, 4294901760
    %219 = vmatmul.f32.gmra.mxu0 %v218
    %v220 = vpop.f32.mrf.mxu0
    %v221 = vadd.f32 %v182, %v220
    %v222 = vand.u32 %v38, 4294901760
    %223 = vmatmul.f32.gmra.mxu0 %v222
    %v224 = vpop.f32.mrf.mxu0
    %v225 = vadd.f32 %v188, %v224
    %226 = vdwg.mxu0
    %227 = vmatpush.msra.mxu0 0.0
    %228 = vmatpush.msra.mxu0 0.0
    %229 = vmatpush.msra.mxu0 0.0
    %230 = vmatpush.msra.mxu0 0.0
    %231 = vmatpush.msra.mxu0 0.0
    %232 = vmatpush.msra.mxu0 0.0
    %233 = vmatpush.msra.mxu0 0.0
    %234 = vmatpush.msra.mxu0 0.0
    %235 = vmatpush.msra.mxu0 0.0
    %236 = vmatpush.msra.mxu0 0.0
    %237 = vmatpush.msra.mxu0 0.0
    %238 = vmatpush.msra.mxu0 0.0
    %v239 = vand.u32 %v32, 4294901760
    %240 = vmatpush.msra.mxu0 %v239
    %v241 = vand.u32 %v31, 4294901760
    %242 = vmatpush.msra.mxu0 %v241
    %v243 = vand.u32 %v30, 4294901760
    %244 = vmatpush.msra.mxu0 %v243
    %v245 = vand.u32 %v29, 4294901760
    %246 = vmatpush.msra.mxu0 %v245
    %v247 = vand.u32 %v35, 4294901760
    %248 = vmatmul.f32.gmra.mxu0 %v247
    %v249 = vpop.f32.mrf.mxu0
    %v250 = vadd.f32 %v221, %v249
    %v251 = vand.u32 %v38, 4294901760
    %252 = vmatmul.f32.gmra.mxu0 %v251
    %v253 = vpop.f32.mrf.mxu0
    %v254 = vadd.f32 %v225, %v253
    %255 = vdwg.mxu0
    %v256 = vld [vmem:[%s1] sm:$0xff]
    %v257 = vld [vmem:[%s1 + $0x8] sm:$0xff]
    %v258 = vld [vmem:[%s1 + $0x10] sm:$0xff]
    %v259 = vld [vmem:[%s1 + $0x18] sm:$0xff]
    %v260 = vld [vmem:[%s1 + $0x20] sm:$0xff]
    %v261 = vld [vmem:[%s1 + $0x28] sm:$0xff]
    %v262 = vld [vmem:[%s1 + $0x30] sm:$0xff]
    %v263 = vld [vmem:[%s1 + $0x38] sm:$0xff]
    %v264 = vld [vmem:[%s1 + $0x40] sm:$0xff]
    %v265 = vld [vmem:[%s1 + $0x48] sm:$0xff]
    %v266 = vld [vmem:[%s1 + $0x50] sm:$0xff]
    %v267 = vld [vmem:[%s1 + $0x58] sm:$0xff]
    %v268 = vld [vmem:[%s1 + $0x60] sm:$0xff]
    %v269 = vld [vmem:[%s1 + $0x68] sm:$0xff]
    %v270 = vld [vmem:[%s1 + $0x70] sm:$0xff]
    %v271 = vld [vmem:[%s1 + $0x78] sm:$0xff]
    %v272 = vld [vmem:[%s1 + $0x80] sm:$0xff]
    %v273 = vld [vmem:[%s1 + $0x88] sm:$0xff]
    %v274 = vld [vmem:[%s1 + $0x90] sm:$0xff]
    %v275 = vld [vmem:[%s1 + $0x98] sm:$0xff]
    %v276 = vld [vmem:[%s1 + $0xa0] sm:$0xff]
    %v277 = vld [vmem:[%s1 + $0xa8] sm:$0xff]
    %v278 = vld [vmem:[%s1 + $0xb0] sm:$0xff]
    %v279 = vld [vmem:[%s1 + $0xb8] sm:$0xff]
    %v280 = vld [vmem:[%s1 + $0xc0] sm:$0xff]
    %v281 = vld [vmem:[%s1 + $0xc8] sm:$0xff]
    %v282 = vld [vmem:[%s1 + $0xd0] sm:$0xff]
    %v283 = vld [vmem:[%s1 + $0xd8] sm:$0xff]
    %v284 = vld [vmem:[%s1 + $0xe0] sm:$0xff]
    %v285 = vld [vmem:[%s1 + $0xe8] sm:$0xff]
    %v286 = vld [vmem:[%s1 + $0xf0] sm:$0xff]
    %v287 = vld [vmem:[%s1 + $0xf8] sm:$0xff]
    %v288 = vld [vmem:[%s3] sm:$0xff]
    %v289 = vld [vmem:[%s3 + $0x8] sm:$0xff]
    %v290 = vld [vmem:[%s3 + $0x10] sm:$0xff]
    %v291 = vld [vmem:[%s3 + $0x18] sm:$0xff]
    %v292 = vld [vmem:[%s3 + $0x20] sm:$0xff]
    %v293 = vld [vmem:[%s3 + $0x28] sm:$0xff]
    %v294 = vld [vmem:[%s3 + $0x30] sm:$0xff]
    %v295 = vld [vmem:[%s3 + $0x38] sm:$0xff]
    %v296 = vld [vmem:[%s3 + $0x40] sm:$0xff]
    %v297 = vld [vmem:[%s3 + $0x48] sm:$0xff]
    %v298 = vld [vmem:[%s3 + $0x50] sm:$0xff]
    %v299 = vld [vmem:[%s3 + $0x58] sm:$0xff]
    %v300 = vld [vmem:[%s3 + $0x60] sm:$0xff]
    %v301 = vld [vmem:[%s3 + $0x68] sm:$0xff]
    %v302 = vld [vmem:[%s3 + $0x70] sm:$0xff]
    %v303 = vld [vmem:[%s3 + $0x78] sm:$0xff]
    %v304 = vld [vmem:[%s3 + $0x80] sm:$0xff]
    %v305 = vld [vmem:[%s3 + $0x88] sm:$0xff]
    %v306 = vld [vmem:[%s3 + $0x90] sm:$0xff]
    %v307 = vld [vmem:[%s3 + $0x98] sm:$0xff]
    %v308 = vld [vmem:[%s3 + $0xa0] sm:$0xff]
    %v309 = vld [vmem:[%s3 + $0xa8] sm:$0xff]
    %vm310 = vcmask 719872
    %v312 = vsel %vm310, %v256, 0
    %v315 = vsel %vm310, %v257, 0
    %v318 = vsel %vm310, %v258, 0
    %v321 = vsel %vm310, %v259, 0
    %v324 = vsel %vm310, %v260, 0
    %v327 = vsel %vm310, %v261, 0
    %v330 = vsel %vm310, %v262, 0
    %v333 = vsel %vm310, %v263, 0
    %v336 = vsel %vm310, %v264, 0
    %v339 = vsel %vm310, %v265, 0
    %v342 = vsel %vm310, %v266, 0
    %v345 = vsel %vm310, %v267, 0
    %v348 = vsel %vm310, %v268, 0
    %v351 = vsel %vm310, %v269, 0
    %v354 = vsel %vm310, %v270, 0
    %v357 = vsel %vm310, %v271, 0
    %v360 = vsel %vm310, %v272, 0
    %v363 = vsel %vm310, %v273, 0
    %v366 = vsel %vm310, %v274, 0
    %v369 = vsel %vm310, %v275, 0
    %v372 = vsel %vm310, %v276, 0
    %v375 = vsel %vm310, %v277, 0
    %v378 = vsel %vm310, %v278, 0
    %v381 = vsel %vm310, %v279, 0
    %v384 = vsel %vm310, %v280, 0
    %v387 = vsel %vm310, %v281, 0
    %v390 = vsel %vm310, %v282, 0
    %v393 = vsel %vm310, %v283, 0
    %v396 = vsel %vm310, %v284, 0
    %v399 = vsel %vm310, %v285, 0
    %v402 = vsel %vm310, %v286, 0
    %v405 = vsel %vm310, %v287, 0
    %407 = vmatpush.msra.mxu0 0.0
    %408 = vmatpush.msra.mxu0 0.0
    %409 = vmatpush.msra.mxu0 0.0
    %410 = vmatpush.msra.mxu0 0.0
    %411 = vmatpush.msra.mxu0 0.0
    %v412 = vand.u32 %v308, 4294901760
    %413 = vmatpush.msra.mxu0 %v412
    %v414 = vand.u32 %v306, 4294901760
    %415 = vmatpush.msra.mxu0 %v414
    %v416 = vand.u32 %v304, 4294901760
    %417 = vmatpush.msra.mxu0 %v416
    %v418 = vand.u32 %v302, 4294901760
    %419 = vmatpush.msra.mxu0 %v418
    %v420 = vand.u32 %v300, 4294901760
    %421 = vmatpush.msra.mxu0 %v420
    %v422 = vand.u32 %v298, 4294901760
    %423 = vmatpush.msra.mxu0 %v422
    %v424 = vand.u32 %v296, 4294901760
    %425 = vmatpush.msra.mxu0 %v424
    %v426 = vand.u32 %v294, 4294901760
    %427 = vmatpush.msra.mxu0 %v426
    %v428 = vand.u32 %v292, 4294901760
    %429 = vmatpush.msra.mxu0 %v428
    %v430 = vand.u32 %v290, 4294901760
    %431 = vmatpush.msra.mxu0 %v430
    %v432 = vand.u32 %v288, 4294901760
    %433 = vmatpush.msra.mxu0 %v432
    %v434 = vand.u32 %v312, 4294901760
    %v435 = vsub.f32 %v312, %v434
    %v436 = vand.u32 %v435, 4294901760
    %v437 = vsub.f32 %v435, %v436
    %v438 = vand.u32 %v437, 4294901760
    %439 = vmatmul.f32.gmra.mxu0 %v438
    %v440 = vpop.f32.mrf.mxu0
    %v441 = vadd.f32 0.0, %v440
    %v442 = vand.u32 %v315, 4294901760
    %v443 = vsub.f32 %v315, %v442
    %v444 = vand.u32 %v443, 4294901760
    %v445 = vsub.f32 %v443, %v444
    %v446 = vand.u32 %v445, 4294901760
    %447 = vmatmul.f32.gmra.mxu0 %v446
    %v448 = vpop.f32.mrf.mxu0
    %v449 = vadd.f32 0.0, %v448
    %v450 = vand.u32 %v318, 4294901760
    %v451 = vsub.f32 %v318, %v450
    %v452 = vand.u32 %v451, 4294901760
    %v453 = vsub.f32 %v451, %v452
    %v454 = vand.u32 %v453, 4294901760
    %455 = vmatmul.f32.gmra.mxu0 %v454
    %v456 = vpop.f32.mrf.mxu0
    %v457 = vadd.f32 0.0, %v456
    %v458 = vand.u32 %v321, 4294901760
    %v459 = vsub.f32 %v321, %v458
    %v460 = vand.u32 %v459, 4294901760
    %v461 = vsub.f32 %v459, %v460
    %v462 = vand.u32 %v461, 4294901760
    %463 = vmatmul.f32.gmra.mxu0 %v462
    %v464 = vpop.f32.mrf.mxu0
    %v465 = vadd.f32 0.0, %v464
    %v466 = vand.u32 %v324, 4294901760
    %v467 = vsub.f32 %v324, %v466
    %v468 = vand.u32 %v467, 4294901760
    %v469 = vsub.f32 %v467, %v468
    %v470 = vand.u32 %v469, 4294901760
    %471 = vmatmul.f32.gmra.mxu0 %v470
    %v472 = vpop.f32.mrf.mxu0
    %v473 = vadd.f32 0.0, %v472
    %v474 = vand.u32 %v327, 4294901760
    %v475 = vsub.f32 %v327, %v474
    %v476 = vand.u32 %v475, 4294901760
    %v477 = vsub.f32 %v475, %v476
    %v478 = vand.u32 %v477, 4294901760
    %479 = vmatmul.f32.gmra.mxu0 %v478
    %v480 = vpop.f32.mrf.mxu0
    %v481 = vadd.f32 0.0, %v480
    %v482 = vand.u32 %v330, 4294901760
    %v483 = vsub.f32 %v330, %v482
    %v484 = vand.u32 %v483, 4294901760
    %v485 = vsub.f32 %v483, %v484
    %v486 = vand.u32 %v485, 4294901760
    %487 = vmatmul.f32.gmra.mxu0 %v486
    %v488 = vpop.f32.mrf.mxu0
    %v489 = vadd.f32 0.0, %v488
    %v490 = vand.u32 %v333, 4294901760
    %v491 = vsub.f32 %v333, %v490
    %v492 = vand.u32 %v491, 4294901760
    %v493 = vsub.f32 %v491, %v492
    %v494 = vand.u32 %v493, 4294901760
    %495 = vmatmul.f32.gmra.mxu0 %v494
    %v496 = vpop.f32.mrf.mxu0
    %v497 = vadd.f32 0.0, %v496
    %v498 = vand.u32 %v336, 4294901760
    %v499 = vsub.f32 %v336, %v498
    %v500 = vand.u32 %v499, 4294901760
    %v501 = vsub.f32 %v499, %v500
    %v502 = vand.u32 %v501, 4294901760
    %503 = vmatmul.f32.gmra.mxu0 %v502
    %v504 = vpop.f32.mrf.mxu0
    %v505 = vadd.f32 0.0, %v504
    %v506 = vand.u32 %v339, 4294901760
    %v507 = vsub.f32 %v339, %v506
    %v508 = vand.u32 %v507, 4294901760
    %v509 = vsub.f32 %v507, %v508
    %v510 = vand.u32 %v509, 4294901760
    %511 = vmatmul.f32.gmra.mxu0 %v510
    %v512 = vpop.f32.mrf.mxu0
    %v513 = vadd.f32 0.0, %v512
    %v514 = vand.u32 %v342, 4294901760
    %v515 = vsub.f32 %v342, %v514
    %v516 = vand.u32 %v515, 4294901760
    %v517 = vsub.f32 %v515, %v516
    %v518 = vand.u32 %v517, 4294901760
    %519 = vmatmul.f32.gmra.mxu0 %v518
    %v520 = vpop.f32.mrf.mxu0
    %v521 = vadd.f32 0.0, %v520
    %v522 = vand.u32 %v345, 4294901760
    %v523 = vsub.f32 %v345, %v522
    %v524 = vand.u32 %v523, 4294901760
    %v525 = vsub.f32 %v523, %v524
    %v526 = vand.u32 %v525, 4294901760
    %527 = vmatmul.f32.gmra.mxu0 %v526
    %v528 = vpop.f32.mrf.mxu0
    %v529 = vadd.f32 0.0, %v528
    %v530 = vand.u32 %v348, 4294901760
    %v531 = vsub.f32 %v348, %v530
    %v532 = vand.u32 %v531, 4294901760
    %v533 = vsub.f32 %v531, %v532
    %v534 = vand.u32 %v533, 4294901760
    %535 = vmatmul.f32.gmra.mxu0 %v534
    %v536 = vpop.f32.mrf.mxu0
    %v537 = vadd.f32 0.0, %v536
    %v538 = vand.u32 %v351, 4294901760
    %v539 = vsub.f32 %v351, %v538
    %v540 = vand.u32 %v539, 4294901760
    %v541 = vsub.f32 %v539, %v540
    %v542 = vand.u32 %v541, 4294901760
    %543 = vmatmul.f32.gmra.mxu0 %v542
    %v544 = vpop.f32.mrf.mxu0
    %v545 = vadd.f32 0.0, %v544
    %v546 = vand.u32 %v354, 4294901760
    %v547 = vsub.f32 %v354, %v546
    %v548 = vand.u32 %v547, 4294901760
    %v549 = vsub.f32 %v547, %v548
    %v550 = vand.u32 %v549, 4294901760
    %551 = vmatmul.f32.gmra.mxu0 %v550
    %v552 = vpop.f32.mrf.mxu0
    %v553 = vadd.f32 0.0, %v552
    %v554 = vand.u32 %v357, 4294901760
    %v555 = vsub.f32 %v357, %v554
    %v556 = vand.u32 %v555, 4294901760
    %v557 = vsub.f32 %v555, %v556
    %v558 = vand.u32 %v557, 4294901760
    %559 = vmatmul.f32.gmra.mxu0 %v558
    %v560 = vpop.f32.mrf.mxu0
    %v561 = vadd.f32 0.0, %v560
    %v562 = vand.u32 %v360, 4294901760
    %v563 = vsub.f32 %v360, %v562
    %v564 = vand.u32 %v563, 4294901760
    %v565 = vsub.f32 %v563, %v564
    %v566 = vand.u32 %v565, 4294901760
    %567 = vmatmul.f32.gmra.mxu0 %v566
    %v568 = vpop.f32.mrf.mxu0
    %v569 = vadd.f32 0.0, %v568
    %v570 = vand.u32 %v363, 4294901760
    %v571 = vsub.f32 %v363, %v570
    %v572 = vand.u32 %v571, 4294901760
    %v573 = vsub.f32 %v571, %v572
    %v574 = vand.u32 %v573, 4294901760
    %575 = vmatmul.f32.gmra.mxu0 %v574
    %v576 = vpop.f32.mrf.mxu0
    %v577 = vadd.f32 0.0, %v576
    %v578 = vand.u32 %v366, 4294901760
    %v579 = vsub.f32 %v366, %v578
    %v580 = vand.u32 %v579, 4294901760
    %v581 = vsub.f32 %v579, %v580
    %v582 = vand.u32 %v581, 4294901760
    %583 = vmatmul.f32.gmra.mxu0 %v582
    %v584 = vpop.f32.mrf.mxu0
    %v585 = vadd.f32 0.0, %v584
    %v586 = vand.u32 %v369, 4294901760
    %v587 = vsub.f32 %v369, %v586
    %v588 = vand.u32 %v587, 4294901760
    %v589 = vsub.f32 %v587, %v588
    %v590 = vand.u32 %v589, 4294901760
    %591 = vmatmul.f32.gmra.mxu0 %v590
    %v592 = vpop.f32.mrf.mxu0
    %v593 = vadd.f32 0.0, %v592
    %v594 = vand.u32 %v372, 4294901760
    %v595 = vsub.f32 %v372, %v594
    %v596 = vand.u32 %v595, 4294901760
    %v597 = vsub.f32 %v595, %v596
    %v598 = vand.u32 %v597, 4294901760
    %599 = vmatmul.f32.gmra.mxu0 %v598
    %v600 = vpop.f32.mrf.mxu0
    %v601 = vadd.f32 0.0, %v600
    %v602 = vand.u32 %v375, 4294901760
    %v603 = vsub.f32 %v375, %v602
    %v604 = vand.u32 %v603, 4294901760
    %v605 = vsub.f32 %v603, %v604
    %v606 = vand.u32 %v605, 4294901760
    %607 = vmatmul.f32.gmra.mxu0 %v606
    %v608 = vpop.f32.mrf.mxu0
    %v609 = vadd.f32 0.0, %v608
    %v610 = vand.u32 %v378, 4294901760
    %v611 = vsub.f32 %v378, %v610
    %v612 = vand.u32 %v611, 4294901760
    %v613 = vsub.f32 %v611, %v612
    %v614 = vand.u32 %v613, 4294901760
    %615 = vmatmul.f32.gmra.mxu0 %v614
    %v616 = vpop.f32.mrf.mxu0
    %v617 = vadd.f32 0.0, %v616
    %v618 = vand.u32 %v381, 4294901760
    %v619 = vsub.f32 %v381, %v618
    %v620 = vand.u32 %v619, 4294901760
    %v621 = vsub.f32 %v619, %v620
    %v622 = vand.u32 %v621, 4294901760
    %623 = vmatmul.f32.gmra.mxu0 %v622
    %v624 = vpop.f32.mrf.mxu0
    %v625 = vadd.f32 0.0, %v624
    %v626 = vand.u32 %v384, 4294901760
    %v627 = vsub.f32 %v384, %v626
    %v628 = vand.u32 %v627, 4294901760
    %v629 = vsub.f32 %v627, %v628
    %v630 = vand.u32 %v629, 4294901760
    %631 = vmatmul.f32.gmra.mxu0 %v630
    %v632 = vpop.f32.mrf.mxu0
    %v633 = vadd.f32 0.0, %v632
    %v634 = vand.u32 %v387, 4294901760
    %v635 = vsub.f32 %v387, %v634
    %v636 = vand.u32 %v635, 4294901760
    %v637 = vsub.f32 %v635, %v636
    %v638 = vand.u32 %v637, 4294901760
    %639 = vmatmul.f32.gmra.mxu0 %v638
    %v640 = vpop.f32.mrf.mxu0
    %v641 = vadd.f32 0.0, %v640
    %v642 = vand.u32 %v390, 4294901760
    %v643 = vsub.f32 %v390, %v642
    %v644 = vand.u32 %v643, 4294901760
    %v645 = vsub.f32 %v643, %v644
    %v646 = vand.u32 %v645, 4294901760
    %647 = vmatmul.f32.gmra.mxu0 %v646
    %v648 = vpop.f32.mrf.mxu0
    %v649 = vadd.f32 0.0, %v648
    %v650 = vand.u32 %v393, 4294901760
    %v651 = vsub.f32 %v393, %v650
    %v652 = vand.u32 %v651, 4294901760
    %v653 = vsub.f32 %v651, %v652
    %v654 = vand.u32 %v653, 4294901760
    %655 = vmatmul.f32.gmra.mxu0 %v654
    %v656 = vpop.f32.mrf.mxu0
    %v657 = vadd.f32 0.0, %v656
    %v658 = vand.u32 %v396, 4294901760
    %v659 = vsub.f32 %v396, %v658
    %v660 = vand.u32 %v659, 4294901760
    %v661 = vsub.f32 %v659, %v660
    %v662 = vand.u32 %v661, 4294901760
    %663 = vmatmul.f32.gmra.mxu0 %v662
    %v664 = vpop.f32.mrf.mxu0
    %v665 = vadd.f32 0.0, %v664
    %v666 = vand.u32 %v399, 4294901760
    %v667 = vsub.f32 %v399, %v666
    %v668 = vand.u32 %v667, 4294901760
    %v669 = vsub.f32 %v667, %v668
    %v670 = vand.u32 %v669, 4294901760
    %671 = vmatmul.f32.gmra.mxu0 %v670
    %v672 = vpop.f32.mrf.mxu0
    %v673 = vadd.f32 0.0, %v672
    %v674 = vand.u32 %v402, 4294901760
    %v675 = vsub.f32 %v402, %v674
    %v676 = vand.u32 %v675, 4294901760
    %v677 = vsub.f32 %v675, %v676
    %v678 = vand.u32 %v677, 4294901760
    %679 = vmatmul.f32.gmra.mxu0 %v678
    %v680 = vpop.f32.mrf.mxu0
    %v681 = vadd.f32 0.0, %v680
    %v682 = vand.u32 %v405, 4294901760
    %v683 = vsub.f32 %v405, %v682
    %v684 = vand.u32 %v683, 4294901760
    %v685 = vsub.f32 %v683, %v684
    %v686 = vand.u32 %v685, 4294901760
    %687 = vmatmul.f32.gmra.mxu0 %v686
    %v688 = vpop.f32.mrf.mxu0
    %v689 = vadd.f32 0.0, %v688
    %690 = vdwg.mxu0
    %691 = vmatpush.msra.mxu0 0.0
    %692 = vmatpush.msra.mxu0 0.0
    %693 = vmatpush.msra.mxu0 0.0
    %694 = vmatpush.msra.mxu0 0.0
    %695 = vmatpush.msra.mxu0 0.0
    %v696 = vand.u32 %v308, 4294901760
    %v697 = vsub.f32 %v308, %v696
    %v698 = vand.u32 %v697, 4294901760
    %v699 = vsub.f32 %v697, %v698
    %v700 = vand.u32 %v699, 4294901760
    %701 = vmatpush.msra.mxu0 %v700
    %v702 = vand.u32 %v306, 4294901760
    %v703 = vsub.f32 %v306, %v702
    %v704 = vand.u32 %v703, 4294901760
    %v705 = vsub.f32 %v703, %v704
    %v706 = vand.u32 %v705, 4294901760
    %707 = vmatpush.msra.mxu0 %v706
    %v708 = vand.u32 %v304, 4294901760
    %v709 = vsub.f32 %v304, %v708
    %v710 = vand.u32 %v709, 4294901760
    %v711 = vsub.f32 %v709, %v710
    %v712 = vand.u32 %v711, 4294901760
    %713 = vmatpush.msra.mxu0 %v712
    %v714 = vand.u32 %v302, 4294901760
    %v715 = vsub.f32 %v302, %v714
    %v716 = vand.u32 %v715, 4294901760
    %v717 = vsub.f32 %v715, %v716
    %v718 = vand.u32 %v717, 4294901760
    %719 = vmatpush.msra.mxu0 %v718
    %v720 = vand.u32 %v300, 4294901760
    %v721 = vsub.f32 %v300, %v720
    %v722 = vand.u32 %v721, 4294901760
    %v723 = vsub.f32 %v721, %v722
    %v724 = vand.u32 %v723, 4294901760
    %725 = vmatpush.msra.mxu0 %v724
    %v726 = vand.u32 %v298, 4294901760
    %v727 = vsub.f32 %v298, %v726
    %v728 = vand.u32 %v727, 4294901760
    %v729 = vsub.f32 %v727, %v728
    %v730 = vand.u32 %v729, 4294901760
    %731 = vmatpush.msra.mxu0 %v730
    %v732 = vand.u32 %v296, 4294901760
    %v733 = vsub.f32 %v296, %v732
    %v734 = vand.u32 %v733, 4294901760
    %v735 = vsub.f32 %v733, %v734
    %v736 = vand.u32 %v735, 4294901760
    %737 = vmatpush.msra.mxu0 %v736
    %v738 = vand.u32 %v294, 4294901760
    %v739 = vsub.f32 %v294, %v738
    %v740 = vand.u32 %v739, 4294901760
    %v741 = vsub.f32 %v739, %v740
    %v742 = vand.u32 %v741, 4294901760
    %743 = vmatpush.msra.mxu0 %v742
    %v744 = vand.u32 %v292, 4294901760
    %v745 = vsub.f32 %v292, %v744
    %v746 = vand.u32 %v745, 4294901760
    %v747 = vsub.f32 %v745, %v746
    %v748 = vand.u32 %v747, 4294901760
    %749 = vmatpush.msra.mxu0 %v748
    %v750 = vand.u32 %v290, 4294901760
    %v751 = vsub.f32 %v290, %v750
    %v752 = vand.u32 %v751, 4294901760
    %v753 = vsub.f32 %v751, %v752
    %v754 = vand.u32 %v753, 4294901760
    %755 = vmatpush.msra.mxu0 %v754
    %v756 = vand.u32 %v288, 4294901760
    %v757 = vsub.f32 %v288, %v756
    %v758 = vand.u32 %v757, 4294901760
    %v759 = vsub.f32 %v757, %v758
    %v760 = vand.u32 %v759, 4294901760
    %761 = vmatpush.msra.mxu0 %v760
    %v762 = vand.u32 %v312, 4294901760
    %763 = vmatmul.f32.gmra.mxu0 %v762
    %v764 = vpop.f32.mrf.mxu0
    %v765 = vadd.f32 %v441, %v764
    %v766 = vand.u32 %v315, 4294901760
    %767 = vmatmul.f32.gmra.mxu0 %v766
    %v768 = vpop.f32.mrf.mxu0
    %v769 = vadd.f32 %v449, %v768
    %v770 = vand.u32 %v318, 4294901760
    %771 = vmatmul.f32.gmra.mxu0 %v770
    %v772 = vpop.f32.mrf.mxu0
    %v773 = vadd.f32 %v457, %v772
    %v774 = vand.u32 %v321, 4294901760
    %775 = vmatmul.f32.gmra.mxu0 %v774
    %v776 = vpop.f32.mrf.mxu0
    %v777 = vadd.f32 %v465, %v776
    %v778 = vand.u32 %v324, 4294901760
    %779 = vmatmul.f32.gmra.mxu0 %v778
    %v780 = vpop.f32.mrf.mxu0
    %v781 = vadd.f32 %v473, %v780
    %v782 = vand.u32 %v327, 4294901760
    %783 = vmatmul.f32.gmra.mxu0 %v782
    %v784 = vpop.f32.mrf.mxu0
    %v785 = vadd.f32 %v481, %v784
    %v786 = vand.u32 %v330, 4294901760
    %787 = vmatmul.f32.gmra.mxu0 %v786
    %v788 = vpop.f32.mrf.mxu0
    %v789 = vadd.f32 %v489, %v788
    %v790 = vand.u32 %v333, 4294901760
    %791 = vmatmul.f32.gmra.mxu0 %v790
    %v792 = vpop.f32.mrf.mxu0
    %v793 = vadd.f32 %v497, %v792
    %v794 = vand.u32 %v336, 4294901760
    %795 = vmatmul.f32.gmra.mxu0 %v794
    %v796 = vpop.f32.mrf.mxu0
    %v797 = vadd.f32 %v505, %v796
    %v798 = vand.u32 %v339, 4294901760
    %799 = vmatmul.f32.gmra.mxu0 %v798
    %v800 = vpop.f32.mrf.mxu0
    %v801 = vadd.f32 %v513, %v800
    %v802 = vand.u32 %v342, 4294901760
    %803 = vmatmul.f32.gmra.mxu0 %v802
    %v804 = vpop.f32.mrf.mxu0
    %v805 = vadd.f32 %v521, %v804
    %v806 = vand.u32 %v345, 4294901760
    %807 = vmatmul.f32.gmra.mxu0 %v806
    %v808 = vpop.f32.mrf.mxu0
    %v809 = vadd.f32 %v529, %v808
    %v810 = vand.u32 %v348, 4294901760
    %811 = vmatmul.f32.gmra.mxu0 %v810
    %v812 = vpop.f32.mrf.mxu0
    %v813 = vadd.f32 %v537, %v812
    %v814 = vand.u32 %v351, 4294901760
    %815 = vmatmul.f32.gmra.mxu0 %v814
    %v816 = vpop.f32.mrf.mxu0
    %v817 = vadd.f32 %v545, %v816
    %v818 = vand.u32 %v354, 4294901760
    %819 = vmatmul.f32.gmra.mxu0 %v818
    %v820 = vpop.f32.mrf.mxu0
    %v821 = vadd.f32 %v553, %v820
    %v822 = vand.u32 %v357, 4294901760
    %823 = vmatmul.f32.gmra.mxu0 %v822
    %v824 = vpop.f32.mrf.mxu0
    %v825 = vadd.f32 %v561, %v824
    %v826 = vand.u32 %v360, 4294901760
    %827 = vmatmul.f32.gmra.mxu0 %v826
    %v828 = vpop.f32.mrf.mxu0
    %v829 = vadd.f32 %v569, %v828
    %v830 = vand.u32 %v363, 4294901760
    %831 = vmatmul.f32.gmra.mxu0 %v830
    %v832 = vpop.f32.mrf.mxu0
    %v833 = vadd.f32 %v577, %v832
    %v834 = vand.u32 %v366, 4294901760
    %835 = vmatmul.f32.gmra.mxu0 %v834
    %v836 = vpop.f32.mrf.mxu0
    %v837 = vadd.f32 %v585, %v836
    %v838 = vand.u32 %v369, 4294901760
    %839 = vmatmul.f32.gmra.mxu0 %v838
    %v840 = vpop.f32.mrf.mxu0
    %v841 = vadd.f32 %v593, %v840
    %v842 = vand.u32 %v372, 4294901760
    %843 = vmatmul.f32.gmra.mxu0 %v842
    %v844 = vpop.f32.mrf.mxu0
    %v845 = vadd.f32 %v601, %v844
    %v846 = vand.u32 %v375, 4294901760
    %847 = vmatmul.f32.gmra.mxu0 %v846
    %v848 = vpop.f32.mrf.mxu0
    %v849 = vadd.f32 %v609, %v848
    %v850 = vand.u32 %v378, 4294901760
    %851 = vmatmul.f32.gmra.mxu0 %v850
    %v852 = vpop.f32.mrf.mxu0
    %v853 = vadd.f32 %v617, %v852
    %v854 = vand.u32 %v381, 4294901760
    %855 = vmatmul.f32.gmra.mxu0 %v854
    %v856 = vpop.f32.mrf.mxu0
    %v857 = vadd.f32 %v625, %v856
    %v858 = vand.u32 %v384, 4294901760
    %859 = vmatmul.f32.gmra.mxu0 %v858
    %v860 = vpop.f32.mrf.mxu0
    %v861 = vadd.f32 %v633, %v860
    %v862 = vand.u32 %v387, 4294901760
    %863 = vmatmul.f32.gmra.mxu0 %v862
    %v864 = vpop.f32.mrf.mxu0
    %v865 = vadd.f32 %v641, %v864
    %v866 = vand.u32 %v390, 4294901760
    %867 = vmatmul.f32.gmra.mxu0 %v866
    %v868 = vpop.f32.mrf.mxu0
    %v869 = vadd.f32 %v649, %v868
    %v870 = vand.u32 %v393, 4294901760
    %871 = vmatmul.f32.gmra.mxu0 %v870
    %v872 = vpop.f32.mrf.mxu0
    %v873 = vadd.f32 %v657, %v872
    %v874 = vand.u32 %v396, 4294901760
    %875 = vmatmul.f32.gmra.mxu0 %v874
    %v876 = vpop.f32.mrf.mxu0
    %v877 = vadd.f32 %v665, %v876
    %v878 = vand.u32 %v399, 4294901760
    %879 = vmatmul.f32.gmra.mxu0 %v878
    %v880 = vpop.f32.mrf.mxu0
    %v881 = vadd.f32 %v673, %v880
    %v882 = vand.u32 %v402, 4294901760
    %883 = vmatmul.f32.gmra.mxu0 %v882
    %v884 = vpop.f32.mrf.mxu0
    %v885 = vadd.f32 %v681, %v884
    %v886 = vand.u32 %v405, 4294901760
    %887 = vmatmul.f32.gmra.mxu0 %v886
    %v888 = vpop.f32.mrf.mxu0
    %v889 = vadd.f32 %v689, %v888
    %890 = vdwg.mxu0
    %891 = vmatpush.msra.mxu0 0.0
    %892 = vmatpush.msra.mxu0 0.0
    %893 = vmatpush.msra.mxu0 0.0
    %894 = vmatpush.msra.mxu0 0.0
    %895 = vmatpush.msra.mxu0 0.0
    %v896 = vand.u32 %v308, 4294901760
    %v897 = vsub.f32 %v308, %v896
    %898 = vmatpush.msra.mxu0 %v897
    %v899 = vand.u32 %v306, 4294901760
    %v900 = vsub.f32 %v306, %v899
    %901 = vmatpush.msra.mxu0 %v900
    %v902 = vand.u32 %v304, 4294901760
    %v903 = vsub.f32 %v304, %v902
    %904 = vmatpush.msra.mxu0 %v903
    %v905 = vand.u32 %v302, 4294901760
    %v906 = vsub.f32 %v302, %v905
    %907 = vmatpush.msra.mxu0 %v906
    %v908 = vand.u32 %v300, 4294901760
    %v909 = vsub.f32 %v300, %v908
    %910 = vmatpush.msra.mxu0 %v909
    %v911 = vand.u32 %v298, 4294901760
    %v912 = vsub.f32 %v298, %v911
    %913 = vmatpush.msra.mxu0 %v912
    %v914 = vand.u32 %v296, 4294901760
    %v915 = vsub.f32 %v296, %v914
    %916 = vmatpush.msra.mxu0 %v915
    %v917 = vand.u32 %v294, 4294901760
    %v918 = vsub.f32 %v294, %v917
    %919 = vmatpush.msra.mxu0 %v918
    %v920 = vand.u32 %v292, 4294901760
    %v921 = vsub.f32 %v292, %v920
    %922 = vmatpush.msra.mxu0 %v921
    %v923 = vand.u32 %v290, 4294901760
    %v924 = vsub.f32 %v290, %v923
    %925 = vmatpush.msra.mxu0 %v924
    %v926 = vand.u32 %v288, 4294901760
    %v927 = vsub.f32 %v288, %v926
    %928 = vmatpush.msra.mxu0 %v927
    %v929 = vand.u32 %v312, 4294901760
    %v930 = vsub.f32 %v312, %v929
    %931 = vmatmul.f32.gmra.mxu0 %v930
    %v932 = vpop.f32.mrf.mxu0
    %v933 = vadd.f32 %v765, %v932
    %v934 = vand.u32 %v315, 4294901760
    %v935 = vsub.f32 %v315, %v934
    %936 = vmatmul.f32.gmra.mxu0 %v935
    %v937 = vpop.f32.mrf.mxu0
    %v938 = vadd.f32 %v769, %v937
    %v939 = vand.u32 %v318, 4294901760
    %v940 = vsub.f32 %v318, %v939
    %941 = vmatmul.f32.gmra.mxu0 %v940
    %v942 = vpop.f32.mrf.mxu0
    %v943 = vadd.f32 %v773, %v942
    %v944 = vand.u32 %v321, 4294901760
    %v945 = vsub.f32 %v321, %v944
    %946 = vmatmul.f32.gmra.mxu0 %v945
    %v947 = vpop.f32.mrf.mxu0
    %v948 = vadd.f32 %v777, %v947
    %v949 = vand.u32 %v324, 4294901760
    %v950 = vsub.f32 %v324, %v949
    %951 = vmatmul.f32.gmra.mxu0 %v950
    %v952 = vpop.f32.mrf.mxu0
    %v953 = vadd.f32 %v781, %v952
    %v954 = vand.u32 %v327, 4294901760
    %v955 = vsub.f32 %v327, %v954
    %956 = vmatmul.f32.gmra.mxu0 %v955
    %v957 = vpop.f32.mrf.mxu0
    %v958 = vadd.f32 %v785, %v957
    %v959 = vand.u32 %v330, 4294901760
    %v960 = vsub.f32 %v330, %v959
    %961 = vmatmul.f32.gmra.mxu0 %v960
    %v962 = vpop.f32.mrf.mxu0
    %v963 = vadd.f32 %v789, %v962
    %v964 = vand.u32 %v333, 4294901760
    %v965 = vsub.f32 %v333, %v964
    %966 = vmatmul.f32.gmra.mxu0 %v965
    %v967 = vpop.f32.mrf.mxu0
    %v968 = vadd.f32 %v793, %v967
    %v969 = vand.u32 %v336, 4294901760
    %v970 = vsub.f32 %v336, %v969
    %971 = vmatmul.f32.gmra.mxu0 %v970
    %v972 = vpop.f32.mrf.mxu0
    %v973 = vadd.f32 %v797, %v972
    %v974 = vand.u32 %v339, 4294901760
    %v975 = vsub.f32 %v339, %v974
    %976 = vmatmul.f32.gmra.mxu0 %v975
    %v977 = vpop.f32.mrf.mxu0
    %v978 = vadd.f32 %v801, %v977
    %v979 = vand.u32 %v342, 4294901760
    %v980 = vsub.f32 %v342, %v979
    %981 = vmatmul.f32.gmra.mxu0 %v980
    %v982 = vpop.f32.mrf.mxu0
    %v983 = vadd.f32 %v805, %v982
    %v984 = vand.u32 %v345, 4294901760
    %v985 = vsub.f32 %v345, %v984
    %986 = vmatmul.f32.gmra.mxu0 %v985
    %v987 = vpop.f32.mrf.mxu0
    %v988 = vadd.f32 %v809, %v987
    %v989 = vand.u32 %v348, 4294901760
    %v990 = vsub.f32 %v348, %v989
    %991 = vmatmul.f32.gmra.mxu0 %v990
    %v992 = vpop.f32.mrf.mxu0
    %v993 = vadd.f32 %v813, %v992
    %v994 = vand.u32 %v351, 4294901760
    %v995 = vsub.f32 %v351, %v994
    %996 = vmatmul.f32.gmra.mxu0 %v995
    %v997 = vpop.f32.mrf.mxu0
    %v998 = vadd.f32 %v817, %v997
    %v999 = vand.u32 %v354, 4294901760
    %v1000 = vsub.f32 %v354, %v999
    %1001 = vmatmul.f32.gmra.mxu0 %v1000
    %v1002 = vpop.f32.mrf.mxu0
    %v1003 = vadd.f32 %v821, %v1002
    %v1004 = vand.u32 %v357, 4294901760
    %v1005 = vsub.f32 %v357, %v1004
    %1006 = vmatmul.f32.gmra.mxu0 %v1005
    %v1007 = vpop.f32.mrf.mxu0
    %v1008 = vadd.f32 %v825, %v1007
    %v1009 = vand.u32 %v360, 4294901760
    %v1010 = vsub.f32 %v360, %v1009
    %1011 = vmatmul.f32.gmra.mxu0 %v1010
    %v1012 = vpop.f32.mrf.mxu0
    %v1013 = vadd.f32 %v829, %v1012
    %v1014 = vand.u32 %v363, 4294901760
    %v1015 = vsub.f32 %v363, %v1014
    %1016 = vmatmul.f32.gmra.mxu0 %v1015
    %v1017 = vpop.f32.mrf.mxu0
    %v1018 = vadd.f32 %v833, %v1017
    %v1019 = vand.u32 %v366, 4294901760
    %v1020 = vsub.f32 %v366, %v1019
    %1021 = vmatmul.f32.gmra.mxu0 %v1020
    %v1022 = vpop.f32.mrf.mxu0
    %v1023 = vadd.f32 %v837, %v1022
    %v1024 = vand.u32 %v369, 4294901760
    %v1025 = vsub.f32 %v369, %v1024
    %1026 = vmatmul.f32.gmra.mxu0 %v1025
    %v1027 = vpop.f32.mrf.mxu0
    %v1028 = vadd.f32 %v841, %v1027
    %v1029 = vand.u32 %v372, 4294901760
    %v1030 = vsub.f32 %v372, %v1029
    %1031 = vmatmul.f32.gmra.mxu0 %v1030
    %v1032 = vpop.f32.mrf.mxu0
    %v1033 = vadd.f32 %v845, %v1032
    %v1034 = vand.u32 %v375, 4294901760
    %v1035 = vsub.f32 %v375, %v1034
    %1036 = vmatmul.f32.gmra.mxu0 %v1035
    %v1037 = vpop.f32.mrf.mxu0
    %v1038 = vadd.f32 %v849, %v1037
    %v1039 = vand.u32 %v378, 4294901760
    %v1040 = vsub.f32 %v378, %v1039
    %1041 = vmatmul.f32.gmra.mxu0 %v1040
    %v1042 = vpop.f32.mrf.mxu0
    %v1043 = vadd.f32 %v853, %v1042
    %v1044 = vand.u32 %v381, 4294901760
    %v1045 = vsub.f32 %v381, %v1044
    %1046 = vmatmul.f32.gmra.mxu0 %v1045
    %v1047 = vpop.f32.mrf.mxu0
    %v1048 = vadd.f32 %v857, %v1047
    %v1049 = vand.u32 %v384, 4294901760
    %v1050 = vsub.f32 %v384, %v1049
    %1051 = vmatmul.f32.gmra.mxu0 %v1050
    %v1052 = vpop.f32.mrf.mxu0
    %v1053 = vadd.f32 %v861, %v1052
    %v1054 = vand.u32 %v387, 4294901760
    %v1055 = vsub.f32 %v387, %v1054
    %1056 = vmatmul.f32.gmra.mxu0 %v1055
    %v1057 = vpop.f32.mrf.mxu0
    %v1058 = vadd.f32 %v865, %v1057
    %v1059 = vand.u32 %v390, 4294901760
    %v1060 = vsub.f32 %v390, %v1059
    %1061 = vmatmul.f32.gmra.mxu0 %v1060
    %v1062 = vpop.f32.mrf.mxu0
    %v1063 = vadd.f32 %v869, %v1062
    %v1064 = vand.u32 %v393, 4294901760
    %v1065 = vsub.f32 %v393, %v1064
    %1066 = vmatmul.f32.gmra.mxu0 %v1065
    %v1067 = vpop.f32.mrf.mxu0
    %v1068 = vadd.f32 %v873, %v1067
    %v1069 = vand.u32 %v396, 4294901760
    %v1070 = vsub.f32 %v396, %v1069
    %1071 = vmatmul.f32.gmra.mxu0 %v1070
    %v1072 = vpop.f32.mrf.mxu0
    %v1073 = vadd.f32 %v877, %v1072
    %v1074 = vand.u32 %v399, 4294901760
    %v1075 = vsub.f32 %v399, %v1074
    %1076 = vmatmul.f32.gmra.mxu0 %v1075
    %v1077 = vpop.f32.mrf.mxu0
    %v1078 = vadd.f32 %v881, %v1077
    %v1079 = vand.u32 %v402, 4294901760
    %v1080 = vsub.f32 %v402, %v1079
    %1081 = vmatmul.f32.gmra.mxu0 %v1080
    %v1082 = vpop.f32.mrf.mxu0
    %v1083 = vadd.f32 %v885, %v1082
    %v1084 = vand.u32 %v405, 4294901760
    %v1085 = vsub.f32 %v405, %v1084
    %1086 = vmatmul.f32.gmra.mxu0 %v1085
    %v1087 = vpop.f32.mrf.mxu0
    %v1088 = vadd.f32 %v889, %v1087
    %1089 = vdwg.mxu0
    %1090 = vmatpush.msra.mxu0 0.0
    %1091 = vmatpush.msra.mxu0 0.0
    %1092 = vmatpush.msra.mxu0 0.0
    %1093 = vmatpush.msra.mxu0 0.0
    %1094 = vmatpush.msra.mxu0 0.0
    %v1095 = vand.u32 %v308, 4294901760
    %1096 = vmatpush.msra.mxu0 %v1095
    %v1097 = vand.u32 %v306, 4294901760
    %1098 = vmatpush.msra.mxu0 %v1097
    %v1099 = vand.u32 %v304, 4294901760
    %1100 = vmatpush.msra.mxu0 %v1099
    %v1101 = vand.u32 %v302, 4294901760
    %1102 = vmatpush.msra.mxu0 %v1101
    %v1103 = vand.u32 %v300, 4294901760
    %1104 = vmatpush.msra.mxu0 %v1103
    %v1105 = vand.u32 %v298, 4294901760
    %1106 = vmatpush.msra.mxu0 %v1105
    %v1107 = vand.u32 %v296, 4294901760
    %1108 = vmatpush.msra.mxu0 %v1107
    %v1109 = vand.u32 %v294, 4294901760
    %1110 = vmatpush.msra.mxu0 %v1109
    %v1111 = vand.u32 %v292, 4294901760
    %1112 = vmatpush.msra.mxu0 %v1111
    %v1113 = vand.u32 %v290, 4294901760
    %1114 = vmatpush.msra.mxu0 %v1113
    %v1115 = vand.u32 %v288, 4294901760
    %1116 = vmatpush.msra.mxu0 %v1115
    %v1117 = vand.u32 %v312, 4294901760
    %v1118 = vsub.f32 %v312, %v1117
    %v1119 = vand.u32 %v1118, 4294901760
    %1120 = vmatmul.f32.gmra.mxu0 %v1119
    %v1121 = vpop.f32.mrf.mxu0
    %v1122 = vadd.f32 %v933, %v1121
    %v1123 = vand.u32 %v315, 4294901760
    %v1124 = vsub.f32 %v315, %v1123
    %v1125 = vand.u32 %v1124, 4294901760
    %1126 = vmatmul.f32.gmra.mxu0 %v1125
    %v1127 = vpop.f32.mrf.mxu0
    %v1128 = vadd.f32 %v938, %v1127
    %v1129 = vand.u32 %v318, 4294901760
    %v1130 = vsub.f32 %v318, %v1129
    %v1131 = vand.u32 %v1130, 4294901760
    %1132 = vmatmul.f32.gmra.mxu0 %v1131
    %v1133 = vpop.f32.mrf.mxu0
    %v1134 = vadd.f32 %v943, %v1133
    %v1135 = vand.u32 %v321, 4294901760
    %v1136 = vsub.f32 %v321, %v1135
    %v1137 = vand.u32 %v1136, 4294901760
    %1138 = vmatmul.f32.gmra.mxu0 %v1137
    %v1139 = vpop.f32.mrf.mxu0
    %v1140 = vadd.f32 %v948, %v1139
    %v1141 = vand.u32 %v324, 4294901760
    %v1142 = vsub.f32 %v324, %v1141
    %v1143 = vand.u32 %v1142, 4294901760
    %1144 = vmatmul.f32.gmra.mxu0 %v1143
    %v1145 = vpop.f32.mrf.mxu0
    %v1146 = vadd.f32 %v953, %v1145
    %v1147 = vand.u32 %v327, 4294901760
    %v1148 = vsub.f32 %v327, %v1147
    %v1149 = vand.u32 %v1148, 4294901760
    %1150 = vmatmul.f32.gmra.mxu0 %v1149
    %v1151 = vpop.f32.mrf.mxu0
    %v1152 = vadd.f32 %v958, %v1151
    %v1153 = vand.u32 %v330, 4294901760
    %v1154 = vsub.f32 %v330, %v1153
    %v1155 = vand.u32 %v1154, 4294901760
    %1156 = vmatmul.f32.gmra.mxu0 %v1155
    %v1157 = vpop.f32.mrf.mxu0
    %v1158 = vadd.f32 %v963, %v1157
    %v1159 = vand.u32 %v333, 4294901760
    %v1160 = vsub.f32 %v333, %v1159
    %v1161 = vand.u32 %v1160, 4294901760
    %1162 = vmatmul.f32.gmra.mxu0 %v1161
    %v1163 = vpop.f32.mrf.mxu0
    %v1164 = vadd.f32 %v968, %v1163
    %v1165 = vand.u32 %v336, 4294901760
    %v1166 = vsub.f32 %v336, %v1165
    %v1167 = vand.u32 %v1166, 4294901760
    %1168 = vmatmul.f32.gmra.mxu0 %v1167
    %v1169 = vpop.f32.mrf.mxu0
    %v1170 = vadd.f32 %v973, %v1169
    %v1171 = vand.u32 %v339, 4294901760
    %v1172 = vsub.f32 %v339, %v1171
    %v1173 = vand.u32 %v1172, 4294901760
    %1174 = vmatmul.f32.gmra.mxu0 %v1173
    %v1175 = vpop.f32.mrf.mxu0
    %v1176 = vadd.f32 %v978, %v1175
    %v1177 = vand.u32 %v342, 4294901760
    %v1178 = vsub.f32 %v342, %v1177
    %v1179 = vand.u32 %v1178, 4294901760
    %1180 = vmatmul.f32.gmra.mxu0 %v1179
    %v1181 = vpop.f32.mrf.mxu0
    %v1182 = vadd.f32 %v983, %v1181
    %v1183 = vand.u32 %v345, 4294901760
    %v1184 = vsub.f32 %v345, %v1183
    %v1185 = vand.u32 %v1184, 4294901760
    %1186 = vmatmul.f32.gmra.mxu0 %v1185
    %v1187 = vpop.f32.mrf.mxu0
    %v1188 = vadd.f32 %v988, %v1187
    %v1189 = vand.u32 %v348, 4294901760
    %v1190 = vsub.f32 %v348, %v1189
    %v1191 = vand.u32 %v1190, 4294901760
    %1192 = vmatmul.f32.gmra.mxu0 %v1191
    %v1193 = vpop.f32.mrf.mxu0
    %v1194 = vadd.f32 %v993, %v1193
    %v1195 = vand.u32 %v351, 4294901760
    %v1196 = vsub.f32 %v351, %v1195
    %v1197 = vand.u32 %v1196, 4294901760
    %1198 = vmatmul.f32.gmra.mxu0 %v1197
    %v1199 = vpop.f32.mrf.mxu0
    %v1200 = vadd.f32 %v998, %v1199
    %v1201 = vand.u32 %v354, 4294901760
    %v1202 = vsub.f32 %v354, %v1201
    %v1203 = vand.u32 %v1202, 4294901760
    %1204 = vmatmul.f32.gmra.mxu0 %v1203
    %v1205 = vpop.f32.mrf.mxu0
    %v1206 = vadd.f32 %v1003, %v1205
    %v1207 = vand.u32 %v357, 4294901760
    %v1208 = vsub.f32 %v357, %v1207
    %v1209 = vand.u32 %v1208, 4294901760
    %1210 = vmatmul.f32.gmra.mxu0 %v1209
    %v1211 = vpop.f32.mrf.mxu0
    %v1212 = vadd.f32 %v1008, %v1211
    %v1213 = vand.u32 %v360, 4294901760
    %v1214 = vsub.f32 %v360, %v1213
    %v1215 = vand.u32 %v1214, 4294901760
    %1216 = vmatmul.f32.gmra.mxu0 %v1215
    %v1217 = vpop.f32.mrf.mxu0
    %v1218 = vadd.f32 %v1013, %v1217
    %v1219 = vand.u32 %v363, 4294901760
    %v1220 = vsub.f32 %v363, %v1219
    %v1221 = vand.u32 %v1220, 4294901760
    %1222 = vmatmul.f32.gmra.mxu0 %v1221
    %v1223 = vpop.f32.mrf.mxu0
    %v1224 = vadd.f32 %v1018, %v1223
    %v1225 = vand.u32 %v366, 4294901760
    %v1226 = vsub.f32 %v366, %v1225
    %v1227 = vand.u32 %v1226, 4294901760
    %1228 = vmatmul.f32.gmra.mxu0 %v1227
    %v1229 = vpop.f32.mrf.mxu0
    %v1230 = vadd.f32 %v1023, %v1229
    %v1231 = vand.u32 %v369, 4294901760
    %v1232 = vsub.f32 %v369, %v1231
    %v1233 = vand.u32 %v1232, 4294901760
    %1234 = vmatmul.f32.gmra.mxu0 %v1233
    %v1235 = vpop.f32.mrf.mxu0
    %v1236 = vadd.f32 %v1028, %v1235
    %v1237 = vand.u32 %v372, 4294901760
    %v1238 = vsub.f32 %v372, %v1237
    %v1239 = vand.u32 %v1238, 4294901760
    %1240 = vmatmul.f32.gmra.mxu0 %v1239
    %v1241 = vpop.f32.mrf.mxu0
    %v1242 = vadd.f32 %v1033, %v1241
    %v1243 = vand.u32 %v375, 4294901760
    %v1244 = vsub.f32 %v375, %v1243
    %v1245 = vand.u32 %v1244, 4294901760
    %1246 = vmatmul.f32.gmra.mxu0 %v1245
    %v1247 = vpop.f32.mrf.mxu0
    %v1248 = vadd.f32 %v1038, %v1247
    %v1249 = vand.u32 %v378, 4294901760
    %v1250 = vsub.f32 %v378, %v1249
    %v1251 = vand.u32 %v1250, 4294901760
    %1252 = vmatmul.f32.gmra.mxu0 %v1251
    %v1253 = vpop.f32.mrf.mxu0
    %v1254 = vadd.f32 %v1043, %v1253
    %v1255 = vand.u32 %v381, 4294901760
    %v1256 = vsub.f32 %v381, %v1255
    %v1257 = vand.u32 %v1256, 4294901760
    %1258 = vmatmul.f32.gmra.mxu0 %v1257
    %v1259 = vpop.f32.mrf.mxu0
    %v1260 = vadd.f32 %v1048, %v1259
    %v1261 = vand.u32 %v384, 4294901760
    %v1262 = vsub.f32 %v384, %v1261
    %v1263 = vand.u32 %v1262, 4294901760
    %1264 = vmatmul.f32.gmra.mxu0 %v1263
    %v1265 = vpop.f32.mrf.mxu0
    %v1266 = vadd.f32 %v1053, %v1265
    %v1267 = vand.u32 %v387, 4294901760
    %v1268 = vsub.f32 %v387, %v1267
    %v1269 = vand.u32 %v1268, 4294901760
    %1270 = vmatmul.f32.gmra.mxu0 %v1269
    %v1271 = vpop.f32.mrf.mxu0
    %v1272 = vadd.f32 %v1058, %v1271
    %v1273 = vand.u32 %v390, 4294901760
    %v1274 = vsub.f32 %v390, %v1273
    %v1275 = vand.u32 %v1274, 4294901760
    %1276 = vmatmul.f32.gmra.mxu0 %v1275
    %v1277 = vpop.f32.mrf.mxu0
    %v1278 = vadd.f32 %v1063, %v1277
    %v1279 = vand.u32 %v393, 4294901760
    %v1280 = vsub.f32 %v393, %v1279
    %v1281 = vand.u32 %v1280, 4294901760
    %1282 = vmatmul.f32.gmra.mxu0 %v1281
    %v1283 = vpop.f32.mrf.mxu0
    %v1284 = vadd.f32 %v1068, %v1283
    %v1285 = vand.u32 %v396, 4294901760
    %v1286 = vsub.f32 %v396, %v1285
    %v1287 = vand.u32 %v1286, 4294901760
    %1288 = vmatmul.f32.gmra.mxu0 %v1287
    %v1289 = vpop.f32.mrf.mxu0
    %v1290 = vadd.f32 %v1073, %v1289
    %v1291 = vand.u32 %v399, 4294901760
    %v1292 = vsub.f32 %v399, %v1291
    %v1293 = vand.u32 %v1292, 4294901760
    %1294 = vmatmul.f32.gmra.mxu0 %v1293
    %v1295 = vpop.f32.mrf.mxu0
    %v1296 = vadd.f32 %v1078, %v1295
    %v1297 = vand.u32 %v402, 4294901760
    %v1298 = vsub.f32 %v402, %v1297
    %v1299 = vand.u32 %v1298, 4294901760
    %1300 = vmatmul.f32.gmra.mxu0 %v1299
    %v1301 = vpop.f32.mrf.mxu0
    %v1302 = vadd.f32 %v1083, %v1301
    %v1303 = vand.u32 %v405, 4294901760
    %v1304 = vsub.f32 %v405, %v1303
    %v1305 = vand.u32 %v1304, 4294901760
    %1306 = vmatmul.f32.gmra.mxu0 %v1305
    %v1307 = vpop.f32.mrf.mxu0
    %v1308 = vadd.f32 %v1088, %v1307
    %1309 = vdwg.mxu0
    %1310 = vmatpush.msra.mxu0 0.0
    %1311 = vmatpush.msra.mxu0 0.0
    %1312 = vmatpush.msra.mxu0 0.0
    %1313 = vmatpush.msra.mxu0 0.0
    %1314 = vmatpush.msra.mxu0 0.0
    %v1315 = vand.u32 %v308, 4294901760
    %v1316 = vsub.f32 %v308, %v1315
    %v1317 = vand.u32 %v1316, 4294901760
    %1318 = vmatpush.msra.mxu0 %v1317
    %v1319 = vand.u32 %v306, 4294901760
    %v1320 = vsub.f32 %v306, %v1319
    %v1321 = vand.u32 %v1320, 4294901760
    %1322 = vmatpush.msra.mxu0 %v1321
    %v1323 = vand.u32 %v304, 4294901760
    %v1324 = vsub.f32 %v304, %v1323
    %v1325 = vand.u32 %v1324, 4294901760
    %1326 = vmatpush.msra.mxu0 %v1325
    %v1327 = vand.u32 %v302, 4294901760
    %v1328 = vsub.f32 %v302, %v1327
    %v1329 = vand.u32 %v1328, 4294901760
    %1330 = vmatpush.msra.mxu0 %v1329
    %v1331 = vand.u32 %v300, 4294901760
    %v1332 = vsub.f32 %v300, %v1331
    %v1333 = vand.u32 %v1332, 4294901760
    %1334 = vmatpush.msra.mxu0 %v1333
    %v1335 = vand.u32 %v298, 4294901760
    %v1336 = vsub.f32 %v298, %v1335
    %v1337 = vand.u32 %v1336, 4294901760
    %1338 = vmatpush.msra.mxu0 %v1337
    %v1339 = vand.u32 %v296, 4294901760
    %v1340 = vsub.f32 %v296, %v1339
    %v1341 = vand.u32 %v1340, 4294901760
    %1342 = vmatpush.msra.mxu0 %v1341
    %v1343 = vand.u32 %v294, 4294901760
    %v1344 = vsub.f32 %v294, %v1343
    %v1345 = vand.u32 %v1344, 4294901760
    %1346 = vmatpush.msra.mxu0 %v1345
    %v1347 = vand.u32 %v292, 4294901760
    %v1348 = vsub.f32 %v292, %v1347
    %v1349 = vand.u32 %v1348, 4294901760
    %1350 = vmatpush.msra.mxu0 %v1349
    %v1351 = vand.u32 %v290, 4294901760
    %v1352 = vsub.f32 %v290, %v1351
    %v1353 = vand.u32 %v1352, 4294901760
    %1354 = vmatpush.msra.mxu0 %v1353
    %v1355 = vand.u32 %v288, 4294901760
    %v1356 = vsub.f32 %v288, %v1355
    %v1357 = vand.u32 %v1356, 4294901760
    %1358 = vmatpush.msra.mxu0 %v1357
    %v1359 = vand.u32 %v312, 4294901760
    %1360 = vmatmul.f32.gmra.mxu0 %v1359
    %v1361 = vpop.f32.mrf.mxu0
    %v1362 = vadd.f32 %v1122, %v1361
    %v1363 = vand.u32 %v315, 4294901760
    %1364 = vmatmul.f32.gmra.mxu0 %v1363
    %v1365 = vpop.f32.mrf.mxu0
    %v1366 = vadd.f32 %v1128, %v1365
    %v1367 = vand.u32 %v318, 4294901760
    %1368 = vmatmul.f32.gmra.mxu0 %v1367
    %v1369 = vpop.f32.mrf.mxu0
    %v1370 = vadd.f32 %v1134, %v1369
    %v1371 = vand.u32 %v321, 4294901760
    %1372 = vmatmul.f32.gmra.mxu0 %v1371
    %v1373 = vpop.f32.mrf.mxu0
    %v1374 = vadd.f32 %v1140, %v1373
    %v1375 = vand.u32 %v324, 4294901760
    %1376 = vmatmul.f32.gmra.mxu0 %v1375
    %v1377 = vpop.f32.mrf.mxu0
    %v1378 = vadd.f32 %v1146, %v1377
    %v1379 = vand.u32 %v327, 4294901760
    %1380 = vmatmul.f32.gmra.mxu0 %v1379
    %v1381 = vpop.f32.mrf.mxu0
    %v1382 = vadd.f32 %v1152, %v1381
    %v1383 = vand.u32 %v330, 4294901760
    %1384 = vmatmul.f32.gmra.mxu0 %v1383
    %v1385 = vpop.f32.mrf.mxu0
    %v1386 = vadd.f32 %v1158, %v1385
    %v1387 = vand.u32 %v333, 4294901760
    %1388 = vmatmul.f32.gmra.mxu0 %v1387
    %v1389 = vpop.f32.mrf.mxu0
    %v1390 = vadd.f32 %v1164, %v1389
    %v1391 = vand.u32 %v336, 4294901760
    %1392 = vmatmul.f32.gmra.mxu0 %v1391
    %v1393 = vpop.f32.mrf.mxu0
    %v1394 = vadd.f32 %v1170, %v1393
    %v1395 = vand.u32 %v339, 4294901760
    %1396 = vmatmul.f32.gmra.mxu0 %v1395
    %v1397 = vpop.f32.mrf.mxu0
    %v1398 = vadd.f32 %v1176, %v1397
    %v1399 = vand.u32 %v342, 4294901760
    %1400 = vmatmul.f32.gmra.mxu0 %v1399
    %v1401 = vpop.f32.mrf.mxu0
    %v1402 = vadd.f32 %v1182, %v1401
    %v1403 = vand.u32 %v345, 4294901760
    %1404 = vmatmul.f32.gmra.mxu0 %v1403
    %v1405 = vpop.f32.mrf.mxu0
    %v1406 = vadd.f32 %v1188, %v1405
    %v1407 = vand.u32 %v348, 4294901760
    %1408 = vmatmul.f32.gmra.mxu0 %v1407
    %v1409 = vpop.f32.mrf.mxu0
    %v1410 = vadd.f32 %v1194, %v1409
    %v1411 = vand.u32 %v351, 4294901760
    %1412 = vmatmul.f32.gmra.mxu0 %v1411
    %v1413 = vpop.f32.mrf.mxu0
    %v1414 = vadd.f32 %v1200, %v1413
    %v1415 = vand.u32 %v354, 4294901760
    %1416 = vmatmul.f32.gmra.mxu0 %v1415
    %v1417 = vpop.f32.mrf.mxu0
    %v1418 = vadd.f32 %v1206, %v1417
    %v1419 = vand.u32 %v357, 4294901760
    %1420 = vmatmul.f32.gmra.mxu0 %v1419
    %v1421 = vpop.f32.mrf.mxu0
    %v1422 = vadd.f32 %v1212, %v1421
    %v1423 = vand.u32 %v360, 4294901760
    %1424 = vmatmul.f32.gmra.mxu0 %v1423
    %v1425 = vpop.f32.mrf.mxu0
    %v1426 = vadd.f32 %v1218, %v1425
    %v1427 = vand.u32 %v363, 4294901760
    %1428 = vmatmul.f32.gmra.mxu0 %v1427
    %v1429 = vpop.f32.mrf.mxu0
    %v1430 = vadd.f32 %v1224, %v1429
    %v1431 = vand.u32 %v366, 4294901760
    %1432 = vmatmul.f32.gmra.mxu0 %v1431
    %v1433 = vpop.f32.mrf.mxu0
    %v1434 = vadd.f32 %v1230, %v1433
    %v1435 = vand.u32 %v369, 4294901760
    %1436 = vmatmul.f32.gmra.mxu0 %v1435
    %v1437 = vpop.f32.mrf.mxu0
    %v1438 = vadd.f32 %v1236, %v1437
    %v1439 = vand.u32 %v372, 4294901760
    %1440 = vmatmul.f32.gmra.mxu0 %v1439
    %v1441 = vpop.f32.mrf.mxu0
    %v1442 = vadd.f32 %v1242, %v1441
    %v1443 = vand.u32 %v375, 4294901760
    %1444 = vmatmul.f32.gmra.mxu0 %v1443
    %v1445 = vpop.f32.mrf.mxu0
    %v1446 = vadd.f32 %v1248, %v1445
    %v1447 = vand.u32 %v378, 4294901760
    %1448 = vmatmul.f32.gmra.mxu0 %v1447
    %v1449 = vpop.f32.mrf.mxu0
    %v1450 = vadd.f32 %v1254, %v1449
    %v1451 = vand.u32 %v381, 4294901760
    %1452 = vmatmul.f32.gmra.mxu0 %v1451
    %v1453 = vpop.f32.mrf.mxu0
    %v1454 = vadd.f32 %v1260, %v1453
    %v1455 = vand.u32 %v384, 4294901760
    %1456 = vmatmul.f32.gmra.mxu0 %v1455
    %v1457 = vpop.f32.mrf.mxu0
    %v1458 = vadd.f32 %v1266, %v1457
    %v1459 = vand.u32 %v387, 4294901760
    %1460 = vmatmul.f32.gmra.mxu0 %v1459
    %v1461 = vpop.f32.mrf.mxu0
    %v1462 = vadd.f32 %v1272, %v1461
    %v1463 = vand.u32 %v390, 4294901760
    %1464 = vmatmul.f32.gmra.mxu0 %v1463
    %v1465 = vpop.f32.mrf.mxu0
    %v1466 = vadd.f32 %v1278, %v1465
    %v1467 = vand.u32 %v393, 4294901760
    %1468 = vmatmul.f32.gmra.mxu0 %v1467
    %v1469 = vpop.f32.mrf.mxu0
    %v1470 = vadd.f32 %v1284, %v1469
    %v1471 = vand.u32 %v396, 4294901760
    %1472 = vmatmul.f32.gmra.mxu0 %v1471
    %v1473 = vpop.f32.mrf.mxu0
    %v1474 = vadd.f32 %v1290, %v1473
    %v1475 = vand.u32 %v399, 4294901760
    %1476 = vmatmul.f32.gmra.mxu0 %v1475
    %v1477 = vpop.f32.mrf.mxu0
    %v1478 = vadd.f32 %v1296, %v1477
    %v1479 = vand.u32 %v402, 4294901760
    %1480 = vmatmul.f32.gmra.mxu0 %v1479
    %v1481 = vpop.f32.mrf.mxu0
    %v1482 = vadd.f32 %v1302, %v1481
    %v1483 = vand.u32 %v405, 4294901760
    %1484 = vmatmul.f32.gmra.mxu0 %v1483
    %v1485 = vpop.f32.mrf.mxu0
    %v1486 = vadd.f32 %v1308, %v1485
    %1487 = vdwg.mxu0
    %1488 = vmatpush.msra.mxu0 0.0
    %1489 = vmatpush.msra.mxu0 0.0
    %1490 = vmatpush.msra.mxu0 0.0
    %1491 = vmatpush.msra.mxu0 0.0
    %1492 = vmatpush.msra.mxu0 0.0
    %v1493 = vand.u32 %v308, 4294901760
    %1494 = vmatpush.msra.mxu0 %v1493
    %v1495 = vand.u32 %v306, 4294901760
    %1496 = vmatpush.msra.mxu0 %v1495
    %v1497 = vand.u32 %v304, 4294901760
    %1498 = vmatpush.msra.mxu0 %v1497
    %v1499 = vand.u32 %v302, 4294901760
    %1500 = vmatpush.msra.mxu0 %v1499
    %v1501 = vand.u32 %v300, 4294901760
    %1502 = vmatpush.msra.mxu0 %v1501
    %v1503 = vand.u32 %v298, 4294901760
    %1504 = vmatpush.msra.mxu0 %v1503
    %v1505 = vand.u32 %v296, 4294901760
    %1506 = vmatpush.msra.mxu0 %v1505
    %v1507 = vand.u32 %v294, 4294901760
    %1508 = vmatpush.msra.mxu0 %v1507
    %v1509 = vand.u32 %v292, 4294901760
    %1510 = vmatpush.msra.mxu0 %v1509
    %v1511 = vand.u32 %v290, 4294901760
    %1512 = vmatpush.msra.mxu0 %v1511
    %v1513 = vand.u32 %v288, 4294901760
    %1514 = vmatpush.msra.mxu0 %v1513
    %v1515 = vand.u32 %v312, 4294901760
    %1516 = vmatmul.f32.gmra.mxu0 %v1515
    %v1517 = vpop.f32.mrf.mxu0
    %v1518 = vadd.f32 %v1362, %v1517
    %v1519 = vand.u32 %v315, 4294901760
    %1520 = vmatmul.f32.gmra.mxu0 %v1519
    %v1521 = vpop.f32.mrf.mxu0
    %v1522 = vadd.f32 %v1366, %v1521
    %v1523 = vand.u32 %v318, 4294901760
    %1524 = vmatmul.f32.gmra.mxu0 %v1523
    %v1525 = vpop.f32.mrf.mxu0
    %v1526 = vadd.f32 %v1370, %v1525
    %v1527 = vand.u32 %v321, 4294901760
    %1528 = vmatmul.f32.gmra.mxu0 %v1527
    %v1529 = vpop.f32.mrf.mxu0
    %v1530 = vadd.f32 %v1374, %v1529
    %v1531 = vand.u32 %v324, 4294901760
    %1532 = vmatmul.f32.gmra.mxu0 %v1531
    %v1533 = vpop.f32.mrf.mxu0
    %v1534 = vadd.f32 %v1378, %v1533
    %v1535 = vand.u32 %v327, 4294901760
    %1536 = vmatmul.f32.gmra.mxu0 %v1535
    %v1537 = vpop.f32.mrf.mxu0
    %v1538 = vadd.f32 %v1382, %v1537
    %v1539 = vand.u32 %v330, 4294901760
    %1540 = vmatmul.f32.gmra.mxu0 %v1539
    %v1541 = vpop.f32.mrf.mxu0
    %v1542 = vadd.f32 %v1386, %v1541
    %v1543 = vand.u32 %v333, 4294901760
    %1544 = vmatmul.f32.gmra.mxu0 %v1543
    %v1545 = vpop.f32.mrf.mxu0
    %v1546 = vadd.f32 %v1390, %v1545
    %v1547 = vand.u32 %v336, 4294901760
    %1548 = vmatmul.f32.gmra.mxu0 %v1547
    %v1549 = vpop.f32.mrf.mxu0
    %v1550 = vadd.f32 %v1394, %v1549
    %v1551 = vand.u32 %v339, 4294901760
    %1552 = vmatmul.f32.gmra.mxu0 %v1551
    %v1553 = vpop.f32.mrf.mxu0
    %v1554 = vadd.f32 %v1398, %v1553
    %v1555 = vand.u32 %v342, 4294901760
    %1556 = vmatmul.f32.gmra.mxu0 %v1555
    %v1557 = vpop.f32.mrf.mxu0
    %v1558 = vadd.f32 %v1402, %v1557
    %v1559 = vand.u32 %v345, 4294901760
    %1560 = vmatmul.f32.gmra.mxu0 %v1559
    %v1561 = vpop.f32.mrf.mxu0
    %v1562 = vadd.f32 %v1406, %v1561
    %v1563 = vand.u32 %v348, 4294901760
    %1564 = vmatmul.f32.gmra.mxu0 %v1563
    %v1565 = vpop.f32.mrf.mxu0
    %v1566 = vadd.f32 %v1410, %v1565
    %v1567 = vand.u32 %v351, 4294901760
    %1568 = vmatmul.f32.gmra.mxu0 %v1567
    %v1569 = vpop.f32.mrf.mxu0
    %v1570 = vadd.f32 %v1414, %v1569
    %v1571 = vand.u32 %v354, 4294901760
    %1572 = vmatmul.f32.gmra.mxu0 %v1571
    %v1573 = vpop.f32.mrf.mxu0
    %v1574 = vadd.f32 %v1418, %v1573
    %v1575 = vand.u32 %v357, 4294901760
    %1576 = vmatmul.f32.gmra.mxu0 %v1575
    %v1577 = vpop.f32.mrf.mxu0
    %v1578 = vadd.f32 %v1422, %v1577
    %v1579 = vand.u32 %v360, 4294901760
    %1580 = vmatmul.f32.gmra.mxu0 %v1579
    %v1581 = vpop.f32.mrf.mxu0
    %v1582 = vadd.f32 %v1426, %v1581
    %v1583 = vand.u32 %v363, 4294901760
    %1584 = vmatmul.f32.gmra.mxu0 %v1583
    %v1585 = vpop.f32.mrf.mxu0
    %v1586 = vadd.f32 %v1430, %v1585
    %v1587 = vand.u32 %v366, 4294901760
    %1588 = vmatmul.f32.gmra.mxu0 %v1587
    %v1589 = vpop.f32.mrf.mxu0
    %v1590 = vadd.f32 %v1434, %v1589
    %v1591 = vand.u32 %v369, 4294901760
    %1592 = vmatmul.f32.gmra.mxu0 %v1591
    %v1593 = vpop.f32.mrf.mxu0
    %v1594 = vadd.f32 %v1438, %v1593
    %v1595 = vand.u32 %v372, 4294901760
    %1596 = vmatmul.f32.gmra.mxu0 %v1595
    %v1597 = vpop.f32.mrf.mxu0
    %v1598 = vadd.f32 %v1442, %v1597
    %v1599 = vand.u32 %v375, 4294901760
    %1600 = vmatmul.f32.gmra.mxu0 %v1599
    %v1601 = vpop.f32.mrf.mxu0
    %v1602 = vadd.f32 %v1446, %v1601
    %v1603 = vand.u32 %v378, 4294901760
    %1604 = vmatmul.f32.gmra.mxu0 %v1603
    %v1605 = vpop.f32.mrf.mxu0
    %v1606 = vadd.f32 %v1450, %v1605
    %v1607 = vand.u32 %v381, 4294901760
    %1608 = vmatmul.f32.gmra.mxu0 %v1607
    %v1609 = vpop.f32.mrf.mxu0
    %v1610 = vadd.f32 %v1454, %v1609
    %v1611 = vand.u32 %v384, 4294901760
    %1612 = vmatmul.f32.gmra.mxu0 %v1611
    %v1613 = vpop.f32.mrf.mxu0
    %v1614 = vadd.f32 %v1458, %v1613
    %v1615 = vand.u32 %v387, 4294901760
    %1616 = vmatmul.f32.gmra.mxu0 %v1615
    %v1617 = vpop.f32.mrf.mxu0
    %v1618 = vadd.f32 %v1462, %v1617
    %v1619 = vand.u32 %v390, 4294901760
    %1620 = vmatmul.f32.gmra.mxu0 %v1619
    %v1621 = vpop.f32.mrf.mxu0
    %v1622 = vadd.f32 %v1466, %v1621
    %v1623 = vand.u32 %v393, 4294901760
    %1624 = vmatmul.f32.gmra.mxu0 %v1623
    %v1625 = vpop.f32.mrf.mxu0
    %v1626 = vadd.f32 %v1470, %v1625
    %v1627 = vand.u32 %v396, 4294901760
    %1628 = vmatmul.f32.gmra.mxu0 %v1627
    %v1629 = vpop.f32.mrf.mxu0
    %v1630 = vadd.f32 %v1474, %v1629
    %v1631 = vand.u32 %v399, 4294901760
    %1632 = vmatmul.f32.gmra.mxu0 %v1631
    %v1633 = vpop.f32.mrf.mxu0
    %v1634 = vadd.f32 %v1478, %v1633
    %v1635 = vand.u32 %v402, 4294901760
    %1636 = vmatmul.f32.gmra.mxu0 %v1635
    %v1637 = vpop.f32.mrf.mxu0
    %v1638 = vadd.f32 %v1482, %v1637
    %v1639 = vand.u32 %v405, 4294901760
    %1640 = vmatmul.f32.gmra.mxu0 %v1639
    %v1641 = vpop.f32.mrf.mxu0
    %v1642 = vadd.f32 %v1486, %v1641
    %1643 = vdwg.mxu0
    %1644 = vmatpush.msra.mxu0 0.0
    %1645 = vmatpush.msra.mxu0 0.0
    %1646 = vmatpush.msra.mxu0 0.0
    %1647 = vmatpush.msra.mxu0 0.0
    %1648 = vmatpush.msra.mxu0 0.0
    %v1649 = vand.u32 %v309, 4294901760
    %1650 = vmatpush.msra.mxu0 %v1649
    %v1651 = vand.u32 %v307, 4294901760
    %1652 = vmatpush.msra.mxu0 %v1651
    %v1653 = vand.u32 %v305, 4294901760
    %1654 = vmatpush.msra.mxu0 %v1653
    %v1655 = vand.u32 %v303, 4294901760
    %1656 = vmatpush.msra.mxu0 %v1655
    %v1657 = vand.u32 %v301, 4294901760
    %1658 = vmatpush.msra.mxu0 %v1657
    %v1659 = vand.u32 %v299, 4294901760
    %1660 = vmatpush.msra.mxu0 %v1659
    %v1661 = vand.u32 %v297, 4294901760
    %1662 = vmatpush.msra.mxu0 %v1661
    %v1663 = vand.u32 %v295, 4294901760
    %1664 = vmatpush.msra.mxu0 %v1663
    %v1665 = vand.u32 %v293, 4294901760
    %1666 = vmatpush.msra.mxu0 %v1665
    %v1667 = vand.u32 %v291, 4294901760
    %1668 = vmatpush.msra.mxu0 %v1667
    %v1669 = vand.u32 %v289, 4294901760
    %1670 = vmatpush.msra.mxu0 %v1669
    %v1671 = vand.u32 %v312, 4294901760
    %v1672 = vsub.f32 %v312, %v1671
    %v1673 = vand.u32 %v1672, 4294901760
    %v1674 = vsub.f32 %v1672, %v1673
    %v1675 = vand.u32 %v1674, 4294901760
    %1676 = vmatmul.f32.gmra.mxu0 %v1675
    %v1677 = vpop.f32.mrf.mxu0
    %v1678 = vadd.f32 0.0, %v1677
    %v1679 = vand.u32 %v315, 4294901760
    %v1680 = vsub.f32 %v315, %v1679
    %v1681 = vand.u32 %v1680, 4294901760
    %v1682 = vsub.f32 %v1680, %v1681
    %v1683 = vand.u32 %v1682, 4294901760
    %1684 = vmatmul.f32.gmra.mxu0 %v1683
    %v1685 = vpop.f32.mrf.mxu0
    %v1686 = vadd.f32 0.0, %v1685
    %v1687 = vand.u32 %v318, 4294901760
    %v1688 = vsub.f32 %v318, %v1687
    %v1689 = vand.u32 %v1688, 4294901760
    %v1690 = vsub.f32 %v1688, %v1689
    %v1691 = vand.u32 %v1690, 4294901760
    %1692 = vmatmul.f32.gmra.mxu0 %v1691
    %v1693 = vpop.f32.mrf.mxu0
    %v1694 = vadd.f32 0.0, %v1693
    %v1695 = vand.u32 %v321, 4294901760
    %v1696 = vsub.f32 %v321, %v1695
    %v1697 = vand.u32 %v1696, 4294901760
    %v1698 = vsub.f32 %v1696, %v1697
    %v1699 = vand.u32 %v1698, 4294901760
    %1700 = vmatmul.f32.gmra.mxu0 %v1699
    %v1701 = vpop.f32.mrf.mxu0
    %v1702 = vadd.f32 0.0, %v1701
    %v1703 = vand.u32 %v324, 4294901760
    %v1704 = vsub.f32 %v324, %v1703
    %v1705 = vand.u32 %v1704, 4294901760
    %v1706 = vsub.f32 %v1704, %v1705
    %v1707 = vand.u32 %v1706, 4294901760
    %1708 = vmatmul.f32.gmra.mxu0 %v1707
    %v1709 = vpop.f32.mrf.mxu0
    %v1710 = vadd.f32 0.0, %v1709
    %v1711 = vand.u32 %v327, 4294901760
    %v1712 = vsub.f32 %v327, %v1711
    %v1713 = vand.u32 %v1712, 4294901760
    %v1714 = vsub.f32 %v1712, %v1713
    %v1715 = vand.u32 %v1714, 4294901760
    %1716 = vmatmul.f32.gmra.mxu0 %v1715
    %v1717 = vpop.f32.mrf.mxu0
    %v1718 = vadd.f32 0.0, %v1717
    %v1719 = vand.u32 %v330, 4294901760
    %v1720 = vsub.f32 %v330, %v1719
    %v1721 = vand.u32 %v1720, 4294901760
    %v1722 = vsub.f32 %v1720, %v1721
    %v1723 = vand.u32 %v1722, 4294901760
    %1724 = vmatmul.f32.gmra.mxu0 %v1723
    %v1725 = vpop.f32.mrf.mxu0
    %v1726 = vadd.f32 0.0, %v1725
    %v1727 = vand.u32 %v333, 4294901760
    %v1728 = vsub.f32 %v333, %v1727
    %v1729 = vand.u32 %v1728, 4294901760
    %v1730 = vsub.f32 %v1728, %v1729
    %v1731 = vand.u32 %v1730, 4294901760
    %1732 = vmatmul.f32.gmra.mxu0 %v1731
    %v1733 = vpop.f32.mrf.mxu0
    %v1734 = vadd.f32 0.0, %v1733
    %v1735 = vand.u32 %v336, 4294901760
    %v1736 = vsub.f32 %v336, %v1735
    %v1737 = vand.u32 %v1736, 4294901760
    %v1738 = vsub.f32 %v1736, %v1737
    %v1739 = vand.u32 %v1738, 4294901760
    %1740 = vmatmul.f32.gmra.mxu0 %v1739
    %v1741 = vpop.f32.mrf.mxu0
    %v1742 = vadd.f32 0.0, %v1741
    %v1743 = vand.u32 %v339, 4294901760
    %v1744 = vsub.f32 %v339, %v1743
    %v1745 = vand.u32 %v1744, 4294901760
    %v1746 = vsub.f32 %v1744, %v1745
    %v1747 = vand.u32 %v1746, 4294901760
    %1748 = vmatmul.f32.gmra.mxu0 %v1747
    %v1749 = vpop.f32.mrf.mxu0
    %v1750 = vadd.f32 0.0, %v1749
    %v1751 = vand.u32 %v342, 4294901760
    %v1752 = vsub.f32 %v342, %v1751
    %v1753 = vand.u32 %v1752, 4294901760
    %v1754 = vsub.f32 %v1752, %v1753
    %v1755 = vand.u32 %v1754, 4294901760
    %1756 = vmatmul.f32.gmra.mxu0 %v1755
    %v1757 = vpop.f32.mrf.mxu0
    %v1758 = vadd.f32 0.0, %v1757
    %v1759 = vand.u32 %v345, 4294901760
    %v1760 = vsub.f32 %v345, %v1759
    %v1761 = vand.u32 %v1760, 4294901760
    %v1762 = vsub.f32 %v1760, %v1761
    %v1763 = vand.u32 %v1762, 4294901760
    %1764 = vmatmul.f32.gmra.mxu0 %v1763
    %v1765 = vpop.f32.mrf.mxu0
    %v1766 = vadd.f32 0.0, %v1765
    %v1767 = vand.u32 %v348, 4294901760
    %v1768 = vsub.f32 %v348, %v1767
    %v1769 = vand.u32 %v1768, 4294901760
    %v1770 = vsub.f32 %v1768, %v1769
    %v1771 = vand.u32 %v1770, 4294901760
    %1772 = vmatmul.f32.gmra.mxu0 %v1771
    %v1773 = vpop.f32.mrf.mxu0
    %v1774 = vadd.f32 0.0, %v1773
    %v1775 = vand.u32 %v351, 4294901760
    %v1776 = vsub.f32 %v351, %v1775
    %v1777 = vand.u32 %v1776, 4294901760
    %v1778 = vsub.f32 %v1776, %v1777
    %v1779 = vand.u32 %v1778, 4294901760
    %1780 = vmatmul.f32.gmra.mxu0 %v1779
    %v1781 = vpop.f32.mrf.mxu0
    %v1782 = vadd.f32 0.0, %v1781
    %v1783 = vand.u32 %v354, 4294901760
    %v1784 = vsub.f32 %v354, %v1783
    %v1785 = vand.u32 %v1784, 4294901760
    %v1786 = vsub.f32 %v1784, %v1785
    %v1787 = vand.u32 %v1786, 4294901760
    %1788 = vmatmul.f32.gmra.mxu0 %v1787
    %v1789 = vpop.f32.mrf.mxu0
    %v1790 = vadd.f32 0.0, %v1789
    %v1791 = vand.u32 %v357, 4294901760
    %v1792 = vsub.f32 %v357, %v1791
    %v1793 = vand.u32 %v1792, 4294901760
    %v1794 = vsub.f32 %v1792, %v1793
    %v1795 = vand.u32 %v1794, 4294901760
    %1796 = vmatmul.f32.gmra.mxu0 %v1795
    %v1797 = vpop.f32.mrf.mxu0
    %v1798 = vadd.f32 0.0, %v1797
    %v1799 = vand.u32 %v360, 4294901760
    %v1800 = vsub.f32 %v360, %v1799
    %v1801 = vand.u32 %v1800, 4294901760
    %v1802 = vsub.f32 %v1800, %v1801
    %v1803 = vand.u32 %v1802, 4294901760
    %1804 = vmatmul.f32.gmra.mxu0 %v1803
    %v1805 = vpop.f32.mrf.mxu0
    %v1806 = vadd.f32 0.0, %v1805
    %v1807 = vand.u32 %v363, 4294901760
    %v1808 = vsub.f32 %v363, %v1807
    %v1809 = vand.u32 %v1808, 4294901760
    %v1810 = vsub.f32 %v1808, %v1809
    %v1811 = vand.u32 %v1810, 4294901760
    %1812 = vmatmul.f32.gmra.mxu0 %v1811
    %v1813 = vpop.f32.mrf.mxu0
    %v1814 = vadd.f32 0.0, %v1813
    %v1815 = vand.u32 %v366, 4294901760
    %v1816 = vsub.f32 %v366, %v1815
    %v1817 = vand.u32 %v1816, 4294901760
    %v1818 = vsub.f32 %v1816, %v1817
    %v1819 = vand.u32 %v1818, 4294901760
    %1820 = vmatmul.f32.gmra.mxu0 %v1819
    %v1821 = vpop.f32.mrf.mxu0
    %v1822 = vadd.f32 0.0, %v1821
    %v1823 = vand.u32 %v369, 4294901760
    %v1824 = vsub.f32 %v369, %v1823
    %v1825 = vand.u32 %v1824, 4294901760
    %v1826 = vsub.f32 %v1824, %v1825
    %v1827 = vand.u32 %v1826, 4294901760
    %1828 = vmatmul.f32.gmra.mxu0 %v1827
    %v1829 = vpop.f32.mrf.mxu0
    %v1830 = vadd.f32 0.0, %v1829
    %v1831 = vand.u32 %v372, 4294901760
    %v1832 = vsub.f32 %v372, %v1831
    %v1833 = vand.u32 %v1832, 4294901760
    %v1834 = vsub.f32 %v1832, %v1833
    %v1835 = vand.u32 %v1834, 4294901760
    %1836 = vmatmul.f32.gmra.mxu0 %v1835
    %v1837 = vpop.f32.mrf.mxu0
    %v1838 = vadd.f32 0.0, %v1837
    %v1839 = vand.u32 %v375, 4294901760
    %v1840 = vsub.f32 %v375, %v1839
    %v1841 = vand.u32 %v1840, 4294901760
    %v1842 = vsub.f32 %v1840, %v1841
    %v1843 = vand.u32 %v1842, 4294901760
    %1844 = vmatmul.f32.gmra.mxu0 %v1843
    %v1845 = vpop.f32.mrf.mxu0
    %v1846 = vadd.f32 0.0, %v1845
    %v1847 = vand.u32 %v378, 4294901760
    %v1848 = vsub.f32 %v378, %v1847
    %v1849 = vand.u32 %v1848, 4294901760
    %v1850 = vsub.f32 %v1848, %v1849
    %v1851 = vand.u32 %v1850, 4294901760
    %1852 = vmatmul.f32.gmra.mxu0 %v1851
    %v1853 = vpop.f32.mrf.mxu0
    %v1854 = vadd.f32 0.0, %v1853
    %v1855 = vand.u32 %v381, 4294901760
    %v1856 = vsub.f32 %v381, %v1855
    %v1857 = vand.u32 %v1856, 4294901760
    %v1858 = vsub.f32 %v1856, %v1857
    %v1859 = vand.u32 %v1858, 4294901760
    %1860 = vmatmul.f32.gmra.mxu0 %v1859
    %v1861 = vpop.f32.mrf.mxu0
    %v1862 = vadd.f32 0.0, %v1861
    %v1863 = vand.u32 %v384, 4294901760
    %v1864 = vsub.f32 %v384, %v1863
    %v1865 = vand.u32 %v1864, 4294901760
    %v1866 = vsub.f32 %v1864, %v1865
    %v1867 = vand.u32 %v1866, 4294901760
    %1868 = vmatmul.f32.gmra.mxu0 %v1867
    %v1869 = vpop.f32.mrf.mxu0
    %v1870 = vadd.f32 0.0, %v1869
    %v1871 = vand.u32 %v387, 4294901760
    %v1872 = vsub.f32 %v387, %v1871
    %v1873 = vand.u32 %v1872, 4294901760
    %v1874 = vsub.f32 %v1872, %v1873
    %v1875 = vand.u32 %v1874, 4294901760
    %1876 = vmatmul.f32.gmra.mxu0 %v1875
    %v1877 = vpop.f32.mrf.mxu0
    %v1878 = vadd.f32 0.0, %v1877
    %v1879 = vand.u32 %v390, 4294901760
    %v1880 = vsub.f32 %v390, %v1879
    %v1881 = vand.u32 %v1880, 4294901760
    %v1882 = vsub.f32 %v1880, %v1881
    %v1883 = vand.u32 %v1882, 4294901760
    %1884 = vmatmul.f32.gmra.mxu0 %v1883
    %v1885 = vpop.f32.mrf.mxu0
    %v1886 = vadd.f32 0.0, %v1885
    %v1887 = vand.u32 %v393, 4294901760
    %v1888 = vsub.f32 %v393, %v1887
    %v1889 = vand.u32 %v1888, 4294901760
    %v1890 = vsub.f32 %v1888, %v1889
    %v1891 = vand.u32 %v1890, 4294901760
    %1892 = vmatmul.f32.gmra.mxu0 %v1891
    %v1893 = vpop.f32.mrf.mxu0
    %v1894 = vadd.f32 0.0, %v1893
    %v1895 = vand.u32 %v396, 4294901760
    %v1896 = vsub.f32 %v396, %v1895
    %v1897 = vand.u32 %v1896, 4294901760
    %v1898 = vsub.f32 %v1896, %v1897
    %v1899 = vand.u32 %v1898, 4294901760
    %1900 = vmatmul.f32.gmra.mxu0 %v1899
    %v1901 = vpop.f32.mrf.mxu0
    %v1902 = vadd.f32 0.0, %v1901
    %v1903 = vand.u32 %v399, 4294901760
    %v1904 = vsub.f32 %v399, %v1903
    %v1905 = vand.u32 %v1904, 4294901760
    %v1906 = vsub.f32 %v1904, %v1905
    %v1907 = vand.u32 %v1906, 4294901760
    %1908 = vmatmul.f32.gmra.mxu0 %v1907
    %v1909 = vpop.f32.mrf.mxu0
    %v1910 = vadd.f32 0.0, %v1909
    %v1911 = vand.u32 %v402, 4294901760
    %v1912 = vsub.f32 %v402, %v1911
    %v1913 = vand.u32 %v1912, 4294901760
    %v1914 = vsub.f32 %v1912, %v1913
    %v1915 = vand.u32 %v1914, 4294901760
    %1916 = vmatmul.f32.gmra.mxu0 %v1915
    %v1917 = vpop.f32.mrf.mxu0
    %v1918 = vadd.f32 0.0, %v1917
    %v1919 = vand.u32 %v405, 4294901760
    %v1920 = vsub.f32 %v405, %v1919
    %v1921 = vand.u32 %v1920, 4294901760
    %v1922 = vsub.f32 %v1920, %v1921
    %v1923 = vand.u32 %v1922, 4294901760
    %1924 = vmatmul.f32.gmra.mxu0 %v1923
    %v1925 = vpop.f32.mrf.mxu0
    %v1926 = vadd.f32 0.0, %v1925
    %1927 = vdwg.mxu0
    %1928 = vmatpush.msra.mxu0 0.0
    %1929 = vmatpush.msra.mxu0 0.0
    %1930 = vmatpush.msra.mxu0 0.0
    %1931 = vmatpush.msra.mxu0 0.0
    %1932 = vmatpush.msra.mxu0 0.0
    %v1933 = vand.u32 %v309, 4294901760
    %v1934 = vsub.f32 %v309, %v1933
    %v1935 = vand.u32 %v1934, 4294901760
    %v1936 = vsub.f32 %v1934, %v1935
    %v1937 = vand.u32 %v1936, 4294901760
    %1938 = vmatpush.msra.mxu0 %v1937
    %v1939 = vand.u32 %v307, 4294901760
    %v1940 = vsub.f32 %v307, %v1939
    %v1941 = vand.u32 %v1940, 4294901760
    %v1942 = vsub.f32 %v1940, %v1941
    %v1943 = vand.u32 %v1942, 4294901760
    %1944 = vmatpush.msra.mxu0 %v1943
    %v1945 = vand.u32 %v305, 4294901760
    %v1946 = vsub.f32 %v305, %v1945
    %v1947 = vand.u32 %v1946, 4294901760
    %v1948 = vsub.f32 %v1946, %v1947
    %v1949 = vand.u32 %v1948, 4294901760
    %1950 = vmatpush.msra.mxu0 %v1949
    %v1951 = vand.u32 %v303, 4294901760
    %v1952 = vsub.f32 %v303, %v1951
    %v1953 = vand.u32 %v1952, 4294901760
    %v1954 = vsub.f32 %v1952, %v1953
    %v1955 = vand.u32 %v1954, 4294901760
    %1956 = vmatpush.msra.mxu0 %v1955
    %v1957 = vand.u32 %v301, 4294901760
    %v1958 = vsub.f32 %v301, %v1957
    %v1959 = vand.u32 %v1958, 4294901760
    %v1960 = vsub.f32 %v1958, %v1959
    %v1961 = vand.u32 %v1960, 4294901760
    %1962 = vmatpush.msra.mxu0 %v1961
    %v1963 = vand.u32 %v299, 4294901760
    %v1964 = vsub.f32 %v299, %v1963
    %v1965 = vand.u32 %v1964, 4294901760
    %v1966 = vsub.f32 %v1964, %v1965
    %v1967 = vand.u32 %v1966, 4294901760
    %1968 = vmatpush.msra.mxu0 %v1967
    %v1969 = vand.u32 %v297, 4294901760
    %v1970 = vsub.f32 %v297, %v1969
    %v1971 = vand.u32 %v1970, 4294901760
    %v1972 = vsub.f32 %v1970, %v1971
    %v1973 = vand.u32 %v1972, 4294901760
    %1974 = vmatpush.msra.mxu0 %v1973
    %v1975 = vand.u32 %v295, 4294901760
    %v1976 = vsub.f32 %v295, %v1975
    %v1977 = vand.u32 %v1976, 4294901760
    %v1978 = vsub.f32 %v1976, %v1977
    %v1979 = vand.u32 %v1978, 4294901760
    %1980 = vmatpush.msra.mxu0 %v1979
    %v1981 = vand.u32 %v293, 4294901760
    %v1982 = vsub.f32 %v293, %v1981
    %v1983 = vand.u32 %v1982, 4294901760
    %v1984 = vsub.f32 %v1982, %v1983
    %v1985 = vand.u32 %v1984, 4294901760
    %1986 = vmatpush.msra.mxu0 %v1985
    %v1987 = vand.u32 %v291, 4294901760
    %v1988 = vsub.f32 %v291, %v1987
    %v1989 = vand.u32 %v1988, 4294901760
    %v1990 = vsub.f32 %v1988, %v1989
    %v1991 = vand.u32 %v1990, 4294901760
    %1992 = vmatpush.msra.mxu0 %v1991
    %v1993 = vand.u32 %v289, 4294901760
    %v1994 = vsub.f32 %v289, %v1993
    %v1995 = vand.u32 %v1994, 4294901760
    %v1996 = vsub.f32 %v1994, %v1995
    %v1997 = vand.u32 %v1996, 4294901760
    %1998 = vmatpush.msra.mxu0 %v1997
    %v1999 = vand.u32 %v312, 4294901760
    %2000 = vmatmul.f32.gmra.mxu0 %v1999
    %v2001 = vpop.f32.mrf.mxu0
    %v2002 = vadd.f32 %v1678, %v2001
    %v2003 = vand.u32 %v315, 4294901760
    %2004 = vmatmul.f32.gmra.mxu0 %v2003
    %v2005 = vpop.f32.mrf.mxu0
    %v2006 = vadd.f32 %v1686, %v2005
    %v2007 = vand.u32 %v318, 4294901760
    %2008 = vmatmul.f32.gmra.mxu0 %v2007
    %v2009 = vpop.f32.mrf.mxu0
    %v2010 = vadd.f32 %v1694, %v2009
    %v2011 = vand.u32 %v321, 4294901760
    %2012 = vmatmul.f32.gmra.mxu0 %v2011
    %v2013 = vpop.f32.mrf.mxu0
    %v2014 = vadd.f32 %v1702, %v2013
    %v2015 = vand.u32 %v324, 4294901760
    %2016 = vmatmul.f32.gmra.mxu0 %v2015
    %v2017 = vpop.f32.mrf.mxu0
    %v2018 = vadd.f32 %v1710, %v2017
    %v2019 = vand.u32 %v327, 4294901760
    %2020 = vmatmul.f32.gmra.mxu0 %v2019
    %v2021 = vpop.f32.mrf.mxu0
    %v2022 = vadd.f32 %v1718, %v2021
    %v2023 = vand.u32 %v330, 4294901760
    %2024 = vmatmul.f32.gmra.mxu0 %v2023
    %v2025 = vpop.f32.mrf.mxu0
    %v2026 = vadd.f32 %v1726, %v2025
    %v2027 = vand.u32 %v333, 4294901760
    %2028 = vmatmul.f32.gmra.mxu0 %v2027
    %v2029 = vpop.f32.mrf.mxu0
    %v2030 = vadd.f32 %v1734, %v2029
    %v2031 = vand.u32 %v336, 4294901760
    %2032 = vmatmul.f32.gmra.mxu0 %v2031
    %v2033 = vpop.f32.mrf.mxu0
    %v2034 = vadd.f32 %v1742, %v2033
    %v2035 = vand.u32 %v339, 4294901760
    %2036 = vmatmul.f32.gmra.mxu0 %v2035
    %v2037 = vpop.f32.mrf.mxu0
    %v2038 = vadd.f32 %v1750, %v2037
    %v2039 = vand.u32 %v342, 4294901760
    %2040 = vmatmul.f32.gmra.mxu0 %v2039
    %v2041 = vpop.f32.mrf.mxu0
    %v2042 = vadd.f32 %v1758, %v2041
    %v2043 = vand.u32 %v345, 4294901760
    %2044 = vmatmul.f32.gmra.mxu0 %v2043
    %v2045 = vpop.f32.mrf.mxu0
    %v2046 = vadd.f32 %v1766, %v2045
    %v2047 = vand.u32 %v348, 4294901760
    %2048 = vmatmul.f32.gmra.mxu0 %v2047
    %v2049 = vpop.f32.mrf.mxu0
    %v2050 = vadd.f32 %v1774, %v2049
    %v2051 = vand.u32 %v351, 4294901760
    %2052 = vmatmul.f32.gmra.mxu0 %v2051
    %v2053 = vpop.f32.mrf.mxu0
    %v2054 = vadd.f32 %v1782, %v2053
    %v2055 = vand.u32 %v354, 4294901760
    %2056 = vmatmul.f32.gmra.mxu0 %v2055
    %v2057 = vpop.f32.mrf.mxu0
    %v2058 = vadd.f32 %v1790, %v2057
    %v2059 = vand.u32 %v357, 4294901760
    %2060 = vmatmul.f32.gmra.mxu0 %v2059
    %v2061 = vpop.f32.mrf.mxu0
    %v2062 = vadd.f32 %v1798, %v2061
    %v2063 = vand.u32 %v360, 4294901760
    %2064 = vmatmul.f32.gmra.mxu0 %v2063
    %v2065 = vpop.f32.mrf.mxu0
    %v2066 = vadd.f32 %v1806, %v2065
    %v2067 = vand.u32 %v363, 4294901760
    %2068 = vmatmul.f32.gmra.mxu0 %v2067
    %v2069 = vpop.f32.mrf.mxu0
    %v2070 = vadd.f32 %v1814, %v2069
    %v2071 = vand.u32 %v366, 4294901760
    %2072 = vmatmul.f32.gmra.mxu0 %v2071
    %v2073 = vpop.f32.mrf.mxu0
    %v2074 = vadd.f32 %v1822, %v2073
    %v2075 = vand.u32 %v369, 4294901760
    %2076 = vmatmul.f32.gmra.mxu0 %v2075
    %v2077 = vpop.f32.mrf.mxu0
    %v2078 = vadd.f32 %v1830, %v2077
    %v2079 = vand.u32 %v372, 4294901760
    %2080 = vmatmul.f32.gmra.mxu0 %v2079
    %v2081 = vpop.f32.mrf.mxu0
    %v2082 = vadd.f32 %v1838, %v2081
    %v2083 = vand.u32 %v375, 4294901760
    %2084 = vmatmul.f32.gmra.mxu0 %v2083
    %v2085 = vpop.f32.mrf.mxu0
    %v2086 = vadd.f32 %v1846, %v2085
    %v2087 = vand.u32 %v378, 4294901760
    %2088 = vmatmul.f32.gmra.mxu0 %v2087
    %v2089 = vpop.f32.mrf.mxu0
    %v2090 = vadd.f32 %v1854, %v2089
    %v2091 = vand.u32 %v381, 4294901760
    %2092 = vmatmul.f32.gmra.mxu0 %v2091
    %v2093 = vpop.f32.mrf.mxu0
    %v2094 = vadd.f32 %v1862, %v2093
    %v2095 = vand.u32 %v384, 4294901760
    %2096 = vmatmul.f32.gmra.mxu0 %v2095
    %v2097 = vpop.f32.mrf.mxu0
    %v2098 = vadd.f32 %v1870, %v2097
    %v2099 = vand.u32 %v387, 4294901760
    %2100 = vmatmul.f32.gmra.mxu0 %v2099
    %v2101 = vpop.f32.mrf.mxu0
    %v2102 = vadd.f32 %v1878, %v2101
    %v2103 = vand.u32 %v390, 4294901760
    %2104 = vmatmul.f32.gmra.mxu0 %v2103
    %v2105 = vpop.f32.mrf.mxu0
    %v2106 = vadd.f32 %v1886, %v2105
    %v2107 = vand.u32 %v393, 4294901760
    %2108 = vmatmul.f32.gmra.mxu0 %v2107
    %v2109 = vpop.f32.mrf.mxu0
    %v2110 = vadd.f32 %v1894, %v2109
    %v2111 = vand.u32 %v396, 4294901760
    %2112 = vmatmul.f32.gmra.mxu0 %v2111
    %v2113 = vpop.f32.mrf.mxu0
    %v2114 = vadd.f32 %v1902, %v2113
    %v2115 = vand.u32 %v399, 4294901760
    %2116 = vmatmul.f32.gmra.mxu0 %v2115
    %v2117 = vpop.f32.mrf.mxu0
    %v2118 = vadd.f32 %v1910, %v2117
    %v2119 = vand.u32 %v402, 4294901760
    %2120 = vmatmul.f32.gmra.mxu0 %v2119
    %v2121 = vpop.f32.mrf.mxu0
    %v2122 = vadd.f32 %v1918, %v2121
    %v2123 = vand.u32 %v405, 4294901760
    %2124 = vmatmul.f32.gmra.mxu0 %v2123
    %v2125 = vpop.f32.mrf.mxu0
    %v2126 = vadd.f32 %v1926, %v2125
    %2127 = vdwg.mxu0
    %2128 = vmatpush.msra.mxu0 0.0
    %2129 = vmatpush.msra.mxu0 0.0
    %2130 = vmatpush.msra.mxu0 0.0
    %2131 = vmatpush.msra.mxu0 0.0
    %2132 = vmatpush.msra.mxu0 0.0
    %v2133 = vand.u32 %v309, 4294901760
    %v2134 = vsub.f32 %v309, %v2133
    %2135 = vmatpush.msra.mxu0 %v2134
    %v2136 = vand.u32 %v307, 4294901760
    %v2137 = vsub.f32 %v307, %v2136
    %2138 = vmatpush.msra.mxu0 %v2137
    %v2139 = vand.u32 %v305, 4294901760
    %v2140 = vsub.f32 %v305, %v2139
    %2141 = vmatpush.msra.mxu0 %v2140
    %v2142 = vand.u32 %v303, 4294901760
    %v2143 = vsub.f32 %v303, %v2142
    %2144 = vmatpush.msra.mxu0 %v2143
    %v2145 = vand.u32 %v301, 4294901760
    %v2146 = vsub.f32 %v301, %v2145
    %2147 = vmatpush.msra.mxu0 %v2146
    %v2148 = vand.u32 %v299, 4294901760
    %v2149 = vsub.f32 %v299, %v2148
    %2150 = vmatpush.msra.mxu0 %v2149
    %v2151 = vand.u32 %v297, 4294901760
    %v2152 = vsub.f32 %v297, %v2151
    %2153 = vmatpush.msra.mxu0 %v2152
    %v2154 = vand.u32 %v295, 4294901760
    %v2155 = vsub.f32 %v295, %v2154
    %2156 = vmatpush.msra.mxu0 %v2155
    %v2157 = vand.u32 %v293, 4294901760
    %v2158 = vsub.f32 %v293, %v2157
    %2159 = vmatpush.msra.mxu0 %v2158
    %v2160 = vand.u32 %v291, 4294901760
    %v2161 = vsub.f32 %v291, %v2160
    %2162 = vmatpush.msra.mxu0 %v2161
    %v2163 = vand.u32 %v289, 4294901760
    %v2164 = vsub.f32 %v289, %v2163
    %2165 = vmatpush.msra.mxu0 %v2164
    %v2166 = vand.u32 %v312, 4294901760
    %v2167 = vsub.f32 %v312, %v2166
    %2168 = vmatmul.f32.gmra.mxu0 %v2167
    %v2169 = vpop.f32.mrf.mxu0
    %v2170 = vadd.f32 %v2002, %v2169
    %v2171 = vand.u32 %v315, 4294901760
    %v2172 = vsub.f32 %v315, %v2171
    %2173 = vmatmul.f32.gmra.mxu0 %v2172
    %v2174 = vpop.f32.mrf.mxu0
    %v2175 = vadd.f32 %v2006, %v2174
    %v2176 = vand.u32 %v318, 4294901760
    %v2177 = vsub.f32 %v318, %v2176
    %2178 = vmatmul.f32.gmra.mxu0 %v2177
    %v2179 = vpop.f32.mrf.mxu0
    %v2180 = vadd.f32 %v2010, %v2179
    %v2181 = vand.u32 %v321, 4294901760
    %v2182 = vsub.f32 %v321, %v2181
    %2183 = vmatmul.f32.gmra.mxu0 %v2182
    %v2184 = vpop.f32.mrf.mxu0
    %v2185 = vadd.f32 %v2014, %v2184
    %v2186 = vand.u32 %v324, 4294901760
    %v2187 = vsub.f32 %v324, %v2186
    %2188 = vmatmul.f32.gmra.mxu0 %v2187
    %v2189 = vpop.f32.mrf.mxu0
    %v2190 = vadd.f32 %v2018, %v2189
    %v2191 = vand.u32 %v327, 4294901760
    %v2192 = vsub.f32 %v327, %v2191
    %2193 = vmatmul.f32.gmra.mxu0 %v2192
    %v2194 = vpop.f32.mrf.mxu0
    %v2195 = vadd.f32 %v2022, %v2194
    %v2196 = vand.u32 %v330, 4294901760
    %v2197 = vsub.f32 %v330, %v2196
    %2198 = vmatmul.f32.gmra.mxu0 %v2197
    %v2199 = vpop.f32.mrf.mxu0
    %v2200 = vadd.f32 %v2026, %v2199
    %v2201 = vand.u32 %v333, 4294901760
    %v2202 = vsub.f32 %v333, %v2201
    %2203 = vmatmul.f32.gmra.mxu0 %v2202
    %v2204 = vpop.f32.mrf.mxu0
    %v2205 = vadd.f32 %v2030, %v2204
    %v2206 = vand.u32 %v336, 4294901760
    %v2207 = vsub.f32 %v336, %v2206
    %2208 = vmatmul.f32.gmra.mxu0 %v2207
    %v2209 = vpop.f32.mrf.mxu0
    %v2210 = vadd.f32 %v2034, %v2209
    %v2211 = vand.u32 %v339, 4294901760
    %v2212 = vsub.f32 %v339, %v2211
    %2213 = vmatmul.f32.gmra.mxu0 %v2212
    %v2214 = vpop.f32.mrf.mxu0
    %v2215 = vadd.f32 %v2038, %v2214
    %v2216 = vand.u32 %v342, 4294901760
    %v2217 = vsub.f32 %v342, %v2216
    %2218 = vmatmul.f32.gmra.mxu0 %v2217
    %v2219 = vpop.f32.mrf.mxu0
    %v2220 = vadd.f32 %v2042, %v2219
    %v2221 = vand.u32 %v345, 4294901760
    %v2222 = vsub.f32 %v345, %v2221
    %2223 = vmatmul.f32.gmra.mxu0 %v2222
    %v2224 = vpop.f32.mrf.mxu0
    %v2225 = vadd.f32 %v2046, %v2224
    %v2226 = vand.u32 %v348, 4294901760
    %v2227 = vsub.f32 %v348, %v2226
    %2228 = vmatmul.f32.gmra.mxu0 %v2227
    %v2229 = vpop.f32.mrf.mxu0
    %v2230 = vadd.f32 %v2050, %v2229
    %v2231 = vand.u32 %v351, 4294901760
    %v2232 = vsub.f32 %v351, %v2231
    %2233 = vmatmul.f32.gmra.mxu0 %v2232
    %v2234 = vpop.f32.mrf.mxu0
    %v2235 = vadd.f32 %v2054, %v2234
    %v2236 = vand.u32 %v354, 4294901760
    %v2237 = vsub.f32 %v354, %v2236
    %2238 = vmatmul.f32.gmra.mxu0 %v2237
    %v2239 = vpop.f32.mrf.mxu0
    %v2240 = vadd.f32 %v2058, %v2239
    %v2241 = vand.u32 %v357, 4294901760
    %v2242 = vsub.f32 %v357, %v2241
    %2243 = vmatmul.f32.gmra.mxu0 %v2242
    %v2244 = vpop.f32.mrf.mxu0
    %v2245 = vadd.f32 %v2062, %v2244
    %v2246 = vand.u32 %v360, 4294901760
    %v2247 = vsub.f32 %v360, %v2246
    %2248 = vmatmul.f32.gmra.mxu0 %v2247
    %v2249 = vpop.f32.mrf.mxu0
    %v2250 = vadd.f32 %v2066, %v2249
    %v2251 = vand.u32 %v363, 4294901760
    %v2252 = vsub.f32 %v363, %v2251
    %2253 = vmatmul.f32.gmra.mxu0 %v2252
    %v2254 = vpop.f32.mrf.mxu0
    %v2255 = vadd.f32 %v2070, %v2254
    %v2256 = vand.u32 %v366, 4294901760
    %v2257 = vsub.f32 %v366, %v2256
    %2258 = vmatmul.f32.gmra.mxu0 %v2257
    %v2259 = vpop.f32.mrf.mxu0
    %v2260 = vadd.f32 %v2074, %v2259
    %v2261 = vand.u32 %v369, 4294901760
    %v2262 = vsub.f32 %v369, %v2261
    %2263 = vmatmul.f32.gmra.mxu0 %v2262
    %v2264 = vpop.f32.mrf.mxu0
    %v2265 = vadd.f32 %v2078, %v2264
    %v2266 = vand.u32 %v372, 4294901760
    %v2267 = vsub.f32 %v372, %v2266
    %2268 = vmatmul.f32.gmra.mxu0 %v2267
    %v2269 = vpop.f32.mrf.mxu0
    %v2270 = vadd.f32 %v2082, %v2269
    %v2271 = vand.u32 %v375, 4294901760
    %v2272 = vsub.f32 %v375, %v2271
    %2273 = vmatmul.f32.gmra.mxu0 %v2272
    %v2274 = vpop.f32.mrf.mxu0
    %v2275 = vadd.f32 %v2086, %v2274
    %v2276 = vand.u32 %v378, 4294901760
    %v2277 = vsub.f32 %v378, %v2276
    %2278 = vmatmul.f32.gmra.mxu0 %v2277
    %v2279 = vpop.f32.mrf.mxu0
    %v2280 = vadd.f32 %v2090, %v2279
    %v2281 = vand.u32 %v381, 4294901760
    %v2282 = vsub.f32 %v381, %v2281
    %2283 = vmatmul.f32.gmra.mxu0 %v2282
    %v2284 = vpop.f32.mrf.mxu0
    %v2285 = vadd.f32 %v2094, %v2284
    %v2286 = vand.u32 %v384, 4294901760
    %v2287 = vsub.f32 %v384, %v2286
    %2288 = vmatmul.f32.gmra.mxu0 %v2287
    %v2289 = vpop.f32.mrf.mxu0
    %v2290 = vadd.f32 %v2098, %v2289
    %v2291 = vand.u32 %v387, 4294901760
    %v2292 = vsub.f32 %v387, %v2291
    %2293 = vmatmul.f32.gmra.mxu0 %v2292
    %v2294 = vpop.f32.mrf.mxu0
    %v2295 = vadd.f32 %v2102, %v2294
    %v2296 = vand.u32 %v390, 4294901760
    %v2297 = vsub.f32 %v390, %v2296
    %2298 = vmatmul.f32.gmra.mxu0 %v2297
    %v2299 = vpop.f32.mrf.mxu0
    %v2300 = vadd.f32 %v2106, %v2299
    %v2301 = vand.u32 %v393, 4294901760
    %v2302 = vsub.f32 %v393, %v2301
    %2303 = vmatmul.f32.gmra.mxu0 %v2302
    %v2304 = vpop.f32.mrf.mxu0
    %v2305 = vadd.f32 %v2110, %v2304
    %v2306 = vand.u32 %v396, 4294901760
    %v2307 = vsub.f32 %v396, %v2306
    %2308 = vmatmul.f32.gmra.mxu0 %v2307
    %v2309 = vpop.f32.mrf.mxu0
    %v2310 = vadd.f32 %v2114, %v2309
    %v2311 = vand.u32 %v399, 4294901760
    %v2312 = vsub.f32 %v399, %v2311
    %2313 = vmatmul.f32.gmra.mxu0 %v2312
    %v2314 = vpop.f32.mrf.mxu0
    %v2315 = vadd.f32 %v2118, %v2314
    %v2316 = vand.u32 %v402, 4294901760
    %v2317 = vsub.f32 %v402, %v2316
    %2318 = vmatmul.f32.gmra.mxu0 %v2317
    %v2319 = vpop.f32.mrf.mxu0
    %v2320 = vadd.f32 %v2122, %v2319
    %v2321 = vand.u32 %v405, 4294901760
    %v2322 = vsub.f32 %v405, %v2321
    %2323 = vmatmul.f32.gmra.mxu0 %v2322
    %v2324 = vpop.f32.mrf.mxu0
    %v2325 = vadd.f32 %v2126, %v2324
    %2326 = vdwg.mxu0
    %2327 = vmatpush.msra.mxu0 0.0
    %2328 = vmatpush.msra.mxu0 0.0
    %2329 = vmatpush.msra.mxu0 0.0
    %2330 = vmatpush.msra.mxu0 0.0
    %2331 = vmatpush.msra.mxu0 0.0
    %v2332 = vand.u32 %v309, 4294901760
    %2333 = vmatpush.msra.mxu0 %v2332
    %v2334 = vand.u32 %v307, 4294901760
    %2335 = vmatpush.msra.mxu0 %v2334
    %v2336 = vand.u32 %v305, 4294901760
    %2337 = vmatpush.msra.mxu0 %v2336
    %v2338 = vand.u32 %v303, 4294901760
    %2339 = vmatpush.msra.mxu0 %v2338
    %v2340 = vand.u32 %v301, 4294901760
    %2341 = vmatpush.msra.mxu0 %v2340
    %v2342 = vand.u32 %v299, 4294901760
    %2343 = vmatpush.msra.mxu0 %v2342
    %v2344 = vand.u32 %v297, 4294901760
    %2345 = vmatpush.msra.mxu0 %v2344
    %v2346 = vand.u32 %v295, 4294901760
    %2347 = vmatpush.msra.mxu0 %v2346
    %v2348 = vand.u32 %v293, 4294901760
    %2349 = vmatpush.msra.mxu0 %v2348
    %v2350 = vand.u32 %v291, 4294901760
    %2351 = vmatpush.msra.mxu0 %v2350
    %v2352 = vand.u32 %v289, 4294901760
    %2353 = vmatpush.msra.mxu0 %v2352
    %v2354 = vand.u32 %v312, 4294901760
    %v2355 = vsub.f32 %v312, %v2354
    %v2356 = vand.u32 %v2355, 4294901760
    %2357 = vmatmul.f32.gmra.mxu0 %v2356
    %v2358 = vpop.f32.mrf.mxu0
    %v2359 = vadd.f32 %v2170, %v2358
    %v2360 = vand.u32 %v315, 4294901760
    %v2361 = vsub.f32 %v315, %v2360
    %v2362 = vand.u32 %v2361, 4294901760
    %2363 = vmatmul.f32.gmra.mxu0 %v2362
    %v2364 = vpop.f32.mrf.mxu0
    %v2365 = vadd.f32 %v2175, %v2364
    %v2366 = vand.u32 %v318, 4294901760
    %v2367 = vsub.f32 %v318, %v2366
    %v2368 = vand.u32 %v2367, 4294901760
    %2369 = vmatmul.f32.gmra.mxu0 %v2368
    %v2370 = vpop.f32.mrf.mxu0
    %v2371 = vadd.f32 %v2180, %v2370
    %v2372 = vand.u32 %v321, 4294901760
    %v2373 = vsub.f32 %v321, %v2372
    %v2374 = vand.u32 %v2373, 4294901760
    %2375 = vmatmul.f32.gmra.mxu0 %v2374
    %v2376 = vpop.f32.mrf.mxu0
    %v2377 = vadd.f32 %v2185, %v2376
    %v2378 = vand.u32 %v324, 4294901760
    %v2379 = vsub.f32 %v324, %v2378
    %v2380 = vand.u32 %v2379, 4294901760
    %2381 = vmatmul.f32.gmra.mxu0 %v2380
    %v2382 = vpop.f32.mrf.mxu0
    %v2383 = vadd.f32 %v2190, %v2382
    %v2384 = vand.u32 %v327, 4294901760
    %v2385 = vsub.f32 %v327, %v2384
    %v2386 = vand.u32 %v2385, 4294901760
    %2387 = vmatmul.f32.gmra.mxu0 %v2386
    %v2388 = vpop.f32.mrf.mxu0
    %v2389 = vadd.f32 %v2195, %v2388
    %v2390 = vand.u32 %v330, 4294901760
    %v2391 = vsub.f32 %v330, %v2390
    %v2392 = vand.u32 %v2391, 4294901760
    %2393 = vmatmul.f32.gmra.mxu0 %v2392
    %v2394 = vpop.f32.mrf.mxu0
    %v2395 = vadd.f32 %v2200, %v2394
    %v2396 = vand.u32 %v333, 4294901760
    %v2397 = vsub.f32 %v333, %v2396
    %v2398 = vand.u32 %v2397, 4294901760
    %2399 = vmatmul.f32.gmra.mxu0 %v2398
    %v2400 = vpop.f32.mrf.mxu0
    %v2401 = vadd.f32 %v2205, %v2400
    %v2402 = vand.u32 %v336, 4294901760
    %v2403 = vsub.f32 %v336, %v2402
    %v2404 = vand.u32 %v2403, 4294901760
    %2405 = vmatmul.f32.gmra.mxu0 %v2404
    %v2406 = vpop.f32.mrf.mxu0
    %v2407 = vadd.f32 %v2210, %v2406
    %v2408 = vand.u32 %v339, 4294901760
    %v2409 = vsub.f32 %v339, %v2408
    %v2410 = vand.u32 %v2409, 4294901760
    %2411 = vmatmul.f32.gmra.mxu0 %v2410
    %v2412 = vpop.f32.mrf.mxu0
    %v2413 = vadd.f32 %v2215, %v2412
    %v2414 = vand.u32 %v342, 4294901760
    %v2415 = vsub.f32 %v342, %v2414
    %v2416 = vand.u32 %v2415, 4294901760
    %2417 = vmatmul.f32.gmra.mxu0 %v2416
    %v2418 = vpop.f32.mrf.mxu0
    %v2419 = vadd.f32 %v2220, %v2418
    %v2420 = vand.u32 %v345, 4294901760
    %v2421 = vsub.f32 %v345, %v2420
    %v2422 = vand.u32 %v2421, 4294901760
    %2423 = vmatmul.f32.gmra.mxu0 %v2422
    %v2424 = vpop.f32.mrf.mxu0
    %v2425 = vadd.f32 %v2225, %v2424
    %v2426 = vand.u32 %v348, 4294901760
    %v2427 = vsub.f32 %v348, %v2426
    %v2428 = vand.u32 %v2427, 4294901760
    %2429 = vmatmul.f32.gmra.mxu0 %v2428
    %v2430 = vpop.f32.mrf.mxu0
    %v2431 = vadd.f32 %v2230, %v2430
    %v2432 = vand.u32 %v351, 4294901760
    %v2433 = vsub.f32 %v351, %v2432
    %v2434 = vand.u32 %v2433, 4294901760
    %2435 = vmatmul.f32.gmra.mxu0 %v2434
    %v2436 = vpop.f32.mrf.mxu0
    %v2437 = vadd.f32 %v2235, %v2436
    %v2438 = vand.u32 %v354, 4294901760
    %v2439 = vsub.f32 %v354, %v2438
    %v2440 = vand.u32 %v2439, 4294901760
    %2441 = vmatmul.f32.gmra.mxu0 %v2440
    %v2442 = vpop.f32.mrf.mxu0
    %v2443 = vadd.f32 %v2240, %v2442
    %v2444 = vand.u32 %v357, 4294901760
    %v2445 = vsub.f32 %v357, %v2444
    %v2446 = vand.u32 %v2445, 4294901760
    %2447 = vmatmul.f32.gmra.mxu0 %v2446
    %v2448 = vpop.f32.mrf.mxu0
    %v2449 = vadd.f32 %v2245, %v2448
    %v2450 = vand.u32 %v360, 4294901760
    %v2451 = vsub.f32 %v360, %v2450
    %v2452 = vand.u32 %v2451, 4294901760
    %2453 = vmatmul.f32.gmra.mxu0 %v2452
    %v2454 = vpop.f32.mrf.mxu0
    %v2455 = vadd.f32 %v2250, %v2454
    %v2456 = vand.u32 %v363, 4294901760
    %v2457 = vsub.f32 %v363, %v2456
    %v2458 = vand.u32 %v2457, 4294901760
    %2459 = vmatmul.f32.gmra.mxu0 %v2458
    %v2460 = vpop.f32.mrf.mxu0
    %v2461 = vadd.f32 %v2255, %v2460
    %v2462 = vand.u32 %v366, 4294901760
    %v2463 = vsub.f32 %v366, %v2462
    %v2464 = vand.u32 %v2463, 4294901760
    %2465 = vmatmul.f32.gmra.mxu0 %v2464
    %v2466 = vpop.f32.mrf.mxu0
    %v2467 = vadd.f32 %v2260, %v2466
    %v2468 = vand.u32 %v369, 4294901760
    %v2469 = vsub.f32 %v369, %v2468
    %v2470 = vand.u32 %v2469, 4294901760
    %2471 = vmatmul.f32.gmra.mxu0 %v2470
    %v2472 = vpop.f32.mrf.mxu0
    %v2473 = vadd.f32 %v2265, %v2472
    %v2474 = vand.u32 %v372, 4294901760
    %v2475 = vsub.f32 %v372, %v2474
    %v2476 = vand.u32 %v2475, 4294901760
    %2477 = vmatmul.f32.gmra.mxu0 %v2476
    %v2478 = vpop.f32.mrf.mxu0
    %v2479 = vadd.f32 %v2270, %v2478
    %v2480 = vand.u32 %v375, 4294901760
    %v2481 = vsub.f32 %v375, %v2480
    %v2482 = vand.u32 %v2481, 4294901760
    %2483 = vmatmul.f32.gmra.mxu0 %v2482
    %v2484 = vpop.f32.mrf.mxu0
    %v2485 = vadd.f32 %v2275, %v2484
    %v2486 = vand.u32 %v378, 4294901760
    %v2487 = vsub.f32 %v378, %v2486
    %v2488 = vand.u32 %v2487, 4294901760
    %2489 = vmatmul.f32.gmra.mxu0 %v2488
    %v2490 = vpop.f32.mrf.mxu0
    %v2491 = vadd.f32 %v2280, %v2490
    %v2492 = vand.u32 %v381, 4294901760
    %v2493 = vsub.f32 %v381, %v2492
    %v2494 = vand.u32 %v2493, 4294901760
    %2495 = vmatmul.f32.gmra.mxu0 %v2494
    %v2496 = vpop.f32.mrf.mxu0
    %v2497 = vadd.f32 %v2285, %v2496
    %v2498 = vand.u32 %v384, 4294901760
    %v2499 = vsub.f32 %v384, %v2498
    %v2500 = vand.u32 %v2499, 4294901760
    %2501 = vmatmul.f32.gmra.mxu0 %v2500
    %v2502 = vpop.f32.mrf.mxu0
    %v2503 = vadd.f32 %v2290, %v2502
    %v2504 = vand.u32 %v387, 4294901760
    %v2505 = vsub.f32 %v387, %v2504
    %v2506 = vand.u32 %v2505, 4294901760
    %2507 = vmatmul.f32.gmra.mxu0 %v2506
    %v2508 = vpop.f32.mrf.mxu0
    %v2509 = vadd.f32 %v2295, %v2508
    %v2510 = vand.u32 %v390, 4294901760
    %v2511 = vsub.f32 %v390, %v2510
    %v2512 = vand.u32 %v2511, 4294901760
    %2513 = vmatmul.f32.gmra.mxu0 %v2512
    %v2514 = vpop.f32.mrf.mxu0
    %v2515 = vadd.f32 %v2300, %v2514
    %v2516 = vand.u32 %v393, 4294901760
    %v2517 = vsub.f32 %v393, %v2516
    %v2518 = vand.u32 %v2517, 4294901760
    %2519 = vmatmul.f32.gmra.mxu0 %v2518
    %v2520 = vpop.f32.mrf.mxu0
    %v2521 = vadd.f32 %v2305, %v2520
    %v2522 = vand.u32 %v396, 4294901760
    %v2523 = vsub.f32 %v396, %v2522
    %v2524 = vand.u32 %v2523, 4294901760
    %2525 = vmatmul.f32.gmra.mxu0 %v2524
    %v2526 = vpop.f32.mrf.mxu0
    %v2527 = vadd.f32 %v2310, %v2526
    %v2528 = vand.u32 %v399, 4294901760
    %v2529 = vsub.f32 %v399, %v2528
    %v2530 = vand.u32 %v2529, 4294901760
    %2531 = vmatmul.f32.gmra.mxu0 %v2530
    %v2532 = vpop.f32.mrf.mxu0
    %v2533 = vadd.f32 %v2315, %v2532
    %v2534 = vand.u32 %v402, 4294901760
    %v2535 = vsub.f32 %v402, %v2534
    %v2536 = vand.u32 %v2535, 4294901760
    %2537 = vmatmul.f32.gmra.mxu0 %v2536
    %v2538 = vpop.f32.mrf.mxu0
    %v2539 = vadd.f32 %v2320, %v2538
    %v2540 = vand.u32 %v405, 4294901760
    %v2541 = vsub.f32 %v405, %v2540
    %v2542 = vand.u32 %v2541, 4294901760
    %2543 = vmatmul.f32.gmra.mxu0 %v2542
    %v2544 = vpop.f32.mrf.mxu0
    %v2545 = vadd.f32 %v2325, %v2544
    %2546 = vdwg.mxu0
    %2547 = vmatpush.msra.mxu0 0.0
    %2548 = vmatpush.msra.mxu0 0.0
    %2549 = vmatpush.msra.mxu0 0.0
    %2550 = vmatpush.msra.mxu0 0.0
    %2551 = vmatpush.msra.mxu0 0.0
    %v2552 = vand.u32 %v309, 4294901760
    %v2553 = vsub.f32 %v309, %v2552
    %v2554 = vand.u32 %v2553, 4294901760
    %2555 = vmatpush.msra.mxu0 %v2554
    %v2556 = vand.u32 %v307, 4294901760
    %v2557 = vsub.f32 %v307, %v2556
    %v2558 = vand.u32 %v2557, 4294901760
    %2559 = vmatpush.msra.mxu0 %v2558
    %v2560 = vand.u32 %v305, 4294901760
    %v2561 = vsub.f32 %v305, %v2560
    %v2562 = vand.u32 %v2561, 4294901760
    %2563 = vmatpush.msra.mxu0 %v2562
    %v2564 = vand.u32 %v303, 4294901760
    %v2565 = vsub.f32 %v303, %v2564
    %v2566 = vand.u32 %v2565, 4294901760
    %2567 = vmatpush.msra.mxu0 %v2566
    %v2568 = vand.u32 %v301, 4294901760
    %v2569 = vsub.f32 %v301, %v2568
    %v2570 = vand.u32 %v2569, 4294901760
    %2571 = vmatpush.msra.mxu0 %v2570
    %v2572 = vand.u32 %v299, 4294901760
    %v2573 = vsub.f32 %v299, %v2572
    %v2574 = vand.u32 %v2573, 4294901760
    %2575 = vmatpush.msra.mxu0 %v2574
    %v2576 = vand.u32 %v297, 4294901760
    %v2577 = vsub.f32 %v297, %v2576
    %v2578 = vand.u32 %v2577, 4294901760
    %2579 = vmatpush.msra.mxu0 %v2578
    %v2580 = vand.u32 %v295, 4294901760
    %v2581 = vsub.f32 %v295, %v2580
    %v2582 = vand.u32 %v2581, 4294901760
    %2583 = vmatpush.msra.mxu0 %v2582
    %v2584 = vand.u32 %v293, 4294901760
    %v2585 = vsub.f32 %v293, %v2584
    %v2586 = vand.u32 %v2585, 4294901760
    %2587 = vmatpush.msra.mxu0 %v2586
    %v2588 = vand.u32 %v291, 4294901760
    %v2589 = vsub.f32 %v291, %v2588
    %v2590 = vand.u32 %v2589, 4294901760
    %2591 = vmatpush.msra.mxu0 %v2590
    %v2592 = vand.u32 %v289, 4294901760
    %v2593 = vsub.f32 %v289, %v2592
    %v2594 = vand.u32 %v2593, 4294901760
    %2595 = vmatpush.msra.mxu0 %v2594
    %v2596 = vand.u32 %v312, 4294901760
    %2597 = vmatmul.f32.gmra.mxu0 %v2596
    %v2598 = vpop.f32.mrf.mxu0
    %v2599 = vadd.f32 %v2359, %v2598
    %v2600 = vand.u32 %v315, 4294901760
    %2601 = vmatmul.f32.gmra.mxu0 %v2600
    %v2602 = vpop.f32.mrf.mxu0
    %v2603 = vadd.f32 %v2365, %v2602
    %v2604 = vand.u32 %v318, 4294901760
    %2605 = vmatmul.f32.gmra.mxu0 %v2604
    %v2606 = vpop.f32.mrf.mxu0
    %v2607 = vadd.f32 %v2371, %v2606
    %v2608 = vand.u32 %v321, 4294901760
    %2609 = vmatmul.f32.gmra.mxu0 %v2608
    %v2610 = vpop.f32.mrf.mxu0
    %v2611 = vadd.f32 %v2377, %v2610
    %v2612 = vand.u32 %v324, 4294901760
    %2613 = vmatmul.f32.gmra.mxu0 %v2612
    %v2614 = vpop.f32.mrf.mxu0
    %v2615 = vadd.f32 %v2383, %v2614
    %v2616 = vand.u32 %v327, 4294901760
    %2617 = vmatmul.f32.gmra.mxu0 %v2616
    %v2618 = vpop.f32.mrf.mxu0
    %v2619 = vadd.f32 %v2389, %v2618
    %v2620 = vand.u32 %v330, 4294901760
    %2621 = vmatmul.f32.gmra.mxu0 %v2620
    %v2622 = vpop.f32.mrf.mxu0
    %v2623 = vadd.f32 %v2395, %v2622
    %v2624 = vand.u32 %v333, 4294901760
    %2625 = vmatmul.f32.gmra.mxu0 %v2624
    %v2626 = vpop.f32.mrf.mxu0
    %v2627 = vadd.f32 %v2401, %v2626
    %v2628 = vand.u32 %v336, 4294901760
    %2629 = vmatmul.f32.gmra.mxu0 %v2628
    %v2630 = vpop.f32.mrf.mxu0
    %v2631 = vadd.f32 %v2407, %v2630
    %v2632 = vand.u32 %v339, 4294901760
    %2633 = vmatmul.f32.gmra.mxu0 %v2632
    %v2634 = vpop.f32.mrf.mxu0
    %v2635 = vadd.f32 %v2413, %v2634
    %v2636 = vand.u32 %v342, 4294901760
    %2637 = vmatmul.f32.gmra.mxu0 %v2636
    %v2638 = vpop.f32.mrf.mxu0
    %v2639 = vadd.f32 %v2419, %v2638
    %v2640 = vand.u32 %v345, 4294901760
    %2641 = vmatmul.f32.gmra.mxu0 %v2640
    %v2642 = vpop.f32.mrf.mxu0
    %v2643 = vadd.f32 %v2425, %v2642
    %v2644 = vand.u32 %v348, 4294901760
    %2645 = vmatmul.f32.gmra.mxu0 %v2644
    %v2646 = vpop.f32.mrf.mxu0
    %v2647 = vadd.f32 %v2431, %v2646
    %v2648 = vand.u32 %v351, 4294901760
    %2649 = vmatmul.f32.gmra.mxu0 %v2648
    %v2650 = vpop.f32.mrf.mxu0
    %v2651 = vadd.f32 %v2437, %v2650
    %v2652 = vand.u32 %v354, 4294901760
    %2653 = vmatmul.f32.gmra.mxu0 %v2652
    %v2654 = vpop.f32.mrf.mxu0
    %v2655 = vadd.f32 %v2443, %v2654
    %v2656 = vand.u32 %v357, 4294901760
    %2657 = vmatmul.f32.gmra.mxu0 %v2656
    %v2658 = vpop.f32.mrf.mxu0
    %v2659 = vadd.f32 %v2449, %v2658
    %v2660 = vand.u32 %v360, 4294901760
    %2661 = vmatmul.f32.gmra.mxu0 %v2660
    %v2662 = vpop.f32.mrf.mxu0
    %v2663 = vadd.f32 %v2455, %v2662
    %v2664 = vand.u32 %v363, 4294901760
    %2665 = vmatmul.f32.gmra.mxu0 %v2664
    %v2666 = vpop.f32.mrf.mxu0
    %v2667 = vadd.f32 %v2461, %v2666
    %v2668 = vand.u32 %v366, 4294901760
    %2669 = vmatmul.f32.gmra.mxu0 %v2668
    %v2670 = vpop.f32.mrf.mxu0
    %v2671 = vadd.f32 %v2467, %v2670
    %v2672 = vand.u32 %v369, 4294901760
    %2673 = vmatmul.f32.gmra.mxu0 %v2672
    %v2674 = vpop.f32.mrf.mxu0
    %v2675 = vadd.f32 %v2473, %v2674
    %v2676 = vand.u32 %v372, 4294901760
    %2677 = vmatmul.f32.gmra.mxu0 %v2676
    %v2678 = vpop.f32.mrf.mxu0
    %v2679 = vadd.f32 %v2479, %v2678
    %v2680 = vand.u32 %v375, 4294901760
    %2681 = vmatmul.f32.gmra.mxu0 %v2680
    %v2682 = vpop.f32.mrf.mxu0
    %v2683 = vadd.f32 %v2485, %v2682
    %v2684 = vand.u32 %v378, 4294901760
    %2685 = vmatmul.f32.gmra.mxu0 %v2684
    %v2686 = vpop.f32.mrf.mxu0
    %v2687 = vadd.f32 %v2491, %v2686
    %v2688 = vand.u32 %v381, 4294901760
    %2689 = vmatmul.f32.gmra.mxu0 %v2688
    %v2690 = vpop.f32.mrf.mxu0
    %v2691 = vadd.f32 %v2497, %v2690
    %v2692 = vand.u32 %v384, 4294901760
    %2693 = vmatmul.f32.gmra.mxu0 %v2692
    %v2694 = vpop.f32.mrf.mxu0
    %v2695 = vadd.f32 %v2503, %v2694
    %v2696 = vand.u32 %v387, 4294901760
    %2697 = vmatmul.f32.gmra.mxu0 %v2696
    %v2698 = vpop.f32.mrf.mxu0
    %v2699 = vadd.f32 %v2509, %v2698
    %v2700 = vand.u32 %v390, 4294901760
    %2701 = vmatmul.f32.gmra.mxu0 %v2700
    %v2702 = vpop.f32.mrf.mxu0
    %v2703 = vadd.f32 %v2515, %v2702
    %v2704 = vand.u32 %v393, 4294901760
    %2705 = vmatmul.f32.gmra.mxu0 %v2704
    %v2706 = vpop.f32.mrf.mxu0
    %v2707 = vadd.f32 %v2521, %v2706
    %v2708 = vand.u32 %v396, 4294901760
    %2709 = vmatmul.f32.gmra.mxu0 %v2708
    %v2710 = vpop.f32.mrf.mxu0
    %v2711 = vadd.f32 %v2527, %v2710
    %v2712 = vand.u32 %v399, 4294901760
    %2713 = vmatmul.f32.gmra.mxu0 %v2712
    %v2714 = vpop.f32.mrf.mxu0
    %v2715 = vadd.f32 %v2533, %v2714
    %v2716 = vand.u32 %v402, 4294901760
    %2717 = vmatmul.f32.gmra.mxu0 %v2716
    %v2718 = vpop.f32.mrf.mxu0
    %v2719 = vadd.f32 %v2539, %v2718
    %v2720 = vand.u32 %v405, 4294901760
    %2721 = vmatmul.f32.gmra.mxu0 %v2720
    %v2722 = vpop.f32.mrf.mxu0
    %v2723 = vadd.f32 %v2545, %v2722
    %2724 = vdwg.mxu0
    %2725 = vmatpush.msra.mxu0 0.0
    %2726 = vmatpush.msra.mxu0 0.0
    %2727 = vmatpush.msra.mxu0 0.0
    %2728 = vmatpush.msra.mxu0 0.0
    %2729 = vmatpush.msra.mxu0 0.0
    %v2730 = vand.u32 %v309, 4294901760
    %2731 = vmatpush.msra.mxu0 %v2730
    %v2732 = vand.u32 %v307, 4294901760
    %2733 = vmatpush.msra.mxu0 %v2732
    %v2734 = vand.u32 %v305, 4294901760
    %2735 = vmatpush.msra.mxu0 %v2734
    %v2736 = vand.u32 %v303, 4294901760
    %2737 = vmatpush.msra.mxu0 %v2736
    %v2738 = vand.u32 %v301, 4294901760
    %2739 = vmatpush.msra.mxu0 %v2738
    %v2740 = vand.u32 %v299, 4294901760
    %2741 = vmatpush.msra.mxu0 %v2740
    %v2742 = vand.u32 %v297, 4294901760
    %2743 = vmatpush.msra.mxu0 %v2742
    %v2744 = vand.u32 %v295, 4294901760
    %2745 = vmatpush.msra.mxu0 %v2744
    %v2746 = vand.u32 %v293, 4294901760
    %2747 = vmatpush.msra.mxu0 %v2746
    %v2748 = vand.u32 %v291, 4294901760
    %2749 = vmatpush.msra.mxu0 %v2748
    %v2750 = vand.u32 %v289, 4294901760
    %2751 = vmatpush.msra.mxu0 %v2750
    %v2752 = vand.u32 %v312, 4294901760
    %2753 = vmatmul.f32.gmra.mxu0 %v2752
    %v2754 = vpop.f32.mrf.mxu0
    %v2755 = vadd.f32 %v2599, %v2754
    %v2756 = vand.u32 %v315, 4294901760
    %2757 = vmatmul.f32.gmra.mxu0 %v2756
    %v2758 = vpop.f32.mrf.mxu0
    %v2759 = vadd.f32 %v2603, %v2758
    %v2760 = vand.u32 %v318, 4294901760
    %2761 = vmatmul.f32.gmra.mxu0 %v2760
    %v2762 = vpop.f32.mrf.mxu0
    %v2763 = vadd.f32 %v2607, %v2762
    %v2764 = vand.u32 %v321, 4294901760
    %2765 = vmatmul.f32.gmra.mxu0 %v2764
    %v2766 = vpop.f32.mrf.mxu0
    %v2767 = vadd.f32 %v2611, %v2766
    %v2768 = vand.u32 %v324, 4294901760
    %2769 = vmatmul.f32.gmra.mxu0 %v2768
    %v2770 = vpop.f32.mrf.mxu0
    %v2771 = vadd.f32 %v2615, %v2770
    %v2772 = vand.u32 %v327, 4294901760
    %2773 = vmatmul.f32.gmra.mxu0 %v2772
    %v2774 = vpop.f32.mrf.mxu0
    %v2775 = vadd.f32 %v2619, %v2774
    %v2776 = vand.u32 %v330, 4294901760
    %2777 = vmatmul.f32.gmra.mxu0 %v2776
    %v2778 = vpop.f32.mrf.mxu0
    %v2779 = vadd.f32 %v2623, %v2778
    %v2780 = vand.u32 %v333, 4294901760
    %2781 = vmatmul.f32.gmra.mxu0 %v2780
    %v2782 = vpop.f32.mrf.mxu0
    %v2783 = vadd.f32 %v2627, %v2782
    %v2784 = vand.u32 %v336, 4294901760
    %2785 = vmatmul.f32.gmra.mxu0 %v2784
    %v2786 = vpop.f32.mrf.mxu0
    %v2787 = vadd.f32 %v2631, %v2786
    %v2788 = vand.u32 %v339, 4294901760
    %2789 = vmatmul.f32.gmra.mxu0 %v2788
    %v2790 = vpop.f32.mrf.mxu0
    %v2791 = vadd.f32 %v2635, %v2790
    %v2792 = vand.u32 %v342, 4294901760
    %2793 = vmatmul.f32.gmra.mxu0 %v2792
    %v2794 = vpop.f32.mrf.mxu0
    %v2795 = vadd.f32 %v2639, %v2794
    %v2796 = vand.u32 %v345, 4294901760
    %2797 = vmatmul.f32.gmra.mxu0 %v2796
    %v2798 = vpop.f32.mrf.mxu0
    %v2799 = vadd.f32 %v2643, %v2798
    %v2800 = vand.u32 %v348, 4294901760
    %2801 = vmatmul.f32.gmra.mxu0 %v2800
    %v2802 = vpop.f32.mrf.mxu0
    %v2803 = vadd.f32 %v2647, %v2802
    %v2804 = vand.u32 %v351, 4294901760
    %2805 = vmatmul.f32.gmra.mxu0 %v2804
    %v2806 = vpop.f32.mrf.mxu0
    %v2807 = vadd.f32 %v2651, %v2806
    %v2808 = vand.u32 %v354, 4294901760
    %2809 = vmatmul.f32.gmra.mxu0 %v2808
    %v2810 = vpop.f32.mrf.mxu0
    %v2811 = vadd.f32 %v2655, %v2810
    %v2812 = vand.u32 %v357, 4294901760
    %2813 = vmatmul.f32.gmra.mxu0 %v2812
    %v2814 = vpop.f32.mrf.mxu0
    %v2815 = vadd.f32 %v2659, %v2814
    %v2816 = vand.u32 %v360, 4294901760
    %2817 = vmatmul.f32.gmra.mxu0 %v2816
    %v2818 = vpop.f32.mrf.mxu0
    %v2819 = vadd.f32 %v2663, %v2818
    %v2820 = vand.u32 %v363, 4294901760
    %2821 = vmatmul.f32.gmra.mxu0 %v2820
    %v2822 = vpop.f32.mrf.mxu0
    %v2823 = vadd.f32 %v2667, %v2822
    %v2824 = vand.u32 %v366, 4294901760
    %2825 = vmatmul.f32.gmra.mxu0 %v2824
    %v2826 = vpop.f32.mrf.mxu0
    %v2827 = vadd.f32 %v2671, %v2826
    %v2828 = vand.u32 %v369, 4294901760
    %2829 = vmatmul.f32.gmra.mxu0 %v2828
    %v2830 = vpop.f32.mrf.mxu0
    %v2831 = vadd.f32 %v2675, %v2830
    %v2832 = vand.u32 %v372, 4294901760
    %2833 = vmatmul.f32.gmra.mxu0 %v2832
    %v2834 = vpop.f32.mrf.mxu0
    %v2835 = vadd.f32 %v2679, %v2834
    %v2836 = vand.u32 %v375, 4294901760
    %2837 = vmatmul.f32.gmra.mxu0 %v2836
    %v2838 = vpop.f32.mrf.mxu0
    %v2839 = vadd.f32 %v2683, %v2838
    %v2840 = vand.u32 %v378, 4294901760
    %2841 = vmatmul.f32.gmra.mxu0 %v2840
    %v2842 = vpop.f32.mrf.mxu0
    %v2843 = vadd.f32 %v2687, %v2842
    %v2844 = vand.u32 %v381, 4294901760
    %2845 = vmatmul.f32.gmra.mxu0 %v2844
    %v2846 = vpop.f32.mrf.mxu0
    %v2847 = vadd.f32 %v2691, %v2846
    %v2848 = vand.u32 %v384, 4294901760
    %2849 = vmatmul.f32.gmra.mxu0 %v2848
    %v2850 = vpop.f32.mrf.mxu0
    %v2851 = vadd.f32 %v2695, %v2850
    %v2852 = vand.u32 %v387, 4294901760
    %2853 = vmatmul.f32.gmra.mxu0 %v2852
    %v2854 = vpop.f32.mrf.mxu0
    %v2855 = vadd.f32 %v2699, %v2854
    %v2856 = vand.u32 %v390, 4294901760
    %2857 = vmatmul.f32.gmra.mxu0 %v2856
    %v2858 = vpop.f32.mrf.mxu0
    %v2859 = vadd.f32 %v2703, %v2858
    %v2860 = vand.u32 %v393, 4294901760
    %2861 = vmatmul.f32.gmra.mxu0 %v2860
    %v2862 = vpop.f32.mrf.mxu0
    %v2863 = vadd.f32 %v2707, %v2862
    %v2864 = vand.u32 %v396, 4294901760
    %2865 = vmatmul.f32.gmra.mxu0 %v2864
    %v2866 = vpop.f32.mrf.mxu0
    %v2867 = vadd.f32 %v2711, %v2866
    %v2868 = vand.u32 %v399, 4294901760
    %2869 = vmatmul.f32.gmra.mxu0 %v2868
    %v2870 = vpop.f32.mrf.mxu0
    %v2871 = vadd.f32 %v2715, %v2870
    %v2872 = vand.u32 %v402, 4294901760
    %2873 = vmatmul.f32.gmra.mxu0 %v2872
    %v2874 = vpop.f32.mrf.mxu0
    %v2875 = vadd.f32 %v2719, %v2874
    %v2876 = vand.u32 %v405, 4294901760
    %2877 = vmatmul.f32.gmra.mxu0 %v2876
    %v2878 = vpop.f32.mrf.mxu0
    %v2879 = vadd.f32 %v2723, %v2878
    %2880 = vdwg.mxu0
    %v2881 = vlaneseq
    %v2882 = vand.u32 %v2881, 127
    %vm2883 = vcmp.lt.s32.totalorder %v2882, 16
    %v2884 = vand.u32 %v1578, 4294901760
    %2885 = vmatpush.xpose.msra.mxu0 %v2884
    %v2886 = vand.u32 %v1574, 4294901760
    %2887 = vmatpush.xpose.msra.mxu0 %v2886
    %v2888 = vand.u32 %v1570, 4294901760
    %2889 = vmatpush.xpose.msra.mxu0 %v2888
    %v2890 = vand.u32 %v1566, 4294901760
    %2891 = vmatpush.xpose.msra.mxu0 %v2890
    %v2892 = vand.u32 %v1562, 4294901760
    %2893 = vmatpush.xpose.msra.mxu0 %v2892
    %v2894 = vand.u32 %v1558, 4294901760
    %2895 = vmatpush.xpose.msra.mxu0 %v2894
    %v2896 = vand.u32 %v1554, 4294901760
    %2897 = vmatpush.xpose.msra.mxu0 %v2896
    %v2898 = vand.u32 %v1550, 4294901760
    %2899 = vmatpush.xpose.msra.mxu0 %v2898
    %v2900 = vand.u32 %v1546, 4294901760
    %2901 = vmatpush.xpose.msra.mxu0 %v2900
    %v2902 = vand.u32 %v1542, 4294901760
    %2903 = vmatpush.xpose.msra.mxu0 %v2902
    %v2904 = vand.u32 %v1538, 4294901760
    %2905 = vmatpush.xpose.msra.mxu0 %v2904
    %v2906 = vand.u32 %v1534, 4294901760
    %2907 = vmatpush.xpose.msra.mxu0 %v2906
    %v2908 = vand.u32 %v1530, 4294901760
    %2909 = vmatpush.xpose.msra.mxu0 %v2908
    %v2910 = vand.u32 %v1526, 4294901760
    %2911 = vmatpush.xpose.msra.mxu0 %v2910
    %v2912 = vand.u32 %v1522, 4294901760
    %2913 = vmatpush.xpose.msra.mxu0 %v2912
    %v2914 = vand.u32 %v1518, 4294901760
    %2915 = vmatpush.xpose.msra.mxu0 %v2914
    %v2916 = vand.u32 %v250, 4294901760
    %v2917 = vsub.f32 %v250, %v2916
    %v2918 = vand.u32 %v2917, 4294901760
    %v2919 = vsub.f32 %v2917, %v2918
    %v2920 = vand.u32 %v2919, 4294901760
    %2921 = vmatmul.f32.gmra.mxu0 %v2920
    %v2922 = vpop.f32.mrf.mxu0
    %v2923 = vadd.f32 0.0, %v2922
    %2924 = vdwg.mxu0
    %v2925 = vand.u32 %v1578, 4294901760
    %v2926 = vsub.f32 %v1578, %v2925
    %v2927 = vand.u32 %v2926, 4294901760
    %v2928 = vsub.f32 %v2926, %v2927
    %v2929 = vand.u32 %v2928, 4294901760
    %2930 = vmatpush.xpose.msra.mxu0 %v2929
    %v2931 = vand.u32 %v1574, 4294901760
    %v2932 = vsub.f32 %v1574, %v2931
    %v2933 = vand.u32 %v2932, 4294901760
    %v2934 = vsub.f32 %v2932, %v2933
    %v2935 = vand.u32 %v2934, 4294901760
    %2936 = vmatpush.xpose.msra.mxu0 %v2935
    %v2937 = vand.u32 %v1570, 4294901760
    %v2938 = vsub.f32 %v1570, %v2937
    %v2939 = vand.u32 %v2938, 4294901760
    %v2940 = vsub.f32 %v2938, %v2939
    %v2941 = vand.u32 %v2940, 4294901760
    %2942 = vmatpush.xpose.msra.mxu0 %v2941
    %v2943 = vand.u32 %v1566, 4294901760
    %v2944 = vsub.f32 %v1566, %v2943
    %v2945 = vand.u32 %v2944, 4294901760
    %v2946 = vsub.f32 %v2944, %v2945
    %v2947 = vand.u32 %v2946, 4294901760
    %2948 = vmatpush.xpose.msra.mxu0 %v2947
    %v2949 = vand.u32 %v1562, 4294901760
    %v2950 = vsub.f32 %v1562, %v2949
    %v2951 = vand.u32 %v2950, 4294901760
    %v2952 = vsub.f32 %v2950, %v2951
    %v2953 = vand.u32 %v2952, 4294901760
    %2954 = vmatpush.xpose.msra.mxu0 %v2953
    %v2955 = vand.u32 %v1558, 4294901760
    %v2956 = vsub.f32 %v1558, %v2955
    %v2957 = vand.u32 %v2956, 4294901760
    %v2958 = vsub.f32 %v2956, %v2957
    %v2959 = vand.u32 %v2958, 4294901760
    %2960 = vmatpush.xpose.msra.mxu0 %v2959
    %v2961 = vand.u32 %v1554, 4294901760
    %v2962 = vsub.f32 %v1554, %v2961
    %v2963 = vand.u32 %v2962, 4294901760
    %v2964 = vsub.f32 %v2962, %v2963
    %v2965 = vand.u32 %v2964, 4294901760
    %2966 = vmatpush.xpose.msra.mxu0 %v2965
    %v2967 = vand.u32 %v1550, 4294901760
    %v2968 = vsub.f32 %v1550, %v2967
    %v2969 = vand.u32 %v2968, 4294901760
    %v2970 = vsub.f32 %v2968, %v2969
    %v2971 = vand.u32 %v2970, 4294901760
    %2972 = vmatpush.xpose.msra.mxu0 %v2971
    %v2973 = vand.u32 %v1546, 4294901760
    %v2974 = vsub.f32 %v1546, %v2973
    %v2975 = vand.u32 %v2974, 4294901760
    %v2976 = vsub.f32 %v2974, %v2975
    %v2977 = vand.u32 %v2976, 4294901760
    %2978 = vmatpush.xpose.msra.mxu0 %v2977
    %v2979 = vand.u32 %v1542, 4294901760
    %v2980 = vsub.f32 %v1542, %v2979
    %v2981 = vand.u32 %v2980, 4294901760
    %v2982 = vsub.f32 %v2980, %v2981
    %v2983 = vand.u32 %v2982, 4294901760
    %2984 = vmatpush.xpose.msra.mxu0 %v2983
    %v2985 = vand.u32 %v1538, 4294901760
    %v2986 = vsub.f32 %v1538, %v2985
    %v2987 = vand.u32 %v2986, 4294901760
    %v2988 = vsub.f32 %v2986, %v2987
    %v2989 = vand.u32 %v2988, 4294901760
    %2990 = vmatpush.xpose.msra.mxu0 %v2989
    %v2991 = vand.u32 %v1534, 4294901760
    %v2992 = vsub.f32 %v1534, %v2991
    %v2993 = vand.u32 %v2992, 4294901760
    %v2994 = vsub.f32 %v2992, %v2993
    %v2995 = vand.u32 %v2994, 4294901760
    %2996 = vmatpush.xpose.msra.mxu0 %v2995
    %v2997 = vand.u32 %v1530, 4294901760
    %v2998 = vsub.f32 %v1530, %v2997
    %v2999 = vand.u32 %v2998, 4294901760
    %v3000 = vsub.f32 %v2998, %v2999
    %v3001 = vand.u32 %v3000, 4294901760
    %3002 = vmatpush.xpose.msra.mxu0 %v3001
    %v3003 = vand.u32 %v1526, 4294901760
    %v3004 = vsub.f32 %v1526, %v3003
    %v3005 = vand.u32 %v3004, 4294901760
    %v3006 = vsub.f32 %v3004, %v3005
    %v3007 = vand.u32 %v3006, 4294901760
    %3008 = vmatpush.xpose.msra.mxu0 %v3007
    %v3009 = vand.u32 %v1522, 4294901760
    %v3010 = vsub.f32 %v1522, %v3009
    %v3011 = vand.u32 %v3010, 4294901760
    %v3012 = vsub.f32 %v3010, %v3011
    %v3013 = vand.u32 %v3012, 4294901760
    %3014 = vmatpush.xpose.msra.mxu0 %v3013
    %v3015 = vand.u32 %v1518, 4294901760
    %v3016 = vsub.f32 %v1518, %v3015
    %v3017 = vand.u32 %v3016, 4294901760
    %v3018 = vsub.f32 %v3016, %v3017
    %v3019 = vand.u32 %v3018, 4294901760
    %3020 = vmatpush.xpose.msra.mxu0 %v3019
    %v3021 = vand.u32 %v250, 4294901760
    %3022 = vmatmul.f32.gmra.mxu0 %v3021
    %v3023 = vpop.f32.mrf.mxu0
    %v3024 = vadd.f32 %v2923, %v3023
    %3025 = vdwg.mxu0
    %v3026 = vand.u32 %v1578, 4294901760
    %v3027 = vsub.f32 %v1578, %v3026
    %3028 = vmatpush.xpose.msra.mxu0 %v3027
    %v3029 = vand.u32 %v1574, 4294901760
    %v3030 = vsub.f32 %v1574, %v3029
    %3031 = vmatpush.xpose.msra.mxu0 %v3030
    %v3032 = vand.u32 %v1570, 4294901760
    %v3033 = vsub.f32 %v1570, %v3032
    %3034 = vmatpush.xpose.msra.mxu0 %v3033
    %v3035 = vand.u32 %v1566, 4294901760
    %v3036 = vsub.f32 %v1566, %v3035
    %3037 = vmatpush.xpose.msra.mxu0 %v3036
    %v3038 = vand.u32 %v1562, 4294901760
    %v3039 = vsub.f32 %v1562, %v3038
    %3040 = vmatpush.xpose.msra.mxu0 %v3039
    %v3041 = vand.u32 %v1558, 4294901760
    %v3042 = vsub.f32 %v1558, %v3041
    %3043 = vmatpush.xpose.msra.mxu0 %v3042
    %v3044 = vand.u32 %v1554, 4294901760
    %v3045 = vsub.f32 %v1554, %v3044
    %3046 = vmatpush.xpose.msra.mxu0 %v3045
    %v3047 = vand.u32 %v1550, 4294901760
    %v3048 = vsub.f32 %v1550, %v3047
    %3049 = vmatpush.xpose.msra.mxu0 %v3048
    %v3050 = vand.u32 %v1546, 4294901760
    %v3051 = vsub.f32 %v1546, %v3050
    %3052 = vmatpush.xpose.msra.mxu0 %v3051
    %v3053 = vand.u32 %v1542, 4294901760
    %v3054 = vsub.f32 %v1542, %v3053
    %3055 = vmatpush.xpose.msra.mxu0 %v3054
    %v3056 = vand.u32 %v1538, 4294901760
    %v3057 = vsub.f32 %v1538, %v3056
    %3058 = vmatpush.xpose.msra.mxu0 %v3057
    %v3059 = vand.u32 %v1534, 4294901760
    %v3060 = vsub.f32 %v1534, %v3059
    %3061 = vmatpush.xpose.msra.mxu0 %v3060
    %v3062 = vand.u32 %v1530, 4294901760
    %v3063 = vsub.f32 %v1530, %v3062
    %3064 = vmatpush.xpose.msra.mxu0 %v3063
    %v3065 = vand.u32 %v1526, 4294901760
    %v3066 = vsub.f32 %v1526, %v3065
    %3067 = vmatpush.xpose.msra.mxu0 %v3066
    %v3068 = vand.u32 %v1522, 4294901760
    %v3069 = vsub.f32 %v1522, %v3068
    %3070 = vmatpush.xpose.msra.mxu0 %v3069
    %v3071 = vand.u32 %v1518, 4294901760
    %v3072 = vsub.f32 %v1518, %v3071
    %3073 = vmatpush.xpose.msra.mxu0 %v3072
    %v3074 = vand.u32 %v250, 4294901760
    %v3075 = vsub.f32 %v250, %v3074
    %3076 = vmatmul.f32.gmra.mxu0 %v3075
    %v3077 = vpop.f32.mrf.mxu0
    %v3078 = vadd.f32 %v3024, %v3077
    %3079 = vdwg.mxu0
    %v3080 = vand.u32 %v1578, 4294901760
    %3081 = vmatpush.xpose.msra.mxu0 %v3080
    %v3082 = vand.u32 %v1574, 4294901760
    %3083 = vmatpush.xpose.msra.mxu0 %v3082
    %v3084 = vand.u32 %v1570, 4294901760
    %3085 = vmatpush.xpose.msra.mxu0 %v3084
    %v3086 = vand.u32 %v1566, 4294901760
    %3087 = vmatpush.xpose.msra.mxu0 %v3086
    %v3088 = vand.u32 %v1562, 4294901760
    %3089 = vmatpush.xpose.msra.mxu0 %v3088
    %v3090 = vand.u32 %v1558, 4294901760
    %3091 = vmatpush.xpose.msra.mxu0 %v3090
    %v3092 = vand.u32 %v1554, 4294901760
    %3093 = vmatpush.xpose.msra.mxu0 %v3092
    %v3094 = vand.u32 %v1550, 4294901760
    %3095 = vmatpush.xpose.msra.mxu0 %v3094
    %v3096 = vand.u32 %v1546, 4294901760
    %3097 = vmatpush.xpose.msra.mxu0 %v3096
    %v3098 = vand.u32 %v1542, 4294901760
    %3099 = vmatpush.xpose.msra.mxu0 %v3098
    %v3100 = vand.u32 %v1538, 4294901760
    %3101 = vmatpush.xpose.msra.mxu0 %v3100
    %v3102 = vand.u32 %v1534, 4294901760
    %3103 = vmatpush.xpose.msra.mxu0 %v3102
    %v3104 = vand.u32 %v1530, 4294901760
    %3105 = vmatpush.xpose.msra.mxu0 %v3104
    %v3106 = vand.u32 %v1526, 4294901760
    %3107 = vmatpush.xpose.msra.mxu0 %v3106
    %v3108 = vand.u32 %v1522, 4294901760
    %3109 = vmatpush.xpose.msra.mxu0 %v3108
    %v3110 = vand.u32 %v1518, 4294901760
    %3111 = vmatpush.xpose.msra.mxu0 %v3110
    %v3112 = vand.u32 %v250, 4294901760
    %v3113 = vsub.f32 %v250, %v3112
    %v3114 = vand.u32 %v3113, 4294901760
    %3115 = vmatmul.f32.gmra.mxu0 %v3114
    %v3116 = vpop.f32.mrf.mxu0
    %v3117 = vadd.f32 %v3078, %v3116
    %3118 = vdwg.mxu0
    %v3119 = vand.u32 %v1578, 4294901760
    %v3120 = vsub.f32 %v1578, %v3119
    %v3121 = vand.u32 %v3120, 4294901760
    %3122 = vmatpush.xpose.msra.mxu0 %v3121
    %v3123 = vand.u32 %v1574, 4294901760
    %v3124 = vsub.f32 %v1574, %v3123
    %v3125 = vand.u32 %v3124, 4294901760
    %3126 = vmatpush.xpose.msra.mxu0 %v3125
    %v3127 = vand.u32 %v1570, 4294901760
    %v3128 = vsub.f32 %v1570, %v3127
    %v3129 = vand.u32 %v3128, 4294901760
    %3130 = vmatpush.xpose.msra.mxu0 %v3129
    %v3131 = vand.u32 %v1566, 4294901760
    %v3132 = vsub.f32 %v1566, %v3131
    %v3133 = vand.u32 %v3132, 4294901760
    %3134 = vmatpush.xpose.msra.mxu0 %v3133
    %v3135 = vand.u32 %v1562, 4294901760
    %v3136 = vsub.f32 %v1562, %v3135
    %v3137 = vand.u32 %v3136, 4294901760
    %3138 = vmatpush.xpose.msra.mxu0 %v3137
    %v3139 = vand.u32 %v1558, 4294901760
    %v3140 = vsub.f32 %v1558, %v3139
    %v3141 = vand.u32 %v3140, 4294901760
    %3142 = vmatpush.xpose.msra.mxu0 %v3141
    %v3143 = vand.u32 %v1554, 4294901760
    %v3144 = vsub.f32 %v1554, %v3143
    %v3145 = vand.u32 %v3144, 4294901760
    %3146 = vmatpush.xpose.msra.mxu0 %v3145
    %v3147 = vand.u32 %v1550, 4294901760
    %v3148 = vsub.f32 %v1550, %v3147
    %v3149 = vand.u32 %v3148, 4294901760
    %3150 = vmatpush.xpose.msra.mxu0 %v3149
    %v3151 = vand.u32 %v1546, 4294901760
    %v3152 = vsub.f32 %v1546, %v3151
    %v3153 = vand.u32 %v3152, 4294901760
    %3154 = vmatpush.xpose.msra.mxu0 %v3153
    %v3155 = vand.u32 %v1542, 4294901760
    %v3156 = vsub.f32 %v1542, %v3155
    %v3157 = vand.u32 %v3156, 4294901760
    %3158 = vmatpush.xpose.msra.mxu0 %v3157
    %v3159 = vand.u32 %v1538, 4294901760
    %v3160 = vsub.f32 %v1538, %v3159
    %v3161 = vand.u32 %v3160, 4294901760
    %3162 = vmatpush.xpose.msra.mxu0 %v3161
    %v3163 = vand.u32 %v1534, 4294901760
    %v3164 = vsub.f32 %v1534, %v3163
    %v3165 = vand.u32 %v3164, 4294901760
    %3166 = vmatpush.xpose.msra.mxu0 %v3165
    %v3167 = vand.u32 %v1530, 4294901760
    %v3168 = vsub.f32 %v1530, %v3167
    %v3169 = vand.u32 %v3168, 4294901760
    %3170 = vmatpush.xpose.msra.mxu0 %v3169
    %v3171 = vand.u32 %v1526, 4294901760
    %v3172 = vsub.f32 %v1526, %v3171
    %v3173 = vand.u32 %v3172, 4294901760
    %3174 = vmatpush.xpose.msra.mxu0 %v3173
    %v3175 = vand.u32 %v1522, 4294901760
    %v3176 = vsub.f32 %v1522, %v3175
    %v3177 = vand.u32 %v3176, 4294901760
    %3178 = vmatpush.xpose.msra.mxu0 %v3177
    %v3179 = vand.u32 %v1518, 4294901760
    %v3180 = vsub.f32 %v1518, %v3179
    %v3181 = vand.u32 %v3180, 4294901760
    %3182 = vmatpush.xpose.msra.mxu0 %v3181
    %v3183 = vand.u32 %v250, 4294901760
    %3184 = vmatmul.f32.gmra.mxu0 %v3183
    %v3185 = vpop.f32.mrf.mxu0
    %v3186 = vadd.f32 %v3117, %v3185
    %3187 = vdwg.mxu0
    %v3188 = vand.u32 %v1578, 4294901760
    %3189 = vmatpush.xpose.msra.mxu0 %v3188
    %v3190 = vand.u32 %v1574, 4294901760
    %3191 = vmatpush.xpose.msra.mxu0 %v3190
    %v3192 = vand.u32 %v1570, 4294901760
    %3193 = vmatpush.xpose.msra.mxu0 %v3192
    %v3194 = vand.u32 %v1566, 4294901760
    %3195 = vmatpush.xpose.msra.mxu0 %v3194
    %v3196 = vand.u32 %v1562, 4294901760
    %3197 = vmatpush.xpose.msra.mxu0 %v3196
    %v3198 = vand.u32 %v1558, 4294901760
    %3199 = vmatpush.xpose.msra.mxu0 %v3198
    %v3200 = vand.u32 %v1554, 4294901760
    %3201 = vmatpush.xpose.msra.mxu0 %v3200
    %v3202 = vand.u32 %v1550, 4294901760
    %3203 = vmatpush.xpose.msra.mxu0 %v3202
    %v3204 = vand.u32 %v1546, 4294901760
    %3205 = vmatpush.xpose.msra.mxu0 %v3204
    %v3206 = vand.u32 %v1542, 4294901760
    %3207 = vmatpush.xpose.msra.mxu0 %v3206
    %v3208 = vand.u32 %v1538, 4294901760
    %3209 = vmatpush.xpose.msra.mxu0 %v3208
    %v3210 = vand.u32 %v1534, 4294901760
    %3211 = vmatpush.xpose.msra.mxu0 %v3210
    %v3212 = vand.u32 %v1530, 4294901760
    %3213 = vmatpush.xpose.msra.mxu0 %v3212
    %v3214 = vand.u32 %v1526, 4294901760
    %3215 = vmatpush.xpose.msra.mxu0 %v3214
    %v3216 = vand.u32 %v1522, 4294901760
    %3217 = vmatpush.xpose.msra.mxu0 %v3216
    %v3218 = vand.u32 %v1518, 4294901760
    %3219 = vmatpush.xpose.msra.mxu0 %v3218
    %v3220 = vand.u32 %v250, 4294901760
    %3221 = vmatmul.f32.gmra.mxu0 %v3220
    %v3222 = vpop.f32.mrf.mxu0
    %v3223 = vadd.f32 %v3186, %v3222
    %3224 = vdwg.mxu0
    %v3225 = vsel %vm2883, %v3223, -1e+09
    %3226 = vmax.xlane.f32.xlu0 %v3225
    %v3227 = vpop.xlane.xlu0 %3226
    %v3228 = vsub.f32 %v3225, %v3227
    %v3229 = vmul.f32 %v3228, 1.442695
    %v3230 = vpow.pop %v3229
    %3231 = vadd.xlane.f32.xlu0 %v3230
    %v3232 = vpop.xlane.xlu0 %3231
    %v3233 = vrcp.pop %v3232
    %v3234 = vmul.f32 %v3232, %v3233
    %v3235 = vsub.f32 1.0, %v3234
    %v3236 = vmul.f32 %v3233, %v3235
    %v3237 = vadd.f32 %v3233, %v3236
    %vm3238 = vweird.f32 %v3232
    %vm3239 = vweird.f32 %v3233
    %vm3240 = vmor %vm3238, %vm3239
    %v3241 = vsel %vm3240, %v3233, %v3237
    %v3242 = vand.u32 2147483647, %v3232
    %vm3243 = vcmp.eq.f32.partialorder %v3242, 8.507059e+37
    %v3244 = vand.u32 %v3232, 2147483648
    %v3245 = vor.u32 1.1754944e-38, %v3244
    %v3246 = vsel %vm3243, %v3245, %v3241
    %v3247 = vmul.f32 %v3230, %v3246
    %3248 = vst [vmem:[#allocation4] sm:$0xff] %v3247
    %v3249 = vand.u32 %v2815, 4294901760
    %3250 = vmatpush.msra.mxu0 %v3249
    %v3251 = vand.u32 %v2811, 4294901760
    %3252 = vmatpush.msra.mxu0 %v3251
    %v3253 = vand.u32 %v2807, 4294901760
    %3254 = vmatpush.msra.mxu0 %v3253
    %v3255 = vand.u32 %v2803, 4294901760
    %3256 = vmatpush.msra.mxu0 %v3255
    %v3257 = vand.u32 %v2799, 4294901760
    %3258 = vmatpush.msra.mxu0 %v3257
    %v3259 = vand.u32 %v2795, 4294901760
    %3260 = vmatpush.msra.mxu0 %v3259
    %v3261 = vand.u32 %v2791, 4294901760
    %3262 = vmatpush.msra.mxu0 %v3261
    %v3263 = vand.u32 %v2787, 4294901760
    %3264 = vmatpush.msra.mxu0 %v3263
    %v3265 = vand.u32 %v2783, 4294901760
    %3266 = vmatpush.msra.mxu0 %v3265
    %v3267 = vand.u32 %v2779, 4294901760
    %3268 = vmatpush.msra.mxu0 %v3267
    %v3269 = vand.u32 %v2775, 4294901760
    %3270 = vmatpush.msra.mxu0 %v3269
    %v3271 = vand.u32 %v2771, 4294901760
    %3272 = vmatpush.msra.mxu0 %v3271
    %v3273 = vand.u32 %v2767, 4294901760
    %3274 = vmatpush.msra.mxu0 %v3273
    %v3275 = vand.u32 %v2763, 4294901760
    %3276 = vmatpush.msra.mxu0 %v3275
    %v3277 = vand.u32 %v2759, 4294901760
    %3278 = vmatpush.msra.mxu0 %v3277
    %v3279 = vand.u32 %v2755, 4294901760
    %3280 = vmatpush.msra.mxu0 %v3279
    %v3281 = vand.u32 %v3247, 4294901760
    %v3282 = vsub.f32 %v3247, %v3281
    %v3283 = vand.u32 %v3282, 4294901760
    %v3284 = vsub.f32 %v3282, %v3283
    %v3285 = vand.u32 %v3284, 4294901760
    %3286 = vmatmul.f32.gmra.mxu0 %v3285
    %v3287 = vpop.f32.mrf.mxu0
    %v3288 = vadd.f32 0.0, %v3287
    %3289 = vdwg.mxu0
    %v3290 = vand.u32 %v2815, 4294901760
    %v3291 = vsub.f32 %v2815, %v3290
    %v3292 = vand.u32 %v3291, 4294901760
    %v3293 = vsub.f32 %v3291, %v3292
    %v3294 = vand.u32 %v3293, 4294901760
    %3295 = vmatpush.msra.mxu0 %v3294
    %v3296 = vand.u32 %v2811, 4294901760
    %v3297 = vsub.f32 %v2811, %v3296
    %v3298 = vand.u32 %v3297, 4294901760
    %v3299 = vsub.f32 %v3297, %v3298
    %v3300 = vand.u32 %v3299, 4294901760
    %3301 = vmatpush.msra.mxu0 %v3300
    %v3302 = vand.u32 %v2807, 4294901760
    %v3303 = vsub.f32 %v2807, %v3302
    %v3304 = vand.u32 %v3303, 4294901760
    %v3305 = vsub.f32 %v3303, %v3304
    %v3306 = vand.u32 %v3305, 4294901760
    %3307 = vmatpush.msra.mxu0 %v3306
    %v3308 = vand.u32 %v2803, 4294901760
    %v3309 = vsub.f32 %v2803, %v3308
    %v3310 = vand.u32 %v3309, 4294901760
    %v3311 = vsub.f32 %v3309, %v3310
    %v3312 = vand.u32 %v3311, 4294901760
    %3313 = vmatpush.msra.mxu0 %v3312
    %v3314 = vand.u32 %v2799, 4294901760
    %v3315 = vsub.f32 %v2799, %v3314
    %v3316 = vand.u32 %v3315, 4294901760
    %v3317 = vsub.f32 %v3315, %v3316
    %v3318 = vand.u32 %v3317, 4294901760
    %3319 = vmatpush.msra.mxu0 %v3318
    %v3320 = vand.u32 %v2795, 4294901760
    %v3321 = vsub.f32 %v2795, %v3320
    %v3322 = vand.u32 %v3321, 4294901760
    %v3323 = vsub.f32 %v3321, %v3322
    %v3324 = vand.u32 %v3323, 4294901760
    %3325 = vmatpush.msra.mxu0 %v3324
    %v3326 = vand.u32 %v2791, 4294901760
    %v3327 = vsub.f32 %v2791, %v3326
    %v3328 = vand.u32 %v3327, 4294901760
    %v3329 = vsub.f32 %v3327, %v3328
    %v3330 = vand.u32 %v3329, 4294901760
    %3331 = vmatpush.msra.mxu0 %v3330
    %v3332 = vand.u32 %v2787, 4294901760
    %v3333 = vsub.f32 %v2787, %v3332
    %v3334 = vand.u32 %v3333, 4294901760
    %v3335 = vsub.f32 %v3333, %v3334
    %v3336 = vand.u32 %v3335, 4294901760
    %3337 = vmatpush.msra.mxu0 %v3336
    %v3338 = vand.u32 %v2783, 4294901760
    %v3339 = vsub.f32 %v2783, %v3338
    %v3340 = vand.u32 %v3339, 4294901760
    %v3341 = vsub.f32 %v3339, %v3340
    %v3342 = vand.u32 %v3341, 4294901760
    %3343 = vmatpush.msra.mxu0 %v3342
    %v3344 = vand.u32 %v2779, 4294901760
    %v3345 = vsub.f32 %v2779, %v3344
    %v3346 = vand.u32 %v3345, 4294901760
    %v3347 = vsub.f32 %v3345, %v3346
    %v3348 = vand.u32 %v3347, 4294901760
    %3349 = vmatpush.msra.mxu0 %v3348
    %v3350 = vand.u32 %v2775, 4294901760
    %v3351 = vsub.f32 %v2775, %v3350
    %v3352 = vand.u32 %v3351, 4294901760
    %v3353 = vsub.f32 %v3351, %v3352
    %v3354 = vand.u32 %v3353, 4294901760
    %3355 = vmatpush.msra.mxu0 %v3354
    %v3356 = vand.u32 %v2771, 4294901760
    %v3357 = vsub.f32 %v2771, %v3356
    %v3358 = vand.u32 %v3357, 4294901760
    %v3359 = vsub.f32 %v3357, %v3358
    %v3360 = vand.u32 %v3359, 4294901760
    %3361 = vmatpush.msra.mxu0 %v3360
    %v3362 = vand.u32 %v2767, 4294901760
    %v3363 = vsub.f32 %v2767, %v3362
    %v3364 = vand.u32 %v3363, 4294901760
    %v3365 = vsub.f32 %v3363, %v3364
    %v3366 = vand.u32 %v3365, 4294901760
    %3367 = vmatpush.msra.mxu0 %v3366
    %v3368 = vand.u32 %v2763, 4294901760
    %v3369 = vsub.f32 %v2763, %v3368
    %v3370 = vand.u32 %v3369, 4294901760
    %v3371 = vsub.f32 %v3369, %v3370
    %v3372 = vand.u32 %v3371, 4294901760
    %3373 = vmatpush.msra.mxu0 %v3372
    %v3374 = vand.u32 %v2759, 4294901760
    %v3375 = vsub.f32 %v2759, %v3374
    %v3376 = vand.u32 %v3375, 4294901760
    %v3377 = vsub.f32 %v3375, %v3376
    %v3378 = vand.u32 %v3377, 4294901760
    %3379 = vmatpush.msra.mxu0 %v3378
    %v3380 = vand.u32 %v2755, 4294901760
    %v3381 = vsub.f32 %v2755, %v3380
    %v3382 = vand.u32 %v3381, 4294901760
    %v3383 = vsub.f32 %v3381, %v3382
    %v3384 = vand.u32 %v3383, 4294901760
    %3385 = vmatpush.msra.mxu0 %v3384
    %v3386 = vand.u32 %v3247, 4294901760
    %3387 = vmatmul.f32.gmra.mxu0 %v3386
    %v3388 = vpop.f32.mrf.mxu0
    %v3389 = vadd.f32 %v3288, %v3388
    %3390 = vdwg.mxu0
    %v3391 = vand.u32 %v2815, 4294901760
    %v3392 = vsub.f32 %v2815, %v3391
    %3393 = vmatpush.msra.mxu0 %v3392
    %v3394 = vand.u32 %v2811, 4294901760
    %v3395 = vsub.f32 %v2811, %v3394
    %3396 = vmatpush.msra.mxu0 %v3395
    %v3397 = vand.u32 %v2807, 4294901760
    %v3398 = vsub.f32 %v2807, %v3397
    %3399 = vmatpush.msra.mxu0 %v3398
    %v3400 = vand.u32 %v2803, 4294901760
    %v3401 = vsub.f32 %v2803, %v3400
    %3402 = vmatpush.msra.mxu0 %v3401
    %v3403 = vand.u32 %v2799, 4294901760
    %v3404 = vsub.f32 %v2799, %v3403
    %3405 = vmatpush.msra.mxu0 %v3404
    %v3406 = vand.u32 %v2795, 4294901760
    %v3407 = vsub.f32 %v2795, %v3406
    %3408 = vmatpush.msra.mxu0 %v3407
    %v3409 = vand.u32 %v2791, 4294901760
    %v3410 = vsub.f32 %v2791, %v3409
    %3411 = vmatpush.msra.mxu0 %v3410
    %v3412 = vand.u32 %v2787, 4294901760
    %v3413 = vsub.f32 %v2787, %v3412
    %3414 = vmatpush.msra.mxu0 %v3413
    %v3415 = vand.u32 %v2783, 4294901760
    %v3416 = vsub.f32 %v2783, %v3415
    %3417 = vmatpush.msra.mxu0 %v3416
    %v3418 = vand.u32 %v2779, 4294901760
    %v3419 = vsub.f32 %v2779, %v3418
    %3420 = vmatpush.msra.mxu0 %v3419
    %v3421 = vand.u32 %v2775, 4294901760
    %v3422 = vsub.f32 %v2775, %v3421
    %3423 = vmatpush.msra.mxu0 %v3422
    %v3424 = vand.u32 %v2771, 4294901760
    %v3425 = vsub.f32 %v2771, %v3424
    %3426 = vmatpush.msra.mxu0 %v3425
    %v3427 = vand.u32 %v2767, 4294901760
    %v3428 = vsub.f32 %v2767, %v3427
    %3429 = vmatpush.msra.mxu0 %v3428
    %v3430 = vand.u32 %v2763, 4294901760
    %v3431 = vsub.f32 %v2763, %v3430
    %3432 = vmatpush.msra.mxu0 %v3431
    %v3433 = vand.u32 %v2759, 4294901760
    %v3434 = vsub.f32 %v2759, %v3433
    %3435 = vmatpush.msra.mxu0 %v3434
    %v3436 = vand.u32 %v2755, 4294901760
    %v3437 = vsub.f32 %v2755, %v3436
    %3438 = vmatpush.msra.mxu0 %v3437
    %v3439 = vand.u32 %v3247, 4294901760
    %v3440 = vsub.f32 %v3247, %v3439
    %3441 = vmatmul.f32.gmra.mxu0 %v3440
    %v3442 = vpop.f32.mrf.mxu0
    %v3443 = vadd.f32 %v3389, %v3442
    %3444 = vdwg.mxu0
    %v3445 = vand.u32 %v2815, 4294901760
    %3446 = vmatpush.msra.mxu0 %v3445
    %v3447 = vand.u32 %v2811, 4294901760
    %3448 = vmatpush.msra.mxu0 %v3447
    %v3449 = vand.u32 %v2807, 4294901760
    %3450 = vmatpush.msra.mxu0 %v3449
    %v3451 = vand.u32 %v2803, 4294901760
    %3452 = vmatpush.msra.mxu0 %v3451
    %v3453 = vand.u32 %v2799, 4294901760
    %3454 = vmatpush.msra.mxu0 %v3453
    %v3455 = vand.u32 %v2795, 4294901760
    %3456 = vmatpush.msra.mxu0 %v3455
    %v3457 = vand.u32 %v2791, 4294901760
    %3458 = vmatpush.msra.mxu0 %v3457
    %v3459 = vand.u32 %v2787, 4294901760
    %3460 = vmatpush.msra.mxu0 %v3459
    %v3461 = vand.u32 %v2783, 4294901760
    %3462 = vmatpush.msra.mxu0 %v3461
    %v3463 = vand.u32 %v2779, 4294901760
    %3464 = vmatpush.msra.mxu0 %v3463
    %v3465 = vand.u32 %v2775, 4294901760
    %3466 = vmatpush.msra.mxu0 %v3465
    %v3467 = vand.u32 %v2771, 4294901760
    %3468 = vmatpush.msra.mxu0 %v3467
    %v3469 = vand.u32 %v2767, 4294901760
    %3470 = vmatpush.msra.mxu0 %v3469
    %v3471 = vand.u32 %v2763, 4294901760
    %3472 = vmatpush.msra.mxu0 %v3471
    %v3473 = vand.u32 %v2759, 4294901760
    %3474 = vmatpush.msra.mxu0 %v3473
    %v3475 = vand.u32 %v2755, 4294901760
    %3476 = vmatpush.msra.mxu0 %v3475
    %v3477 = vand.u32 %v3247, 4294901760
    %v3478 = vsub.f32 %v3247, %v3477
    %v3479 = vand.u32 %v3478, 4294901760
    %3480 = vmatmul.f32.gmra.mxu0 %v3479
    %v3481 = vpop.f32.mrf.mxu0
    %v3482 = vadd.f32 %v3443, %v3481
    %3483 = vdwg.mxu0
    %v3484 = vand.u32 %v2815, 4294901760
    %v3485 = vsub.f32 %v2815, %v3484
    %v3486 = vand.u32 %v3485, 4294901760
    %3487 = vmatpush.msra.mxu0 %v3486
    %v3488 = vand.u32 %v2811, 4294901760
    %v3489 = vsub.f32 %v2811, %v3488
    %v3490 = vand.u32 %v3489, 4294901760
    %3491 = vmatpush.msra.mxu0 %v3490
    %v3492 = vand.u32 %v2807, 4294901760
    %v3493 = vsub.f32 %v2807, %v3492
    %v3494 = vand.u32 %v3493, 4294901760
    %3495 = vmatpush.msra.mxu0 %v3494
    %v3496 = vand.u32 %v2803, 4294901760
    %v3497 = vsub.f32 %v2803, %v3496
    %v3498 = vand.u32 %v3497, 4294901760
    %3499 = vmatpush.msra.mxu0 %v3498
    %v3500 = vand.u32 %v2799, 4294901760
    %v3501 = vsub.f32 %v2799, %v3500
    %v3502 = vand.u32 %v3501, 4294901760
    %3503 = vmatpush.msra.mxu0 %v3502
    %v3504 = vand.u32 %v2795, 4294901760
    %v3505 = vsub.f32 %v2795, %v3504
    %v3506 = vand.u32 %v3505, 4294901760
    %3507 = vmatpush.msra.mxu0 %v3506
    %v3508 = vand.u32 %v2791, 4294901760
    %v3509 = vsub.f32 %v2791, %v3508
    %v3510 = vand.u32 %v3509, 4294901760
    %3511 = vmatpush.msra.mxu0 %v3510
    %v3512 = vand.u32 %v2787, 4294901760
    %v3513 = vsub.f32 %v2787, %v3512
    %v3514 = vand.u32 %v3513, 4294901760
    %3515 = vmatpush.msra.mxu0 %v3514
    %v3516 = vand.u32 %v2783, 4294901760
    %v3517 = vsub.f32 %v2783, %v3516
    %v3518 = vand.u32 %v3517, 4294901760
    %3519 = vmatpush.msra.mxu0 %v3518
    %v3520 = vand.u32 %v2779, 4294901760
    %v3521 = vsub.f32 %v2779, %v3520
    %v3522 = vand.u32 %v3521, 4294901760
    %3523 = vmatpush.msra.mxu0 %v3522
    %v3524 = vand.u32 %v2775, 4294901760
    %v3525 = vsub.f32 %v2775, %v3524
    %v3526 = vand.u32 %v3525, 4294901760
    %3527 = vmatpush.msra.mxu0 %v3526
    %v3528 = vand.u32 %v2771, 4294901760
    %v3529 = vsub.f32 %v2771, %v3528
    %v3530 = vand.u32 %v3529, 4294901760
    %3531 = vmatpush.msra.mxu0 %v3530
    %v3532 = vand.u32 %v2767, 4294901760
    %v3533 = vsub.f32 %v2767, %v3532
    %v3534 = vand.u32 %v3533, 4294901760
    %3535 = vmatpush.msra.mxu0 %v3534
    %v3536 = vand.u32 %v2763, 4294901760
    %v3537 = vsub.f32 %v2763, %v3536
    %v3538 = vand.u32 %v3537, 4294901760
    %3539 = vmatpush.msra.mxu0 %v3538
    %v3540 = vand.u32 %v2759, 4294901760
    %v3541 = vsub.f32 %v2759, %v3540
    %v3542 = vand.u32 %v3541, 4294901760
    %3543 = vmatpush.msra.mxu0 %v3542
    %v3544 = vand.u32 %v2755, 4294901760
    %v3545 = vsub.f32 %v2755, %v3544
    %v3546 = vand.u32 %v3545, 4294901760
    %3547 = vmatpush.msra.mxu0 %v3546
    %v3548 = vand.u32 %v3247, 4294901760
    %3549 = vmatmul.f32.gmra.mxu0 %v3548
    %v3550 = vpop.f32.mrf.mxu0
    %v3551 = vadd.f32 %v3482, %v3550
    %3552 = vdwg.mxu0
    %v3553 = vand.u32 %v2815, 4294901760
    %3554 = vmatpush.msra.mxu0 %v3553
    %v3555 = vand.u32 %v2811, 4294901760
    %3556 = vmatpush.msra.mxu0 %v3555
    %v3557 = vand.u32 %v2807, 4294901760
    %3558 = vmatpush.msra.mxu0 %v3557
    %v3559 = vand.u32 %v2803, 4294901760
    %3560 = vmatpush.msra.mxu0 %v3559
    %v3561 = vand.u32 %v2799, 4294901760
    %3562 = vmatpush.msra.mxu0 %v3561
    %v3563 = vand.u32 %v2795, 4294901760
    %3564 = vmatpush.msra.mxu0 %v3563
    %v3565 = vand.u32 %v2791, 4294901760
    %3566 = vmatpush.msra.mxu0 %v3565
    %v3567 = vand.u32 %v2787, 4294901760
    %3568 = vmatpush.msra.mxu0 %v3567
    %v3569 = vand.u32 %v2783, 4294901760
    %3570 = vmatpush.msra.mxu0 %v3569
    %v3571 = vand.u32 %v2779, 4294901760
    %3572 = vmatpush.msra.mxu0 %v3571
    %v3573 = vand.u32 %v2775, 4294901760
    %3574 = vmatpush.msra.mxu0 %v3573
    %v3575 = vand.u32 %v2771, 4294901760
    %3576 = vmatpush.msra.mxu0 %v3575
    %v3577 = vand.u32 %v2767, 4294901760
    %3578 = vmatpush.msra.mxu0 %v3577
    %v3579 = vand.u32 %v2763, 4294901760
    %3580 = vmatpush.msra.mxu0 %v3579
    %v3581 = vand.u32 %v2759, 4294901760
    %3582 = vmatpush.msra.mxu0 %v3581
    %v3583 = vand.u32 %v2755, 4294901760
    %3584 = vmatpush.msra.mxu0 %v3583
    %v3585 = vand.u32 %v3247, 4294901760
    %3586 = vmatmul.f32.gmra.mxu0 %v3585
    %v3587 = vpop.f32.mrf.mxu0
    %v3588 = vadd.f32 %v3551, %v3587
    %3589 = vdwg.mxu0
    %v3590 = vand.u32 %v1642, 4294901760
    %3591 = vmatpush.xpose.msra.mxu0 %v3590
    %v3592 = vand.u32 %v1638, 4294901760
    %3593 = vmatpush.xpose.msra.mxu0 %v3592
    %v3594 = vand.u32 %v1634, 4294901760
    %3595 = vmatpush.xpose.msra.mxu0 %v3594
    %v3596 = vand.u32 %v1630, 4294901760
    %3597 = vmatpush.xpose.msra.mxu0 %v3596
    %v3598 = vand.u32 %v1626, 4294901760
    %3599 = vmatpush.xpose.msra.mxu0 %v3598
    %v3600 = vand.u32 %v1622, 4294901760
    %3601 = vmatpush.xpose.msra.mxu0 %v3600
    %v3602 = vand.u32 %v1618, 4294901760
    %3603 = vmatpush.xpose.msra.mxu0 %v3602
    %v3604 = vand.u32 %v1614, 4294901760
    %3605 = vmatpush.xpose.msra.mxu0 %v3604
    %v3606 = vand.u32 %v1610, 4294901760
    %3607 = vmatpush.xpose.msra.mxu0 %v3606
    %v3608 = vand.u32 %v1606, 4294901760
    %3609 = vmatpush.xpose.msra.mxu0 %v3608
    %v3610 = vand.u32 %v1602, 4294901760
    %3611 = vmatpush.xpose.msra.mxu0 %v3610
    %v3612 = vand.u32 %v1598, 4294901760
    %3613 = vmatpush.xpose.msra.mxu0 %v3612
    %v3614 = vand.u32 %v1594, 4294901760
    %3615 = vmatpush.xpose.msra.mxu0 %v3614
    %v3616 = vand.u32 %v1590, 4294901760
    %3617 = vmatpush.xpose.msra.mxu0 %v3616
    %v3618 = vand.u32 %v1586, 4294901760
    %3619 = vmatpush.xpose.msra.mxu0 %v3618
    %v3620 = vand.u32 %v1582, 4294901760
    %3621 = vmatpush.xpose.msra.mxu0 %v3620
    %v3622 = vand.u32 %v254, 4294901760
    %v3623 = vsub.f32 %v254, %v3622
    %v3624 = vand.u32 %v3623, 4294901760
    %v3625 = vsub.f32 %v3623, %v3624
    %v3626 = vand.u32 %v3625, 4294901760
    %3627 = vmatmul.f32.gmra.mxu0 %v3626
    %v3628 = vpop.f32.mrf.mxu0
    %v3629 = vadd.f32 0.0, %v3628
    %3630 = vdwg.mxu0
    %v3631 = vand.u32 %v1642, 4294901760
    %v3632 = vsub.f32 %v1642, %v3631
    %v3633 = vand.u32 %v3632, 4294901760
    %v3634 = vsub.f32 %v3632, %v3633
    %v3635 = vand.u32 %v3634, 4294901760
    %3636 = vmatpush.xpose.msra.mxu0 %v3635
    %v3637 = vand.u32 %v1638, 4294901760
    %v3638 = vsub.f32 %v1638, %v3637
    %v3639 = vand.u32 %v3638, 4294901760
    %v3640 = vsub.f32 %v3638, %v3639
    %v3641 = vand.u32 %v3640, 4294901760
    %3642 = vmatpush.xpose.msra.mxu0 %v3641
    %v3643 = vand.u32 %v1634, 4294901760
    %v3644 = vsub.f32 %v1634, %v3643
    %v3645 = vand.u32 %v3644, 4294901760
    %v3646 = vsub.f32 %v3644, %v3645
    %v3647 = vand.u32 %v3646, 4294901760
    %3648 = vmatpush.xpose.msra.mxu0 %v3647
    %v3649 = vand.u32 %v1630, 4294901760
    %v3650 = vsub.f32 %v1630, %v3649
    %v3651 = vand.u32 %v3650, 4294901760
    %v3652 = vsub.f32 %v3650, %v3651
    %v3653 = vand.u32 %v3652, 4294901760
    %3654 = vmatpush.xpose.msra.mxu0 %v3653
    %v3655 = vand.u32 %v1626, 4294901760
    %v3656 = vsub.f32 %v1626, %v3655
    %v3657 = vand.u32 %v3656, 4294901760
    %v3658 = vsub.f32 %v3656, %v3657
    %v3659 = vand.u32 %v3658, 4294901760
    %3660 = vmatpush.xpose.msra.mxu0 %v3659
    %v3661 = vand.u32 %v1622, 4294901760
    %v3662 = vsub.f32 %v1622, %v3661
    %v3663 = vand.u32 %v3662, 4294901760
    %v3664 = vsub.f32 %v3662, %v3663
    %v3665 = vand.u32 %v3664, 4294901760
    %3666 = vmatpush.xpose.msra.mxu0 %v3665
    %v3667 = vand.u32 %v1618, 4294901760
    %v3668 = vsub.f32 %v1618, %v3667
    %v3669 = vand.u32 %v3668, 4294901760
    %v3670 = vsub.f32 %v3668, %v3669
    %v3671 = vand.u32 %v3670, 4294901760
    %3672 = vmatpush.xpose.msra.mxu0 %v3671
    %v3673 = vand.u32 %v1614, 4294901760
    %v3674 = vsub.f32 %v1614, %v3673
    %v3675 = vand.u32 %v3674, 4294901760
    %v3676 = vsub.f32 %v3674, %v3675
    %v3677 = vand.u32 %v3676, 4294901760
    %3678 = vmatpush.xpose.msra.mxu0 %v3677
    %v3679 = vand.u32 %v1610, 4294901760
    %v3680 = vsub.f32 %v1610, %v3679
    %v3681 = vand.u32 %v3680, 4294901760
    %v3682 = vsub.f32 %v3680, %v3681
    %v3683 = vand.u32 %v3682, 4294901760
    %3684 = vmatpush.xpose.msra.mxu0 %v3683
    %v3685 = vand.u32 %v1606, 4294901760
    %v3686 = vsub.f32 %v1606, %v3685
    %v3687 = vand.u32 %v3686, 4294901760
    %v3688 = vsub.f32 %v3686, %v3687
    %v3689 = vand.u32 %v3688, 4294901760
    %3690 = vmatpush.xpose.msra.mxu0 %v3689
    %v3691 = vand.u32 %v1602, 4294901760
    %v3692 = vsub.f32 %v1602, %v3691
    %v3693 = vand.u32 %v3692, 4294901760
    %v3694 = vsub.f32 %v3692, %v3693
    %v3695 = vand.u32 %v3694, 4294901760
    %3696 = vmatpush.xpose.msra.mxu0 %v3695
    %v3697 = vand.u32 %v1598, 4294901760
    %v3698 = vsub.f32 %v1598, %v3697
    %v3699 = vand.u32 %v3698, 4294901760
    %v3700 = vsub.f32 %v3698, %v3699
    %v3701 = vand.u32 %v3700, 4294901760
    %3702 = vmatpush.xpose.msra.mxu0 %v3701
    %v3703 = vand.u32 %v1594, 4294901760
    %v3704 = vsub.f32 %v1594, %v3703
    %v3705 = vand.u32 %v3704, 4294901760
    %v3706 = vsub.f32 %v3704, %v3705
    %v3707 = vand.u32 %v3706, 4294901760
    %3708 = vmatpush.xpose.msra.mxu0 %v3707
    %v3709 = vand.u32 %v1590, 4294901760
    %v3710 = vsub.f32 %v1590, %v3709
    %v3711 = vand.u32 %v3710, 4294901760
    %v3712 = vsub.f32 %v3710, %v3711
    %v3713 = vand.u32 %v3712, 4294901760
    %3714 = vmatpush.xpose.msra.mxu0 %v3713
    %v3715 = vand.u32 %v1586, 4294901760
    %v3716 = vsub.f32 %v1586, %v3715
    %v3717 = vand.u32 %v3716, 4294901760
    %v3718 = vsub.f32 %v3716, %v3717
    %v3719 = vand.u32 %v3718, 4294901760
    %3720 = vmatpush.xpose.msra.mxu0 %v3719
    %v3721 = vand.u32 %v1582, 4294901760
    %v3722 = vsub.f32 %v1582, %v3721
    %v3723 = vand.u32 %v3722, 4294901760
    %v3724 = vsub.f32 %v3722, %v3723
    %v3725 = vand.u32 %v3724, 4294901760
    %3726 = vmatpush.xpose.msra.mxu0 %v3725
    %v3727 = vand.u32 %v254, 4294901760
    %3728 = vmatmul.f32.gmra.mxu0 %v3727
    %v3729 = vpop.f32.mrf.mxu0
    %v3730 = vadd.f32 %v3629, %v3729
    %3731 = vdwg.mxu0
    %v3732 = vand.u32 %v1642, 4294901760
    %v3733 = vsub.f32 %v1642, %v3732
    %3734 = vmatpush.xpose.msra.mxu0 %v3733
    %v3735 = vand.u32 %v1638, 4294901760
    %v3736 = vsub.f32 %v1638, %v3735
    %3737 = vmatpush.xpose.msra.mxu0 %v3736
    %v3738 = vand.u32 %v1634, 4294901760
    %v3739 = vsub.f32 %v1634, %v3738
    %3740 = vmatpush.xpose.msra.mxu0 %v3739
    %v3741 = vand.u32 %v1630, 4294901760
    %v3742 = vsub.f32 %v1630, %v3741
    %3743 = vmatpush.xpose.msra.mxu0 %v3742
    %v3744 = vand.u32 %v1626, 4294901760
    %v3745 = vsub.f32 %v1626, %v3744
    %3746 = vmatpush.xpose.msra.mxu0 %v3745
    %v3747 = vand.u32 %v1622, 4294901760
    %v3748 = vsub.f32 %v1622, %v3747
    %3749 = vmatpush.xpose.msra.mxu0 %v3748
    %v3750 = vand.u32 %v1618, 4294901760
    %v3751 = vsub.f32 %v1618, %v3750
    %3752 = vmatpush.xpose.msra.mxu0 %v3751
    %v3753 = vand.u32 %v1614, 4294901760
    %v3754 = vsub.f32 %v1614, %v3753
    %3755 = vmatpush.xpose.msra.mxu0 %v3754
    %v3756 = vand.u32 %v1610, 4294901760
    %v3757 = vsub.f32 %v1610, %v3756
    %3758 = vmatpush.xpose.msra.mxu0 %v3757
    %v3759 = vand.u32 %v1606, 4294901760
    %v3760 = vsub.f32 %v1606, %v3759
    %3761 = vmatpush.xpose.msra.mxu0 %v3760
    %v3762 = vand.u32 %v1602, 4294901760
    %v3763 = vsub.f32 %v1602, %v3762
    %3764 = vmatpush.xpose.msra.mxu0 %v3763
    %v3765 = vand.u32 %v1598, 4294901760
    %v3766 = vsub.f32 %v1598, %v3765
    %3767 = vmatpush.xpose.msra.mxu0 %v3766
    %v3768 = vand.u32 %v1594, 4294901760
    %v3769 = vsub.f32 %v1594, %v3768
    %3770 = vmatpush.xpose.msra.mxu0 %v3769
    %v3771 = vand.u32 %v1590, 4294901760
    %v3772 = vsub.f32 %v1590, %v3771
    %3773 = vmatpush.xpose.msra.mxu0 %v3772
    %v3774 = vand.u32 %v1586, 4294901760
    %v3775 = vsub.f32 %v1586, %v3774
    %3776 = vmatpush.xpose.msra.mxu0 %v3775
    %v3777 = vand.u32 %v1582, 4294901760
    %v3778 = vsub.f32 %v1582, %v3777
    %3779 = vmatpush.xpose.msra.mxu0 %v3778
    %v3780 = vand.u32 %v254, 4294901760
    %v3781 = vsub.f32 %v254, %v3780
    %3782 = vmatmul.f32.gmra.mxu0 %v3781
    %v3783 = vpop.f32.mrf.mxu0
    %v3784 = vadd.f32 %v3730, %v3783
    %3785 = vdwg.mxu0
    %v3786 = vand.u32 %v1642, 4294901760
    %3787 = vmatpush.xpose.msra.mxu0 %v3786
    %v3788 = vand.u32 %v1638, 4294901760
    %3789 = vmatpush.xpose.msra.mxu0 %v3788
    %v3790 = vand.u32 %v1634, 4294901760
    %3791 = vmatpush.xpose.msra.mxu0 %v3790
    %v3792 = vand.u32 %v1630, 4294901760
    %3793 = vmatpush.xpose.msra.mxu0 %v3792
    %v3794 = vand.u32 %v1626, 4294901760
    %3795 = vmatpush.xpose.msra.mxu0 %v3794
    %v3796 = vand.u32 %v1622, 4294901760
    %3797 = vmatpush.xpose.msra.mxu0 %v3796
    %v3798 = vand.u32 %v1618, 4294901760
    %3799 = vmatpush.xpose.msra.mxu0 %v3798
    %v3800 = vand.u32 %v1614, 4294901760
    %3801 = vmatpush.xpose.msra.mxu0 %v3800
    %v3802 = vand.u32 %v1610, 4294901760
    %3803 = vmatpush.xpose.msra.mxu0 %v3802
    %v3804 = vand.u32 %v1606, 4294901760
    %3805 = vmatpush.xpose.msra.mxu0 %v3804
    %v3806 = vand.u32 %v1602, 4294901760
    %3807 = vmatpush.xpose.msra.mxu0 %v3806
    %v3808 = vand.u32 %v1598, 4294901760
    %3809 = vmatpush.xpose.msra.mxu0 %v3808
    %v3810 = vand.u32 %v1594, 4294901760
    %3811 = vmatpush.xpose.msra.mxu0 %v3810
    %v3812 = vand.u32 %v1590, 4294901760
    %3813 = vmatpush.xpose.msra.mxu0 %v3812
    %v3814 = vand.u32 %v1586, 4294901760
    %3815 = vmatpush.xpose.msra.mxu0 %v3814
    %v3816 = vand.u32 %v1582, 4294901760
    %3817 = vmatpush.xpose.msra.mxu0 %v3816
    %v3818 = vand.u32 %v254, 4294901760
    %v3819 = vsub.f32 %v254, %v3818
    %v3820 = vand.u32 %v3819, 4294901760
    %3821 = vmatmul.f32.gmra.mxu0 %v3820
    %v3822 = vpop.f32.mrf.mxu0
    %v3823 = vadd.f32 %v3784, %v3822
    %3824 = vdwg.mxu0
    %v3825 = vand.u32 %v1642, 4294901760
    %v3826 = vsub.f32 %v1642, %v3825
    %v3827 = vand.u32 %v3826, 4294901760
    %3828 = vmatpush.xpose.msra.mxu0 %v3827
    %v3829 = vand.u32 %v1638, 4294901760
    %v3830 = vsub.f32 %v1638, %v3829
    %v3831 = vand.u32 %v3830, 4294901760
    %3832 = vmatpush.xpose.msra.mxu0 %v3831
    %v3833 = vand.u32 %v1634, 4294901760
    %v3834 = vsub.f32 %v1634, %v3833
    %v3835 = vand.u32 %v3834, 4294901760
    %3836 = vmatpush.xpose.msra.mxu0 %v3835
    %v3837 = vand.u32 %v1630, 4294901760
    %v3838 = vsub.f32 %v1630, %v3837
    %v3839 = vand.u32 %v3838, 4294901760
    %3840 = vmatpush.xpose.msra.mxu0 %v3839
    %v3841 = vand.u32 %v1626, 4294901760
    %v3842 = vsub.f32 %v1626, %v3841
    %v3843 = vand.u32 %v3842, 4294901760
    %3844 = vmatpush.xpose.msra.mxu0 %v3843
    %v3845 = vand.u32 %v1622, 4294901760
    %v3846 = vsub.f32 %v1622, %v3845
    %v3847 = vand.u32 %v3846, 4294901760
    %3848 = vmatpush.xpose.msra.mxu0 %v3847
    %v3849 = vand.u32 %v1618, 4294901760
    %v3850 = vsub.f32 %v1618, %v3849
    %v3851 = vand.u32 %v3850, 4294901760
    %3852 = vmatpush.xpose.msra.mxu0 %v3851
    %v3853 = vand.u32 %v1614, 4294901760
    %v3854 = vsub.f32 %v1614, %v3853
    %v3855 = vand.u32 %v3854, 4294901760
    %3856 = vmatpush.xpose.msra.mxu0 %v3855
    %v3857 = vand.u32 %v1610, 4294901760
    %v3858 = vsub.f32 %v1610, %v3857
    %v3859 = vand.u32 %v3858, 4294901760
    %3860 = vmatpush.xpose.msra.mxu0 %v3859
    %v3861 = vand.u32 %v1606, 4294901760
    %v3862 = vsub.f32 %v1606, %v3861
    %v3863 = vand.u32 %v3862, 4294901760
    %3864 = vmatpush.xpose.msra.mxu0 %v3863
    %v3865 = vand.u32 %v1602, 4294901760
    %v3866 = vsub.f32 %v1602, %v3865
    %v3867 = vand.u32 %v3866, 4294901760
    %3868 = vmatpush.xpose.msra.mxu0 %v3867
    %v3869 = vand.u32 %v1598, 4294901760
    %v3870 = vsub.f32 %v1598, %v3869
    %v3871 = vand.u32 %v3870, 4294901760
    %3872 = vmatpush.xpose.msra.mxu0 %v3871
    %v3873 = vand.u32 %v1594, 4294901760
    %v3874 = vsub.f32 %v1594, %v3873
    %v3875 = vand.u32 %v3874, 4294901760
    %3876 = vmatpush.xpose.msra.mxu0 %v3875
    %v3877 = vand.u32 %v1590, 4294901760
    %v3878 = vsub.f32 %v1590, %v3877
    %v3879 = vand.u32 %v3878, 4294901760
    %3880 = vmatpush.xpose.msra.mxu0 %v3879
    %v3881 = vand.u32 %v1586, 4294901760
    %v3882 = vsub.f32 %v1586, %v3881
    %v3883 = vand.u32 %v3882, 4294901760
    %3884 = vmatpush.xpose.msra.mxu0 %v3883
    %v3885 = vand.u32 %v1582, 4294901760
    %v3886 = vsub.f32 %v1582, %v3885
    %v3887 = vand.u32 %v3886, 4294901760
    %3888 = vmatpush.xpose.msra.mxu0 %v3887
    %v3889 = vand.u32 %v254, 4294901760
    %3890 = vmatmul.f32.gmra.mxu0 %v3889
    %v3891 = vpop.f32.mrf.mxu0
    %v3892 = vadd.f32 %v3823, %v3891
    %3893 = vdwg.mxu0
    %v3894 = vand.u32 %v1642, 4294901760
    %3895 = vmatpush.xpose.msra.mxu0 %v3894
    %v3896 = vand.u32 %v1638, 4294901760
    %3897 = vmatpush.xpose.msra.mxu0 %v3896
    %v3898 = vand.u32 %v1634, 4294901760
    %3899 = vmatpush.xpose.msra.mxu0 %v3898
    %v3900 = vand.u32 %v1630, 4294901760
    %3901 = vmatpush.xpose.msra.mxu0 %v3900
    %v3902 = vand.u32 %v1626, 4294901760
    %3903 = vmatpush.xpose.msra.mxu0 %v3902
    %v3904 = vand.u32 %v1622, 4294901760
    %3905 = vmatpush.xpose.msra.mxu0 %v3904
    %v3906 = vand.u32 %v1618, 4294901760
    %3907 = vmatpush.xpose.msra.mxu0 %v3906
    %v3908 = vand.u32 %v1614, 4294901760
    %3909 = vmatpush.xpose.msra.mxu0 %v3908
    %v3910 = vand.u32 %v1610, 4294901760
    %3911 = vmatpush.xpose.msra.mxu0 %v3910
    %v3912 = vand.u32 %v1606, 4294901760
    %3913 = vmatpush.xpose.msra.mxu0 %v3912
    %v3914 = vand.u32 %v1602, 4294901760
    %3915 = vmatpush.xpose.msra.mxu0 %v3914
    %v3916 = vand.u32 %v1598, 4294901760
    %3917 = vmatpush.xpose.msra.mxu0 %v3916
    %v3918 = vand.u32 %v1594, 4294901760
    %3919 = vmatpush.xpose.msra.mxu0 %v3918
    %v3920 = vand.u32 %v1590, 4294901760
    %3921 = vmatpush.xpose.msra.mxu0 %v3920
    %v3922 = vand.u32 %v1586, 4294901760
    %3923 = vmatpush.xpose.msra.mxu0 %v3922
    %v3924 = vand.u32 %v1582, 4294901760
    %3925 = vmatpush.xpose.msra.mxu0 %v3924
    %v3926 = vand.u32 %v254, 4294901760
    %3927 = vmatmul.f32.gmra.mxu0 %v3926
    %v3928 = vpop.f32.mrf.mxu0
    %v3929 = vadd.f32 %v3892, %v3928
    %3930 = vdwg.mxu0
    %v3931 = vsel %vm2883, %v3929, -1e+09
    %3932 = vmax.xlane.f32.xlu0 %v3931
    %v3933 = vpop.xlane.xlu0 %3932
    %v3934 = vsub.f32 %v3931, %v3933
    %v3935 = vmul.f32 %v3934, 1.442695
    %v3936 = vpow.pop %v3935
    %3937 = vadd.xlane.f32.xlu0 %v3936
    %v3938 = vpop.xlane.xlu0 %3937
    %v3939 = vrcp.pop %v3938
    %v3940 = vmul.f32 %v3938, %v3939
    %v3941 = vsub.f32 1.0, %v3940
    %v3942 = vmul.f32 %v3939, %v3941
    %v3943 = vadd.f32 %v3939, %v3942
    %vm3944 = vweird.f32 %v3938
    %vm3945 = vweird.f32 %v3939
    %vm3946 = vmor %vm3944, %vm3945
    %v3947 = vsel %vm3946, %v3939, %v3943
    %v3948 = vand.u32 2147483647, %v3938
    %vm3949 = vcmp.eq.f32.partialorder %v3948, 8.507059e+37
    %v3950 = vand.u32 %v3938, 2147483648
    %v3951 = vor.u32 1.1754944e-38, %v3950
    %v3952 = vsel %vm3949, %v3951, %v3947
    %v3953 = vmul.f32 %v3936, %v3952
    %s3954 = scalar_lea.vmem [#allocation4], 8
    %3955 = vst [vmem:[%s3954] sm:$0xff] %v3953
    %v3956 = vand.u32 %v2879, 4294901760
    %3957 = vmatpush.msra.mxu0 %v3956
    %v3958 = vand.u32 %v2875, 4294901760
    %3959 = vmatpush.msra.mxu0 %v3958
    %v3960 = vand.u32 %v2871, 4294901760
    %3961 = vmatpush.msra.mxu0 %v3960
    %v3962 = vand.u32 %v2867, 4294901760
    %3963 = vmatpush.msra.mxu0 %v3962
    %v3964 = vand.u32 %v2863, 4294901760
    %3965 = vmatpush.msra.mxu0 %v3964
    %v3966 = vand.u32 %v2859, 4294901760
    %3967 = vmatpush.msra.mxu0 %v3966
    %v3968 = vand.u32 %v2855, 4294901760
    %3969 = vmatpush.msra.mxu0 %v3968
    %v3970 = vand.u32 %v2851, 4294901760
    %3971 = vmatpush.msra.mxu0 %v3970
    %v3972 = vand.u32 %v2847, 4294901760
    %3973 = vmatpush.msra.mxu0 %v3972
    %v3974 = vand.u32 %v2843, 4294901760
    %3975 = vmatpush.msra.mxu0 %v3974
    %v3976 = vand.u32 %v2839, 4294901760
    %3977 = vmatpush.msra.mxu0 %v3976
    %v3978 = vand.u32 %v2835, 4294901760
    %3979 = vmatpush.msra.mxu0 %v3978
    %v3980 = vand.u32 %v2831, 4294901760
    %3981 = vmatpush.msra.mxu0 %v3980
    %v3982 = vand.u32 %v2827, 4294901760
    %3983 = vmatpush.msra.mxu0 %v3982
    %v3984 = vand.u32 %v2823, 4294901760
    %3985 = vmatpush.msra.mxu0 %v3984
    %v3986 = vand.u32 %v2819, 4294901760
    %3987 = vmatpush.msra.mxu0 %v3986
    %v3988 = vand.u32 %v3953, 4294901760
    %v3989 = vsub.f32 %v3953, %v3988
    %v3990 = vand.u32 %v3989, 4294901760
    %v3991 = vsub.f32 %v3989, %v3990
    %v3992 = vand.u32 %v3991, 4294901760
    %3993 = vmatmul.f32.gmra.mxu0 %v3992
    %v3994 = vpop.f32.mrf.mxu0
    %v3995 = vadd.f32 0.0, %v3994
    %3996 = vdwg.mxu0
    %v3997 = vand.u32 %v2879, 4294901760
    %v3998 = vsub.f32 %v2879, %v3997
    %v3999 = vand.u32 %v3998, 4294901760
    %v4000 = vsub.f32 %v3998, %v3999
    %v4001 = vand.u32 %v4000, 4294901760
    %4002 = vmatpush.msra.mxu0 %v4001
    %v4003 = vand.u32 %v2875, 4294901760
    %v4004 = vsub.f32 %v2875, %v4003
    %v4005 = vand.u32 %v4004, 4294901760
    %v4006 = vsub.f32 %v4004, %v4005
    %v4007 = vand.u32 %v4006, 4294901760
    %4008 = vmatpush.msra.mxu0 %v4007
    %v4009 = vand.u32 %v2871, 4294901760
    %v4010 = vsub.f32 %v2871, %v4009
    %v4011 = vand.u32 %v4010, 4294901760
    %v4012 = vsub.f32 %v4010, %v4011
    %v4013 = vand.u32 %v4012, 4294901760
    %4014 = vmatpush.msra.mxu0 %v4013
    %v4015 = vand.u32 %v2867, 4294901760
    %v4016 = vsub.f32 %v2867, %v4015
    %v4017 = vand.u32 %v4016, 4294901760
    %v4018 = vsub.f32 %v4016, %v4017
    %v4019 = vand.u32 %v4018, 4294901760
    %4020 = vmatpush.msra.mxu0 %v4019
    %v4021 = vand.u32 %v2863, 4294901760
    %v4022 = vsub.f32 %v2863, %v4021
    %v4023 = vand.u32 %v4022, 4294901760
    %v4024 = vsub.f32 %v4022, %v4023
    %v4025 = vand.u32 %v4024, 4294901760
    %4026 = vmatpush.msra.mxu0 %v4025
    %v4027 = vand.u32 %v2859, 4294901760
    %v4028 = vsub.f32 %v2859, %v4027
    %v4029 = vand.u32 %v4028, 4294901760
    %v4030 = vsub.f32 %v4028, %v4029
    %v4031 = vand.u32 %v4030, 4294901760
    %4032 = vmatpush.msra.mxu0 %v4031
    %v4033 = vand.u32 %v2855, 4294901760
    %v4034 = vsub.f32 %v2855, %v4033
    %v4035 = vand.u32 %v4034, 4294901760
    %v4036 = vsub.f32 %v4034, %v4035
    %v4037 = vand.u32 %v4036, 4294901760
    %4038 = vmatpush.msra.mxu0 %v4037
    %v4039 = vand.u32 %v2851, 4294901760
    %v4040 = vsub.f32 %v2851, %v4039
    %v4041 = vand.u32 %v4040, 4294901760
    %v4042 = vsub.f32 %v4040, %v4041
    %v4043 = vand.u32 %v4042, 4294901760
    %4044 = vmatpush.msra.mxu0 %v4043
    %v4045 = vand.u32 %v2847, 4294901760
    %v4046 = vsub.f32 %v2847, %v4045
    %v4047 = vand.u32 %v4046, 4294901760
    %v4048 = vsub.f32 %v4046, %v4047
    %v4049 = vand.u32 %v4048, 4294901760
    %4050 = vmatpush.msra.mxu0 %v4049
    %v4051 = vand.u32 %v2843, 4294901760
    %v4052 = vsub.f32 %v2843, %v4051
    %v4053 = vand.u32 %v4052, 4294901760
    %v4054 = vsub.f32 %v4052, %v4053
    %v4055 = vand.u32 %v4054, 4294901760
    %4056 = vmatpush.msra.mxu0 %v4055
    %v4057 = vand.u32 %v2839, 4294901760
    %v4058 = vsub.f32 %v2839, %v4057
    %v4059 = vand.u32 %v4058, 4294901760
    %v4060 = vsub.f32 %v4058, %v4059
    %v4061 = vand.u32 %v4060, 4294901760
    %4062 = vmatpush.msra.mxu0 %v4061
    %v4063 = vand.u32 %v2835, 4294901760
    %v4064 = vsub.f32 %v2835, %v4063
    %v4065 = vand.u32 %v4064, 4294901760
    %v4066 = vsub.f32 %v4064, %v4065
    %v4067 = vand.u32 %v4066, 4294901760
    %4068 = vmatpush.msra.mxu0 %v4067
    %v4069 = vand.u32 %v2831, 4294901760
    %v4070 = vsub.f32 %v2831, %v4069
    %v4071 = vand.u32 %v4070, 4294901760
    %v4072 = vsub.f32 %v4070, %v4071
    %v4073 = vand.u32 %v4072, 4294901760
    %4074 = vmatpush.msra.mxu0 %v4073
    %v4075 = vand.u32 %v2827, 4294901760
    %v4076 = vsub.f32 %v2827, %v4075
    %v4077 = vand.u32 %v4076, 4294901760
    %v4078 = vsub.f32 %v4076, %v4077
    %v4079 = vand.u32 %v4078, 4294901760
    %4080 = vmatpush.msra.mxu0 %v4079
    %v4081 = vand.u32 %v2823, 4294901760
    %v4082 = vsub.f32 %v2823, %v4081
    %v4083 = vand.u32 %v4082, 4294901760
    %v4084 = vsub.f32 %v4082, %v4083
    %v4085 = vand.u32 %v4084, 4294901760
    %4086 = vmatpush.msra.mxu0 %v4085
    %v4087 = vand.u32 %v2819, 4294901760
    %v4088 = vsub.f32 %v2819, %v4087
    %v4089 = vand.u32 %v4088, 4294901760
    %v4090 = vsub.f32 %v4088, %v4089
    %v4091 = vand.u32 %v4090, 4294901760
    %4092 = vmatpush.msra.mxu0 %v4091
    %v4093 = vand.u32 %v3953, 4294901760
    %4094 = vmatmul.f32.gmra.mxu0 %v4093
    %v4095 = vpop.f32.mrf.mxu0
    %v4096 = vadd.f32 %v3995, %v4095
    %4097 = vdwg.mxu0
    %v4098 = vand.u32 %v2879, 4294901760
    %v4099 = vsub.f32 %v2879, %v4098
    %4100 = vmatpush.msra.mxu0 %v4099
    %v4101 = vand.u32 %v2875, 4294901760
    %v4102 = vsub.f32 %v2875, %v4101
    %4103 = vmatpush.msra.mxu0 %v4102
    %v4104 = vand.u32 %v2871, 4294901760
    %v4105 = vsub.f32 %v2871, %v4104
    %4106 = vmatpush.msra.mxu0 %v4105
    %v4107 = vand.u32 %v2867, 4294901760
    %v4108 = vsub.f32 %v2867, %v4107
    %4109 = vmatpush.msra.mxu0 %v4108
    %v4110 = vand.u32 %v2863, 4294901760
    %v4111 = vsub.f32 %v2863, %v4110
    %4112 = vmatpush.msra.mxu0 %v4111
    %v4113 = vand.u32 %v2859, 4294901760
    %v4114 = vsub.f32 %v2859, %v4113
    %4115 = vmatpush.msra.mxu0 %v4114
    %v4116 = vand.u32 %v2855, 4294901760
    %v4117 = vsub.f32 %v2855, %v4116
    %4118 = vmatpush.msra.mxu0 %v4117
    %v4119 = vand.u32 %v2851, 4294901760
    %v4120 = vsub.f32 %v2851, %v4119
    %4121 = vmatpush.msra.mxu0 %v4120
    %v4122 = vand.u32 %v2847, 4294901760
    %v4123 = vsub.f32 %v2847, %v4122
    %4124 = vmatpush.msra.mxu0 %v4123
    %v4125 = vand.u32 %v2843, 4294901760
    %v4126 = vsub.f32 %v2843, %v4125
    %4127 = vmatpush.msra.mxu0 %v4126
    %v4128 = vand.u32 %v2839, 4294901760
    %v4129 = vsub.f32 %v2839, %v4128
    %4130 = vmatpush.msra.mxu0 %v4129
    %v4131 = vand.u32 %v2835, 4294901760
    %v4132 = vsub.f32 %v2835, %v4131
    %4133 = vmatpush.msra.mxu0 %v4132
    %v4134 = vand.u32 %v2831, 4294901760
    %v4135 = vsub.f32 %v2831, %v4134
    %4136 = vmatpush.msra.mxu0 %v4135
    %v4137 = vand.u32 %v2827, 4294901760
    %v4138 = vsub.f32 %v2827, %v4137
    %4139 = vmatpush.msra.mxu0 %v4138
    %v4140 = vand.u32 %v2823, 4294901760
    %v4141 = vsub.f32 %v2823, %v4140
    %4142 = vmatpush.msra.mxu0 %v4141
    %v4143 = vand.u32 %v2819, 4294901760
    %v4144 = vsub.f32 %v2819, %v4143
    %4145 = vmatpush.msra.mxu0 %v4144
    %v4146 = vand.u32 %v3953, 4294901760
    %v4147 = vsub.f32 %v3953, %v4146
    %4148 = vmatmul.f32.gmra.mxu0 %v4147
    %v4149 = vpop.f32.mrf.mxu0
    %v4150 = vadd.f32 %v4096, %v4149
    %4151 = vdwg.mxu0
    %v4152 = vand.u32 %v2879, 4294901760
    %4153 = vmatpush.msra.mxu0 %v4152
    %v4154 = vand.u32 %v2875, 4294901760
    %4155 = vmatpush.msra.mxu0 %v4154
    %v4156 = vand.u32 %v2871, 4294901760
    %4157 = vmatpush.msra.mxu0 %v4156
    %v4158 = vand.u32 %v2867, 4294901760
    %4159 = vmatpush.msra.mxu0 %v4158
    %v4160 = vand.u32 %v2863, 4294901760
    %4161 = vmatpush.msra.mxu0 %v4160
    %v4162 = vand.u32 %v2859, 4294901760
    %4163 = vmatpush.msra.mxu0 %v4162
    %v4164 = vand.u32 %v2855, 4294901760
    %4165 = vmatpush.msra.mxu0 %v4164
    %v4166 = vand.u32 %v2851, 4294901760
    %4167 = vmatpush.msra.mxu0 %v4166
    %v4168 = vand.u32 %v2847, 4294901760
    %4169 = vmatpush.msra.mxu0 %v4168
    %v4170 = vand.u32 %v2843, 4294901760
    %4171 = vmatpush.msra.mxu0 %v4170
    %v4172 = vand.u32 %v2839, 4294901760
    %4173 = vmatpush.msra.mxu0 %v4172
    %v4174 = vand.u32 %v2835, 4294901760
    %4175 = vmatpush.msra.mxu0 %v4174
    %v4176 = vand.u32 %v2831, 4294901760
    %4177 = vmatpush.msra.mxu0 %v4176
    %v4178 = vand.u32 %v2827, 4294901760
    %4179 = vmatpush.msra.mxu0 %v4178
    %v4180 = vand.u32 %v2823, 4294901760
    %4181 = vmatpush.msra.mxu0 %v4180
    %v4182 = vand.u32 %v2819, 4294901760
    %4183 = vmatpush.msra.mxu0 %v4182
    %v4184 = vand.u32 %v3953, 4294901760
    %v4185 = vsub.f32 %v3953, %v4184
    %v4186 = vand.u32 %v4185, 4294901760
    %4187 = vmatmul.f32.gmra.mxu0 %v4186
    %v4188 = vpop.f32.mrf.mxu0
    %v4189 = vadd.f32 %v4150, %v4188
    %4190 = vdwg.mxu0
    %v4191 = vand.u32 %v2879, 4294901760
    %v4192 = vsub.f32 %v2879, %v4191
    %v4193 = vand.u32 %v4192, 4294901760
    %4194 = vmatpush.msra.mxu0 %v4193
    %v4195 = vand.u32 %v2875, 4294901760
    %v4196 = vsub.f32 %v2875, %v4195
    %v4197 = vand.u32 %v4196, 4294901760
    %4198 = vmatpush.msra.mxu0 %v4197
    %v4199 = vand.u32 %v2871, 4294901760
    %v4200 = vsub.f32 %v2871, %v4199
    %v4201 = vand.u32 %v4200, 4294901760
    %4202 = vmatpush.msra.mxu0 %v4201
    %v4203 = vand.u32 %v2867, 4294901760
    %v4204 = vsub.f32 %v2867, %v4203
    %v4205 = vand.u32 %v4204, 4294901760
    %4206 = vmatpush.msra.mxu0 %v4205
    %v4207 = vand.u32 %v2863, 4294901760
    %v4208 = vsub.f32 %v2863, %v4207
    %v4209 = vand.u32 %v4208, 4294901760
    %4210 = vmatpush.msra.mxu0 %v4209
    %v4211 = vand.u32 %v2859, 4294901760
    %v4212 = vsub.f32 %v2859, %v4211
    %v4213 = vand.u32 %v4212, 4294901760
    %4214 = vmatpush.msra.mxu0 %v4213
    %v4215 = vand.u32 %v2855, 4294901760
    %v4216 = vsub.f32 %v2855, %v4215
    %v4217 = vand.u32 %v4216, 4294901760
    %4218 = vmatpush.msra.mxu0 %v4217
    %v4219 = vand.u32 %v2851, 4294901760
    %v4220 = vsub.f32 %v2851, %v4219
    %v4221 = vand.u32 %v4220, 4294901760
    %4222 = vmatpush.msra.mxu0 %v4221
    %v4223 = vand.u32 %v2847, 4294901760
    %v4224 = vsub.f32 %v2847, %v4223
    %v4225 = vand.u32 %v4224, 4294901760
    %4226 = vmatpush.msra.mxu0 %v4225
    %v4227 = vand.u32 %v2843, 4294901760
    %v4228 = vsub.f32 %v2843, %v4227
    %v4229 = vand.u32 %v4228, 4294901760
    %4230 = vmatpush.msra.mxu0 %v4229
    %v4231 = vand.u32 %v2839, 4294901760
    %v4232 = vsub.f32 %v2839, %v4231
    %v4233 = vand.u32 %v4232, 4294901760
    %4234 = vmatpush.msra.mxu0 %v4233
    %v4235 = vand.u32 %v2835, 4294901760
    %v4236 = vsub.f32 %v2835, %v4235
    %v4237 = vand.u32 %v4236, 4294901760
    %4238 = vmatpush.msra.mxu0 %v4237
    %v4239 = vand.u32 %v2831, 4294901760
    %v4240 = vsub.f32 %v2831, %v4239
    %v4241 = vand.u32 %v4240, 4294901760
    %4242 = vmatpush.msra.mxu0 %v4241
    %v4243 = vand.u32 %v2827, 4294901760
    %v4244 = vsub.f32 %v2827, %v4243
    %v4245 = vand.u32 %v4244, 4294901760
    %4246 = vmatpush.msra.mxu0 %v4245
    %v4247 = vand.u32 %v2823, 4294901760
    %v4248 = vsub.f32 %v2823, %v4247
    %v4249 = vand.u32 %v4248, 4294901760
    %4250 = vmatpush.msra.mxu0 %v4249
    %v4251 = vand.u32 %v2819, 4294901760
    %v4252 = vsub.f32 %v2819, %v4251
    %v4253 = vand.u32 %v4252, 4294901760
    %4254 = vmatpush.msra.mxu0 %v4253
    %v4255 = vand.u32 %v3953, 4294901760
    %4256 = vmatmul.f32.gmra.mxu0 %v4255
    %v4257 = vpop.f32.mrf.mxu0
    %v4258 = vadd.f32 %v4189, %v4257
    %4259 = vdwg.mxu0
    %v4260 = vand.u32 %v2879, 4294901760
    %4261 = vmatpush.msra.mxu0 %v4260
    %v4262 = vand.u32 %v2875, 4294901760
    %4263 = vmatpush.msra.mxu0 %v4262
    %v4264 = vand.u32 %v2871, 4294901760
    %4265 = vmatpush.msra.mxu0 %v4264
    %v4266 = vand.u32 %v2867, 4294901760
    %4267 = vmatpush.msra.mxu0 %v4266
    %v4268 = vand.u32 %v2863, 4294901760
    %4269 = vmatpush.msra.mxu0 %v4268
    %v4270 = vand.u32 %v2859, 4294901760
    %4271 = vmatpush.msra.mxu0 %v4270
    %v4272 = vand.u32 %v2855, 4294901760
    %4273 = vmatpush.msra.mxu0 %v4272
    %v4274 = vand.u32 %v2851, 4294901760
    %4275 = vmatpush.msra.mxu0 %v4274
    %v4276 = vand.u32 %v2847, 4294901760
    %4277 = vmatpush.msra.mxu0 %v4276
    %v4278 = vand.u32 %v2843, 4294901760
    %4279 = vmatpush.msra.mxu0 %v4278
    %v4280 = vand.u32 %v2839, 4294901760
    %4281 = vmatpush.msra.mxu0 %v4280
    %v4282 = vand.u32 %v2835, 4294901760
    %4283 = vmatpush.msra.mxu0 %v4282
    %v4284 = vand.u32 %v2831, 4294901760
    %4285 = vmatpush.msra.mxu0 %v4284
    %v4286 = vand.u32 %v2827, 4294901760
    %4287 = vmatpush.msra.mxu0 %v4286
    %v4288 = vand.u32 %v2823, 4294901760
    %4289 = vmatpush.msra.mxu0 %v4288
    %v4290 = vand.u32 %v2819, 4294901760
    %4291 = vmatpush.msra.mxu0 %v4290
    %v4292 = vand.u32 %v3953, 4294901760
    %4293 = vmatmul.f32.gmra.mxu0 %v4292
    %v4294 = vpop.f32.mrf.mxu0
    %v4295 = vadd.f32 %v4258, %v4294
    %4296 = vdwg.mxu0
    %v4297 = vld [vmem:[%s4] sm:$0xff]
    %v4298 = vld [vmem:[%s4 + $0x8] sm:$0xff]
    %v4299 = vld [vmem:[%s4 + $0x10] sm:$0xff]
    %v4300 = vld [vmem:[%s4 + $0x18] sm:$0xff]
    %v4301 = vld [vmem:[%s4 + $0x20] sm:$0xff]
    %v4302 = vld [vmem:[%s4 + $0x28] sm:$0xff]
    %v4303 = vld [vmem:[%s4 + $0x30] sm:$0xff]
    %v4304 = vld [vmem:[%s4 + $0x38] sm:$0xff]
    %v4305 = vld [vmem:[%s4 + $0x40] sm:$0xff]
    %v4306 = vld [vmem:[%s4 + $0x48] sm:$0xff]
    %v4307 = vld [vmem:[%s4 + $0x50] sm:$0xff]
    %v4308 = vld [vmem:[%s4 + $0x58] sm:$0xff]
    %v4309 = vld [vmem:[%s4 + $0x60] sm:$0xff]
    %v4310 = vld [vmem:[%s4 + $0x68] sm:$0xff]
    %v4311 = vld [vmem:[%s4 + $0x70] sm:$0xff]
    %v4312 = vld [vmem:[%s4 + $0x78] sm:$0xff]
    %v4313 = vld [vmem:[%s5] sm:$0x1]
    %v4315 = vperm.slane %v4313, 0
    %v4317 = vand.u32 %v4312, 4294901760
    %4318 = vmatpush.msra.mxu0 %v4317
    %v4319 = vand.u32 %v4311, 4294901760
    %4320 = vmatpush.msra.mxu0 %v4319
    %v4321 = vand.u32 %v4310, 4294901760
    %4322 = vmatpush.msra.mxu0 %v4321
    %v4323 = vand.u32 %v4309, 4294901760
    %4324 = vmatpush.msra.mxu0 %v4323
    %v4325 = vand.u32 %v4308, 4294901760
    %4326 = vmatpush.msra.mxu0 %v4325
    %v4327 = vand.u32 %v4307, 4294901760
    %4328 = vmatpush.msra.mxu0 %v4327
    %v4329 = vand.u32 %v4306, 4294901760
    %4330 = vmatpush.msra.mxu0 %v4329
    %v4331 = vand.u32 %v4305, 4294901760
    %4332 = vmatpush.msra.mxu0 %v4331
    %v4333 = vand.u32 %v4304, 4294901760
    %4334 = vmatpush.msra.mxu0 %v4333
    %v4335 = vand.u32 %v4303, 4294901760
    %4336 = vmatpush.msra.mxu0 %v4335
    %v4337 = vand.u32 %v4302, 4294901760
    %4338 = vmatpush.msra.mxu0 %v4337
    %v4339 = vand.u32 %v4301, 4294901760
    %4340 = vmatpush.msra.mxu0 %v4339
    %v4341 = vand.u32 %v4300, 4294901760
    %4342 = vmatpush.msra.mxu0 %v4341
    %v4343 = vand.u32 %v4299, 4294901760
    %4344 = vmatpush.msra.mxu0 %v4343
    %v4345 = vand.u32 %v4298, 4294901760
    %4346 = vmatpush.msra.mxu0 %v4345
    %v4347 = vand.u32 %v4297, 4294901760
    %4348 = vmatpush.msra.mxu0 %v4347
    %v4349 = vand.u32 %v3588, 4294901760
    %v4350 = vsub.f32 %v3588, %v4349
    %v4351 = vand.u32 %v4350, 4294901760
    %v4352 = vsub.f32 %v4350, %v4351
    %v4353 = vand.u32 %v4352, 4294901760
    %4354 = vmatmul.f32.gmra.mxu0 %v4353
    %v4355 = vpop.f32.mrf.mxu0
    %v4356 = vadd.f32 %v4315, %v4355
    %v4357 = vand.u32 %v4295, 4294901760
    %v4358 = vsub.f32 %v4295, %v4357
    %v4359 = vand.u32 %v4358, 4294901760
    %v4360 = vsub.f32 %v4358, %v4359
    %v4361 = vand.u32 %v4360, 4294901760
    %4362 = vmatmul.f32.gmra.mxu0 %v4361
    %v4363 = vpop.f32.mrf.mxu0
    %v4364 = vadd.f32 %v4315, %v4363
    %4365 = vdwg.mxu0
    %v4366 = vand.u32 %v4312, 4294901760
    %v4367 = vsub.f32 %v4312, %v4366
    %v4368 = vand.u32 %v4367, 4294901760
    %v4369 = vsub.f32 %v4367, %v4368
    %v4370 = vand.u32 %v4369, 4294901760
    %4371 = vmatpush.msra.mxu0 %v4370
    %v4372 = vand.u32 %v4311, 4294901760
    %v4373 = vsub.f32 %v4311, %v4372
    %v4374 = vand.u32 %v4373, 4294901760
    %v4375 = vsub.f32 %v4373, %v4374
    %v4376 = vand.u32 %v4375, 4294901760
    %4377 = vmatpush.msra.mxu0 %v4376
    %v4378 = vand.u32 %v4310, 4294901760
    %v4379 = vsub.f32 %v4310, %v4378
    %v4380 = vand.u32 %v4379, 4294901760
    %v4381 = vsub.f32 %v4379, %v4380
    %v4382 = vand.u32 %v4381, 4294901760
    %4383 = vmatpush.msra.mxu0 %v4382
    %v4384 = vand.u32 %v4309, 4294901760
    %v4385 = vsub.f32 %v4309, %v4384
    %v4386 = vand.u32 %v4385, 4294901760
    %v4387 = vsub.f32 %v4385, %v4386
    %v4388 = vand.u32 %v4387, 4294901760
    %4389 = vmatpush.msra.mxu0 %v4388
    %v4390 = vand.u32 %v4308, 4294901760
    %v4391 = vsub.f32 %v4308, %v4390
    %v4392 = vand.u32 %v4391, 4294901760
    %v4393 = vsub.f32 %v4391, %v4392
    %v4394 = vand.u32 %v4393, 4294901760
    %4395 = vmatpush.msra.mxu0 %v4394
    %v4396 = vand.u32 %v4307, 4294901760
    %v4397 = vsub.f32 %v4307, %v4396
    %v4398 = vand.u32 %v4397, 4294901760
    %v4399 = vsub.f32 %v4397, %v4398
    %v4400 = vand.u32 %v4399, 4294901760
    %4401 = vmatpush.msra.mxu0 %v4400
    %v4402 = vand.u32 %v4306, 4294901760
    %v4403 = vsub.f32 %v4306, %v4402
    %v4404 = vand.u32 %v4403, 4294901760
    %v4405 = vsub.f32 %v4403, %v4404
    %v4406 = vand.u32 %v4405, 4294901760
    %4407 = vmatpush.msra.mxu0 %v4406
    %v4408 = vand.u32 %v4305, 4294901760
    %v4409 = vsub.f32 %v4305, %v4408
    %v4410 = vand.u32 %v4409, 4294901760
    %v4411 = vsub.f32 %v4409, %v4410
    %v4412 = vand.u32 %v4411, 4294901760
    %4413 = vmatpush.msra.mxu0 %v4412
    %v4414 = vand.u32 %v4304, 4294901760
    %v4415 = vsub.f32 %v4304, %v4414
    %v4416 = vand.u32 %v4415, 4294901760
    %v4417 = vsub.f32 %v4415, %v4416
    %v4418 = vand.u32 %v4417, 4294901760
    %4419 = vmatpush.msra.mxu0 %v4418
    %v4420 = vand.u32 %v4303, 4294901760
    %v4421 = vsub.f32 %v4303, %v4420
    %v4422 = vand.u32 %v4421, 4294901760
    %v4423 = vsub.f32 %v4421, %v4422
    %v4424 = vand.u32 %v4423, 4294901760
    %4425 = vmatpush.msra.mxu0 %v4424
    %v4426 = vand.u32 %v4302, 4294901760
    %v4427 = vsub.f32 %v4302, %v4426
    %v4428 = vand.u32 %v4427, 4294901760
    %v4429 = vsub.f32 %v4427, %v4428
    %v4430 = vand.u32 %v4429, 4294901760
    %4431 = vmatpush.msra.mxu0 %v4430
    %v4432 = vand.u32 %v4301, 4294901760
    %v4433 = vsub.f32 %v4301, %v4432
    %v4434 = vand.u32 %v4433, 4294901760
    %v4435 = vsub.f32 %v4433, %v4434
    %v4436 = vand.u32 %v4435, 4294901760
    %4437 = vmatpush.msra.mxu0 %v4436
    %v4438 = vand.u32 %v4300, 4294901760
    %v4439 = vsub.f32 %v4300, %v4438
    %v4440 = vand.u32 %v4439, 4294901760
    %v4441 = vsub.f32 %v4439, %v4440
    %v4442 = vand.u32 %v4441, 4294901760
    %4443 = vmatpush.msra.mxu0 %v4442
    %v4444 = vand.u32 %v4299, 4294901760
    %v4445 = vsub.f32 %v4299, %v4444
    %v4446 = vand.u32 %v4445, 4294901760
    %v4447 = vsub.f32 %v4445, %v4446
    %v4448 = vand.u32 %v4447, 4294901760
    %4449 = vmatpush.msra.mxu0 %v4448
    %v4450 = vand.u32 %v4298, 4294901760
    %v4451 = vsub.f32 %v4298, %v4450
    %v4452 = vand.u32 %v4451, 4294901760
    %v4453 = vsub.f32 %v4451, %v4452
    %v4454 = vand.u32 %v4453, 4294901760
    %4455 = vmatpush.msra.mxu0 %v4454
    %v4456 = vand.u32 %v4297, 4294901760
    %v4457 = vsub.f32 %v4297, %v4456
    %v4458 = vand.u32 %v4457, 4294901760
    %v4459 = vsub.f32 %v4457, %v4458
    %v4460 = vand.u32 %v4459, 4294901760
    %4461 = vmatpush.msra.mxu0 %v4460
    %v4462 = vand.u32 %v3588, 4294901760
    %4463 = vmatmul.f32.gmra.mxu0 %v4462
    %v4464 = vpop.f32.mrf.mxu0
    %v4465 = vadd.f32 %v4356, %v4464
    %v4466 = vand.u32 %v4295, 4294901760
    %4467 = vmatmul.f32.gmra.mxu0 %v4466
    %v4468 = vpop.f32.mrf.mxu0
    %v4469 = vadd.f32 %v4364, %v4468
    %4470 = vdwg.mxu0
    %v4471 = vand.u32 %v4312, 4294901760
    %v4472 = vsub.f32 %v4312, %v4471
    %4473 = vmatpush.msra.mxu0 %v4472
    %v4474 = vand.u32 %v4311, 4294901760
    %v4475 = vsub.f32 %v4311, %v4474
    %4476 = vmatpush.msra.mxu0 %v4475
    %v4477 = vand.u32 %v4310, 4294901760
    %v4478 = vsub.f32 %v4310, %v4477
    %4479 = vmatpush.msra.mxu0 %v4478
    %v4480 = vand.u32 %v4309, 4294901760
    %v4481 = vsub.f32 %v4309, %v4480
    %4482 = vmatpush.msra.mxu0 %v4481
    %v4483 = vand.u32 %v4308, 4294901760
    %v4484 = vsub.f32 %v4308, %v4483
    %4485 = vmatpush.msra.mxu0 %v4484
    %v4486 = vand.u32 %v4307, 4294901760
    %v4487 = vsub.f32 %v4307, %v4486
    %4488 = vmatpush.msra.mxu0 %v4487
    %v4489 = vand.u32 %v4306, 4294901760
    %v4490 = vsub.f32 %v4306, %v4489
    %4491 = vmatpush.msra.mxu0 %v4490
    %v4492 = vand.u32 %v4305, 4294901760
    %v4493 = vsub.f32 %v4305, %v4492
    %4494 = vmatpush.msra.mxu0 %v4493
    %v4495 = vand.u32 %v4304, 4294901760
    %v4496 = vsub.f32 %v4304, %v4495
    %4497 = vmatpush.msra.mxu0 %v4496
    %v4498 = vand.u32 %v4303, 4294901760
    %v4499 = vsub.f32 %v4303, %v4498
    %4500 = vmatpush.msra.mxu0 %v4499
    %v4501 = vand.u32 %v4302, 4294901760
    %v4502 = vsub.f32 %v4302, %v4501
    %4503 = vmatpush.msra.mxu0 %v4502
    %v4504 = vand.u32 %v4301, 4294901760
    %v4505 = vsub.f32 %v4301, %v4504
    %4506 = vmatpush.msra.mxu0 %v4505
    %v4507 = vand.u32 %v4300, 4294901760
    %v4508 = vsub.f32 %v4300, %v4507
    %4509 = vmatpush.msra.mxu0 %v4508
    %v4510 = vand.u32 %v4299, 4294901760
    %v4511 = vsub.f32 %v4299, %v4510
    %4512 = vmatpush.msra.mxu0 %v4511
    %v4513 = vand.u32 %v4298, 4294901760
    %v4514 = vsub.f32 %v4298, %v4513
    %4515 = vmatpush.msra.mxu0 %v4514
    %v4516 = vand.u32 %v4297, 4294901760
    %v4517 = vsub.f32 %v4297, %v4516
    %4518 = vmatpush.msra.mxu0 %v4517
    %v4519 = vand.u32 %v3588, 4294901760
    %v4520 = vsub.f32 %v3588, %v4519
    %4521 = vmatmul.f32.gmra.mxu0 %v4520
    %v4522 = vpop.f32.mrf.mxu0
    %v4523 = vadd.f32 %v4465, %v4522
    %v4524 = vand.u32 %v4295, 4294901760
    %v4525 = vsub.f32 %v4295, %v4524
    %4526 = vmatmul.f32.gmra.mxu0 %v4525
    %v4527 = vpop.f32.mrf.mxu0
    %v4528 = vadd.f32 %v4469, %v4527
    %4529 = vdwg.mxu0
    %v4530 = vand.u32 %v4312, 4294901760
    %4531 = vmatpush.msra.mxu0 %v4530
    %v4532 = vand.u32 %v4311, 4294901760
    %4533 = vmatpush.msra.mxu0 %v4532
    %v4534 = vand.u32 %v4310, 4294901760
    %4535 = vmatpush.msra.mxu0 %v4534
    %v4536 = vand.u32 %v4309, 4294901760
    %4537 = vmatpush.msra.mxu0 %v4536
    %v4538 = vand.u32 %v4308, 4294901760
    %4539 = vmatpush.msra.mxu0 %v4538
    %v4540 = vand.u32 %v4307, 4294901760
    %4541 = vmatpush.msra.mxu0 %v4540
    %v4542 = vand.u32 %v4306, 4294901760
    %4543 = vmatpush.msra.mxu0 %v4542
    %v4544 = vand.u32 %v4305, 4294901760
    %4545 = vmatpush.msra.mxu0 %v4544
    %v4546 = vand.u32 %v4304, 4294901760
    %4547 = vmatpush.msra.mxu0 %v4546
    %v4548 = vand.u32 %v4303, 4294901760
    %4549 = vmatpush.msra.mxu0 %v4548
    %v4550 = vand.u32 %v4302, 4294901760
    %4551 = vmatpush.msra.mxu0 %v4550
    %v4552 = vand.u32 %v4301, 4294901760
    %4553 = vmatpush.msra.mxu0 %v4552
    %v4554 = vand.u32 %v4300, 4294901760
    %4555 = vmatpush.msra.mxu0 %v4554
    %v4556 = vand.u32 %v4299, 4294901760
    %4557 = vmatpush.msra.mxu0 %v4556
    %v4558 = vand.u32 %v4298, 4294901760
    %4559 = vmatpush.msra.mxu0 %v4558
    %v4560 = vand.u32 %v4297, 4294901760
    %4561 = vmatpush.msra.mxu0 %v4560
    %v4562 = vand.u32 %v3588, 4294901760
    %v4563 = vsub.f32 %v3588, %v4562
    %v4564 = vand.u32 %v4563, 4294901760
    %4565 = vmatmul.f32.gmra.mxu0 %v4564
    %v4566 = vpop.f32.mrf.mxu0
    %v4567 = vadd.f32 %v4523, %v4566
    %v4568 = vand.u32 %v4295, 4294901760
    %v4569 = vsub.f32 %v4295, %v4568
    %v4570 = vand.u32 %v4569, 4294901760
    %4571 = vmatmul.f32.gmra.mxu0 %v4570
    %v4572 = vpop.f32.mrf.mxu0
    %v4573 = vadd.f32 %v4528, %v4572
    %4574 = vdwg.mxu0
    %v4575 = vand.u32 %v4312, 4294901760
    %v4576 = vsub.f32 %v4312, %v4575
    %v4577 = vand.u32 %v4576, 4294901760
    %4578 = vmatpush.msra.mxu0 %v4577
    %v4579 = vand.u32 %v4311, 4294901760
    %v4580 = vsub.f32 %v4311, %v4579
    %v4581 = vand.u32 %v4580, 4294901760
    %4582 = vmatpush.msra.mxu0 %v4581
    %v4583 = vand.u32 %v4310, 4294901760
    %v4584 = vsub.f32 %v4310, %v4583
    %v4585 = vand.u32 %v4584, 4294901760
    %4586 = vmatpush.msra.mxu0 %v4585
    %v4587 = vand.u32 %v4309, 4294901760
    %v4588 = vsub.f32 %v4309, %v4587
    %v4589 = vand.u32 %v4588, 4294901760
    %4590 = vmatpush.msra.mxu0 %v4589
    %v4591 = vand.u32 %v4308, 4294901760
    %v4592 = vsub.f32 %v4308, %v4591
    %v4593 = vand.u32 %v4592, 4294901760
    %4594 = vmatpush.msra.mxu0 %v4593
    %v4595 = vand.u32 %v4307, 4294901760
    %v4596 = vsub.f32 %v4307, %v4595
    %v4597 = vand.u32 %v4596, 4294901760
    %4598 = vmatpush.msra.mxu0 %v4597
    %v4599 = vand.u32 %v4306, 4294901760
    %v4600 = vsub.f32 %v4306, %v4599
    %v4601 = vand.u32 %v4600, 4294901760
    %4602 = vmatpush.msra.mxu0 %v4601
    %v4603 = vand.u32 %v4305, 4294901760
    %v4604 = vsub.f32 %v4305, %v4603
    %v4605 = vand.u32 %v4604, 4294901760
    %4606 = vmatpush.msra.mxu0 %v4605
    %v4607 = vand.u32 %v4304, 4294901760
    %v4608 = vsub.f32 %v4304, %v4607
    %v4609 = vand.u32 %v4608, 4294901760
    %4610 = vmatpush.msra.mxu0 %v4609
    %v4611 = vand.u32 %v4303, 4294901760
    %v4612 = vsub.f32 %v4303, %v4611
    %v4613 = vand.u32 %v4612, 4294901760
    %4614 = vmatpush.msra.mxu0 %v4613
    %v4615 = vand.u32 %v4302, 4294901760
    %v4616 = vsub.f32 %v4302, %v4615
    %v4617 = vand.u32 %v4616, 4294901760
    %4618 = vmatpush.msra.mxu0 %v4617
    %v4619 = vand.u32 %v4301, 4294901760
    %v4620 = vsub.f32 %v4301, %v4619
    %v4621 = vand.u32 %v4620, 4294901760
    %4622 = vmatpush.msra.mxu0 %v4621
    %v4623 = vand.u32 %v4300, 4294901760
    %v4624 = vsub.f32 %v4300, %v4623
    %v4625 = vand.u32 %v4624, 4294901760
    %4626 = vmatpush.msra.mxu0 %v4625
    %v4627 = vand.u32 %v4299, 4294901760
    %v4628 = vsub.f32 %v4299, %v4627
    %v4629 = vand.u32 %v4628, 4294901760
    %4630 = vmatpush.msra.mxu0 %v4629
    %v4631 = vand.u32 %v4298, 4294901760
    %v4632 = vsub.f32 %v4298, %v4631
    %v4633 = vand.u32 %v4632, 4294901760
    %4634 = vmatpush.msra.mxu0 %v4633
    %v4635 = vand.u32 %v4297, 4294901760
    %v4636 = vsub.f32 %v4297, %v4635
    %v4637 = vand.u32 %v4636, 4294901760
    %4638 = vmatpush.msra.mxu0 %v4637
    %v4639 = vand.u32 %v3588, 4294901760
    %4640 = vmatmul.f32.gmra.mxu0 %v4639
    %v4641 = vpop.f32.mrf.mxu0
    %v4642 = vadd.f32 %v4567, %v4641
    %v4643 = vand.u32 %v4295, 4294901760
    %4644 = vmatmul.f32.gmra.mxu0 %v4643
    %v4645 = vpop.f32.mrf.mxu0
    %v4646 = vadd.f32 %v4573, %v4645
    %4647 = vdwg.mxu0
    %v4648 = vand.u32 %v4312, 4294901760
    %4649 = vmatpush.msra.mxu0 %v4648
    %v4650 = vand.u32 %v4311, 4294901760
    %4651 = vmatpush.msra.mxu0 %v4650
    %v4652 = vand.u32 %v4310, 4294901760
    %4653 = vmatpush.msra.mxu0 %v4652
    %v4654 = vand.u32 %v4309, 4294901760
    %4655 = vmatpush.msra.mxu0 %v4654
    %v4656 = vand.u32 %v4308, 4294901760
    %4657 = vmatpush.msra.mxu0 %v4656
    %v4658 = vand.u32 %v4307, 4294901760
    %4659 = vmatpush.msra.mxu0 %v4658
    %v4660 = vand.u32 %v4306, 4294901760
    %4661 = vmatpush.msra.mxu0 %v4660
    %v4662 = vand.u32 %v4305, 4294901760
    %4663 = vmatpush.msra.mxu0 %v4662
    %v4664 = vand.u32 %v4304, 4294901760
    %4665 = vmatpush.msra.mxu0 %v4664
    %v4666 = vand.u32 %v4303, 4294901760
    %4667 = vmatpush.msra.mxu0 %v4666
    %v4668 = vand.u32 %v4302, 4294901760
    %4669 = vmatpush.msra.mxu0 %v4668
    %v4670 = vand.u32 %v4301, 4294901760
    %4671 = vmatpush.msra.mxu0 %v4670
    %v4672 = vand.u32 %v4300, 4294901760
    %4673 = vmatpush.msra.mxu0 %v4672
    %v4674 = vand.u32 %v4299, 4294901760
    %4675 = vmatpush.msra.mxu0 %v4674
    %v4676 = vand.u32 %v4298, 4294901760
    %4677 = vmatpush.msra.mxu0 %v4676
    %v4678 = vand.u32 %v4297, 4294901760
    %4679 = vmatpush.msra.mxu0 %v4678
    %v4680 = vand.u32 %v3588, 4294901760
    %4681 = vmatmul.f32.gmra.mxu0 %v4680
    %v4682 = vpop.f32.mrf.mxu0
    %v4683 = vadd.f32 %v4642, %v4682
    %v4684 = vand.u32 %v4295, 4294901760
    %4685 = vmatmul.f32.gmra.mxu0 %v4684
    %v4686 = vpop.f32.mrf.mxu0
    %v4687 = vadd.f32 %v4646, %v4686
    %4688 = vdwg.mxu0
    %4689 = vst [vmem:[#allocation2] sm:$0xff] %v4683
    %4690 = vst [vmem:[#allocation2 + $0x8] sm:$0xff] %v4687
    // Predicated region
    $region26: #{tpu_custom_call.1} parent=1 // pred_check
      _
    $region27: #{tpu_custom_call.1} parent=1 // pred_check_branch
      %4692 = sbr.rel (0) target = $region29
    $region28: #{tpu_custom_call.1} parent=1 // pred_region
      %4694 = vsyncadd [#allocation3], 0
      %s4695 = sshll.u32 [#allocation2], 4
      %s4696 = int_to_ptr.vmem [resolvable:$true] %s4695
      %s4697 = sshll.u32 %s6, 4
      %s4698 = int_to_ptr.hbm [resolvable:$true] %s4697
      %4703 = dma.vmem_to_hbm [thread:$0]  %s4696, 256, %s4698, [#allocation3], 128, 128, 8
    $region29: #{tpu_custom_call.1} parent=1 // pred_fallthru
      _
    // Predicated region
    $region30: #{tpu_custom_call.1} parent=1 // pred_check
      _
    $region31: #{tpu_custom_call.1} parent=1 // pred_check_branch
      %4705 = sbr.rel (0) target = $region33
    $region32: #{tpu_custom_call.1} parent=1 // pred_region
      %4707 = vsyncadd [#allocation5], 0
      %s4708 = sshll.u32 [#allocation4], 4
      %s4709 = int_to_ptr.vmem [resolvable:$true] %s4708
      %s4710 = sshll.u32 %s7, 4
      %s4711 = int_to_ptr.hbm [resolvable:$true] %s4710
      %4716 = dma.vmem_to_hbm [thread:$0]  %s4709, 256, %s4711, [#allocation5], 128, 128, 8
    $region33: #{tpu_custom_call.1} parent=1 // pred_fallthru
      _
    // Predicated region
    $region34: #{tpu_custom_call.1} parent=1 // pred_check
      _
    $region35: #{tpu_custom_call.1} parent=1 // pred_check_branch
      %4718 = sbr.rel (0) target = $region37
    $region36: #{tpu_custom_call.1} parent=1 // pred_region
      %4720 = dma.done [#allocation3], 256
    $region37: #{tpu_custom_call.1} parent=1 // pred_fallthru
      _
    // Predicated region
    $region38: #{tpu_custom_call.1} parent=1 // pred_check
      _
    $region39: #{tpu_custom_call.1} parent=1 // pred_check_branch
      %4722 = sbr.rel (0) target = $region41
    $region40: #{tpu_custom_call.1} parent=1 // pred_region
      %4724 = dma.done [#allocation5], 256
    $region41: #{tpu_custom_call.1} parent=1 // pred_fallthru
      _
    %4725 = vsyncpa [#allocation3], 1
    %4726 = vsyncpa [#allocation5], 1

</llo_original>
